<compile_context>
chip_gen: v7x
topology: tpu7x:2x2x1
jax: 0.10.0
libtpu: 0.0.40
codegen_flags: <defaults>
</compile_context>

<pallas_src>
import functools
import math

import jax
import jax.numpy as jnp
from jax.experimental import pallas as pl
from jax.experimental.pallas import tpu as pltpu


# ----------------------------- in-kernel helpers ----------------------------

def _layernorm(z, gamma, beta, eps):
    mu = jnp.mean(z, axis=-1, keepdims=True)
    var = jnp.mean(jnp.square(z - mu), axis=-1, keepdims=True)
    return (z - mu) * jax.lax.rsqrt(var + eps) * gamma + beta


def _gelu(y):
    # TODO(synk): HF BERT default is the exact erf GELU; tanh approximation is
    # used here (deviation ~1e-3) to stay on guaranteed-lowerable VPU/EUP ops.
    return 0.5 * y * (1.0 + jnp.tanh(0.7978845608028654 * (y + 0.044715 * y * y * y)))


# --------------------------- embedding layernorm ----------------------------

def _layernorm_kernel(x_ref, g_ref, b_ref, o_ref, *, eps):
    o_ref[...] = _layernorm(x_ref[...], g_ref[...], b_ref[...], eps)


def pallas_layernorm(x, gamma, beta, eps=1e-12):
    M, H = x.shape
    tm = 8 if M % 8 == 0 else M                       # row tiling (review item)
    kern = functools.partial(_layernorm_kernel, eps=eps)
    return pl.pallas_call(
        kern,
        grid=(M // tm,),
        in_specs=[
            pl.BlockSpec((tm, H), lambda i: (i, 0)),
            pl.BlockSpec((1, H), lambda i: (0, 0)),
            pl.BlockSpec((1, H), lambda i: (0, 0)),
        ],
        out_specs=pl.BlockSpec((tm, H), lambda i: (i, 0)),
        out_shape=jax.ShapeDtypeStruct((M, H), jnp.float32),
        compiler_params=pltpu.CompilerParams(dimension_semantics=("parallel",)),
    )(x, gamma.reshape(1, H), beta.reshape(1, H))


# -------------------- fused multi-layer transformer encoder -----------------

def _bert_encoder_kernel(h_ref, mask_ref, wqkv_ref, bqkv_ref, wo_ref, bo_ref,
                         ln1g_ref, ln1b_ref, wi_ref, bi_ref, wf_ref, bf_ref,
                         ln2g_ref, ln2b_ref, o_ref, *, num_heads, head_dim, eps):
    l = pl.program_id(1)
    hidden = num_heads * head_dim

    # Carry the running hidden state for this batch block in the output VMEM
    # buffer; it is written back to HBM only once, after the last layer.
    @pl.when(l == 0)
    def _():
        o_ref[...] = h_ref[...]

    x = o_ref[...]                                   # (S, H) f32
    mask = mask_ref[...]                             # (1, S) additive mask

    # ---- fused QKV projection: one lane-dense (S,H)@(H,3H) bf16 matmul.
    # 1/sqrt(head_dim) is folded into the Q columns of wqkv at build time.
    qkv = jnp.dot(x.astype(jnp.bfloat16), wqkv_ref[...],
                  preferred_element_type=jnp.float32) + bqkv_ref[...]   # (S, 3H)
    q = qkv[:, :hidden]
    k = qkv[:, hidden:2 * hidden]
    v = qkv[:, 2 * hidden:]

    # ---- per-head attention (in-register slicing only).
    # TODO(synk): at real head counts (nH=12, S>=128) switch this static
    # unroll to lax.fori_loop / a grid axis to bound vreg pressure.
    ctx_heads = []
    for hd in range(num_heads):
        sl = slice(hd * head_dim, (hd + 1) * head_dim)
        qh, kh, vh = q[:, sl], k[:, sl], v[:, sl]
        s = jax.lax.dot_general(qh, kh, (((1,), (1,)), ((), ())),
                                preferred_element_type=jnp.float32) + mask  # (S, S)
        s_max = jnp.max(s, axis=-1, keepdims=True)
        p = jnp.exp(s - s_max)
        inv = pl.reciprocal(jnp.sum(p, axis=-1, keepdims=True), approx=True)
        ctx_heads.append(jnp.dot(p * inv, vh,
                                 preferred_element_type=jnp.float32))       # (S, dh)
    ctx = jnp.concatenate(ctx_heads, axis=-1)                               # (S, H)

    # ---- fused output projection + residual + LayerNorm 1
    attn = jnp.dot(ctx.astype(jnp.bfloat16), wo_ref[...],
                   preferred_element_type=jnp.float32) + bo_ref[...]
    h1 = _layernorm(x + attn, ln1g_ref[...], ln1b_ref[...], eps)

    # ---- FFN: gelu(h1 @ Wi + bi) @ Wf + bf, fully fused
    inter = jnp.dot(h1.astype(jnp.bfloat16), wi_ref[...],
                    preferred_element_type=jnp.float32) + bi_ref[...]
    inter = _gelu(inter)
    ffn = jnp.dot(inter.astype(jnp.bfloat16), wf_ref[...],
                  preferred_element_type=jnp.float32) + bf_ref[...]

    # ---- residual + LayerNorm 2 (stays resident in o_ref for next layer)
    o_ref[...] = _layernorm(h1 + ffn, ln2g_ref[...], ln2b_ref[...], eps)


def pallas_bert_encoder(h, ext_mask, stack, num_heads):
    B, S, H = h.shape
    L = stack["wqkv"].shape[0]
    dh = H // num_heads
    kern = functools.partial(_bert_encoder_kernel, num_heads=num_heads,
                             head_dim=dh, eps=1e-12)

    def wspec(arr):
        n_rest = arr.ndim - 1
        return pl.BlockSpec((None,) + arr.shape[1:],
                            lambda b, l, _n=n_rest: (l,) + (0,) * _n)

    return pl.pallas_call(
        kern,
        grid=(B, L),                                      # batch parallel, layers carried
        in_specs=[
            pl.BlockSpec((None, S, H), lambda b, l: (b, 0, 0)),   # activations
            pl.BlockSpec((None, 1, S), lambda b, l: (b, 0, 0)),   # additive mask
            wspec(stack["wqkv"]), wspec(stack["bqkv"]),
            wspec(stack["wo"]),   wspec(stack["bo"]),
            wspec(stack["ln1_g"]), wspec(stack["ln1_b"]),
            wspec(stack["wi"]),   wspec(stack["bi"]),
            wspec(stack["wf"]),   wspec(stack["bf"]),
            wspec(stack["ln2_g"]), wspec(stack["ln2_b"]),
        ],
        out_specs=pl.BlockSpec((None, S, H), lambda b, l: (b, 0, 0)),
        out_shape=jax.ShapeDtypeStruct((B, S, H), jnp.float32),
        compiler_params=pltpu.CompilerParams(
            dimension_semantics=("parallel", "arbitrary")),
    )(h, ext_mask, stack["wqkv"], stack["bqkv"], stack["wo"], stack["bo"],
      stack["ln1_g"], stack["ln1_b"], stack["wi"], stack["bi"],
      stack["wf"], stack["bf"], stack["ln2_g"], stack["ln2_b"])


# ------------------------- parameter construction --------------------------

def init_params(key, *, vocab=128, hidden=128, layers=2, heads=4,
                intermediate=512, max_pos=16, type_vocab=2):
    # TODO(synk): original module loads pretrained 'bert-base-uncased' weights;
    # here parameters are deterministic synthetic inits with a small config.
    std = 0.02
    dh = hidden // heads
    scale = 1.0 / math.sqrt(dh)
    keys = iter(jax.random.split(key, 8 + layers * 8))

    def normal(shape):
        return (std * jax.random.normal(next(keys), shape)).astype(jnp.float32)

    params = {
        "word_emb": normal((vocab, hidden)),
        "pos_emb": normal((max_pos, hidden)),
        "type_emb": normal((type_vocab, hidden)),
        "emb_ln_g": jnp.ones((hidden,), jnp.float32),
        "emb_ln_b": jnp.zeros((hidden,), jnp.float32),
        "wp": normal((hidden, hidden)),
        "bp": jnp.zeros((hidden,), jnp.float32),
    }

    wqkv_l, wo_l, wi_l, wf_l = [], [], [], []
    for _ in range(layers):
        w = normal((hidden, 3 * hidden))
        w = w.at[:, :hidden].multiply(scale)       # fold 1/sqrt(dh) into Wq
        wqkv_l.append(w)
        wo_l.append(normal((hidden, hidden)))
        wi_l.append(normal((hidden, intermediate)))
        wf_l.append(normal((intermediate, hidden)))

    L = layers
    params["layer_stack"] = {
        # matmul weights live in bf16 in HBM (native MXU input; halves DMA/VMEM)
        "wqkv": jnp.stack(wqkv_l).astype(jnp.bfloat16),        # (L, H, 3H)
        "bqkv": jnp.zeros((L, 1, 3 * hidden), jnp.float32),    # Q part pre-scaled (zeros here)
        "wo":   jnp.stack(wo_l).astype(jnp.bfloat16),          # (L, H, H)
        "bo":   jnp.zeros((L, 1, hidden), jnp.float32),
        "ln1_g": jnp.ones((L, 1, hidden), jnp.float32),
        "ln1_b": jnp.zeros((L, 1, hidden), jnp.float32),
        "wi":   jnp.stack(wi_l).astype(jnp.bfloat16),          # (L, H, I)
        "bi":   jnp.zeros((L, 1, intermediate), jnp.float32),
        "wf":   jnp.stack(wf_l).astype(jnp.bfloat16),          # (L, I, H)
        "bf":   jnp.zeros((L, 1, hidden), jnp.float32),
        "ln2_g": jnp.ones((L, 1, hidden), jnp.float32),
        "ln2_b": jnp.zeros((L, 1, hidden), jnp.float32),
    }
    return params


# ------------------------------ model forward -------------------------------

def text_model_forward(params, input_ids, attention_mask, *, num_heads):
    """Equivalent of TextModel.forward: returns (sequence_output, pooled_output)."""
    B, S = input_ids.shape
    H = params["word_emb"].shape[1]

    # Embeddings: gather + adds stay in XLA (glue); LayerNorm is a row-tiled
    # Pallas kernel.
    # TODO(synk): at scale, fuse gather+adds+LN into one kernel via
    # PrefetchScalarGridSpec(input_ids) + pl.Element row gather on word_emb.
    emb = (jnp.take(params["word_emb"], input_ids, axis=0)
           + params["pos_emb"][:S][None, :, :]
           + params["type_emb"][0][None, None, :])          # token_type_ids == 0
    h = pallas_layernorm(emb.reshape(B * S, H),
                         params["emb_ln_g"], params["emb_ln_b"]).reshape(B, S, H)

    # BERT extended attention mask: 0 where attended, -1e4 where masked. (B, 1, S)
    ext_mask = (1.0 - attention_mask.astype(jnp.float32))[:, None, :] * -10000.0

    # All transformer layers in ONE fused pallas_call (h stays in VMEM across layers).
    sequence_output = pallas_bert_encoder(h, ext_mask, params["layer_stack"],
                                          num_heads)

    cls = sequence_output[:, 0, :]
    # Pooler: a (B,H)@(H,H) matmul with B=2 is pure launch overhead as a
    # pallas_call, so it stays in plain JAX (per perf review).
    pooled_output = jnp.tanh(jnp.dot(cls, params["wp"]) + params["bp"])
    return sequence_output, pooled_output


# ---------------------------------- main ------------------------------------

if __name__ == "__main__":
    key = jax.random.PRNGKey(0)
    pkey, ikey = jax.random.split(key)

    # Demo config: H=128 so every activation/output block is lane-dense.
    B, S, H, HEADS, LAYERS, INTER = 2, 8, 128, 4, 2, 512
    params = init_params(pkey, vocab=128, hidden=H, layers=LAYERS, heads=HEADS,
                         intermediate=INTER, max_pos=16)

    input_ids = jax.random.randint(ikey, (B, S), 0, 128, dtype=jnp.int32)
    attention_mask = jnp.ones((B, S), jnp.float32).at[1, 6:].set(0.0)  # pad last 2 of batch 1

    fwd = jax.jit(functools.partial(text_model_forward, num_heads=HEADS))
    seq_out, pooled = fwd(params, input_ids, attention_mask)
    jax.block_until_ready((seq_out, pooled))

    assert seq_out.shape == (B, S, H) and pooled.shape == (B, H)
    assert bool(jnp.all(jnp.isfinite(seq_out))) and bool(jnp.all(jnp.isfinite(pooled)))
    print("KERNEL_OK")
</pallas_src>

<mosaic_0001>
module attributes {stable_mosaic.version = 11 : i64} {
  func.func @_layernorm_kernel(%arg0: i32, %arg1: memref<8x128xf32, #tpu.memory_space<vmem>>, %arg2: memref<1x128xf32, #tpu.memory_space<vmem>>, %arg3: memref<1x128xf32, #tpu.memory_space<vmem>>, %arg4: memref<8x128xf32, #tpu.memory_space<vmem>>) attributes {dimension_semantics = [#tpu.dimension_semantics<parallel>], iteration_bounds = array<i64: 2>, scalar_prefetch = 0 : i64, scratch_operands = 0 : i64, tpu.core_type = #tpu.core_type<tc>, window_params = [{transform_indices = @transform_0, window_bounds = array<i64: 8, 128>}, {pipeline_mode = #tpu.pipeline_mode<synchronous>, transform_indices = @transform_1, window_bounds = array<i64: 1, 128>}, {pipeline_mode = #tpu.pipeline_mode<synchronous>, transform_indices = @transform_2, window_bounds = array<i64: 1, 128>}, {transform_indices = @transform_3, window_bounds = array<i64: 8, 128>}]} {
    %c0 = arith.constant 0 : index
    %c0_0 = arith.constant 0 : index
    %0 = vector.load %arg1[%c0, %c0_0] : memref<8x128xf32, #tpu.memory_space<vmem>>, vector<8x128xf32>
    %c0_1 = arith.constant 0 : index
    %c0_2 = arith.constant 0 : index
    %1 = vector.load %arg2[%c0_1, %c0_2] : memref<1x128xf32, #tpu.memory_space<vmem>>, vector<1x128xf32>
    %c0_3 = arith.constant 0 : index
    %c0_4 = arith.constant 0 : index
    %2 = vector.load %arg3[%c0_3, %c0_4] : memref<1x128xf32, #tpu.memory_space<vmem>>, vector<1x128xf32>
    %cst = arith.constant dense<0.000000e+00> : vector<8xf32>
    %3 = vector.multi_reduction <add>, %0, %cst [1] : vector<8x128xf32> to vector<8xf32>
    %4 = vector.shape_cast %3 : vector<8xf32> to vector<8x1xf32>
    %cst_5 = arith.constant 1.280000e+02 : f32
    %5 = vector.broadcast %cst_5 : f32 to vector<8x1xf32>
    %6 = arith.divf %4, %5 : vector<8x1xf32>
    %7 = vector.broadcast %6 : vector<8x1xf32> to vector<8x128xf32>
    %8 = arith.subf %0, %7 : vector<8x128xf32>
    %9 = arith.mulf %8, %8 : vector<8x128xf32>
    %cst_6 = arith.constant dense<0.000000e+00> : vector<8xf32>
    %10 = vector.multi_reduction <add>, %9, %cst_6 [1] : vector<8x128xf32> to vector<8xf32>
    %11 = vector.shape_cast %10 : vector<8xf32> to vector<8x1xf32>
    %cst_7 = arith.constant 1.280000e+02 : f32
    %12 = vector.broadcast %cst_7 : f32 to vector<8x1xf32>
    %13 = arith.divf %11, %12 : vector<8x1xf32>
    %14 = vector.broadcast %6 : vector<8x1xf32> to vector<8x128xf32>
    %15 = arith.subf %0, %14 : vector<8x128xf32>
    %cst_8 = arith.constant 9.99999996E-13 : f32
    %16 = vector.broadcast %cst_8 : f32 to vector<8x1xf32>
    %17 = arith.addf %13, %16 : vector<8x1xf32>
    %18 = math.rsqrt %17 : vector<8x1xf32>
    %19 = vector.broadcast %18 : vector<8x1xf32> to vector<8x128xf32>
    %20 = arith.mulf %15, %19 : vector<8x128xf32>
    %21 = vector.broadcast %1 : vector<1x128xf32> to vector<8x128xf32>
    %22 = arith.mulf %20, %21 : vector<8x128xf32>
    %23 = vector.broadcast %2 : vector<1x128xf32> to vector<8x128xf32>
    %24 = arith.addf %22, %23 : vector<8x128xf32>
    %c0_9 = arith.constant 0 : index
    %c0_10 = arith.constant 0 : index
    %25 = vector.load %arg4[%c0_9, %c0_10] : memref<8x128xf32, #tpu.memory_space<vmem>>, vector<8x128xf32>
    tpu.vector_store %arg4[%c0_9, %c0_10], %24 {strides = array<i32>} : memref<8x128xf32, #tpu.memory_space<vmem>>, vector<8x128xf32>,
    return
  }
  func.func @transform_0(%arg0: i32) -> (i32, i32) {
    %c0_i32 = arith.constant 0 : i32
    %c0_i32_0 = arith.constant 0 : i32
    return %arg0, %c0_i32 : i32, i32
  }
  func.func @transform_1(%arg0: i32) -> (i32, i32) {
    %c0_i32 = arith.constant 0 : i32
    %c0_i32_0 = arith.constant 0 : i32
    %c0_i32_1 = arith.constant 0 : i32
    return %c0_i32, %c0_i32_0 : i32, i32
  }
  func.func @transform_2(%arg0: i32) -> (i32, i32) {
    %c0_i32 = arith.constant 0 : i32
    %c0_i32_0 = arith.constant 0 : i32
    %c0_i32_1 = arith.constant 0 : i32
    return %c0_i32, %c0_i32_0 : i32, i32
  }
  func.func @transform_3(%arg0: i32) -> (i32, i32) {
    %c0_i32 = arith.constant 0 : i32
    %c0_i32_0 = arith.constant 0 : i32
    return %arg0, %c0_i32 : i32, i32
  }
}

module attributes {stable_mosaic.version = 11 : i64} {
  func.func @_bert_encoder_kernel(%arg0: i32, %arg1: i32, %arg2: memref<1x8x128xf32, #tpu.memory_space<vmem>>, %arg3: memref<1x1x8xf32, #tpu.memory_space<vmem>>, %arg4: memref<1x128x384xbf16, #tpu.memory_space<vmem>>, %arg5: memref<1x1x384xf32, #tpu.memory_space<vmem>>, %arg6: memref<1x128x128xbf16, #tpu.memory_space<vmem>>, %arg7: memref<1x1x128xf32, #tpu.memory_space<vmem>>, %arg8: memref<1x1x128xf32, #tpu.memory_space<vmem>>, %arg9: memref<1x1x128xf32, #tpu.memory_space<vmem>>, %arg10: memref<1x128x512xbf16, #tpu.memory_space<vmem>>, %arg11: memref<1x1x512xf32, #tpu.memory_space<vmem>>, %arg12: memref<1x512x128xbf16, #tpu.memory_space<vmem>>, %arg13: memref<1x1x128xf32, #tpu.memory_space<vmem>>, %arg14: memref<1x1x128xf32, #tpu.memory_space<vmem>>, %arg15: memref<1x1x128xf32, #tpu.memory_space<vmem>>, %arg16: memref<1x8x128xf32, #tpu.memory_space<vmem>>) attributes {dimension_semantics = [#tpu.dimension_semantics<parallel>, #tpu.dimension_semantics<arbitrary>], iteration_bounds = array<i64: 2, 2>, scalar_prefetch = 0 : i64, scratch_operands = 0 : i64, tpu.core_type = #tpu.core_type<tc>, window_params = [{transform_indices = @transform_0, window_bounds = array<i64: 1, 8, 128>}, {transform_indices = @transform_1, window_bounds = array<i64: 1, 1, 8>}, {transform_indices = @transform_2, window_bounds = array<i64: 1, 128, 384>}, {transform_indices = @transform_3, window_bounds = array<i64: 1, 1, 384>}, {transform_indices = @transform_4, window_bounds = array<i64: 1, 128, 128>}, {transform_indices = @transform_5, window_bounds = array<i64: 1, 1, 128>}, {transform_indices = @transform_6, window_bounds = array<i64: 1, 1, 128>}, {transform_indices = @transform_7, window_bounds = array<i64: 1, 1, 128>}, {transform_indices = @transform_8, window_bounds = array<i64: 1, 128, 512>}, {transform_indices = @transform_9, window_bounds = array<i64: 1, 1, 512>}, {transform_indices = @transform_10, window_bounds = array<i64: 1, 512, 128>}, {transform_indices = @transform_11, window_bounds = array<i64: 1, 1, 128>}, {transform_indices = @transform_12, window_bounds = array<i64: 1, 1, 128>}, {transform_indices = @transform_13, window_bounds = array<i64: 1, 1, 128>}, {transform_indices = @transform_14, window_bounds = array<i64: 1, 8, 128>}]} {
    %c0_i32 = arith.constant 0 : i32
    %0 = arith.cmpi eq, %arg1, %c0_i32 : i32
    %1 = arith.extui %0 : i1 to i32
    %c0_i32_0 = arith.constant 0 : i32
    %2 = arith.cmpi ne, %1, %c0_i32_0 : i32
    scf.if %2 {
      %c0_78 = arith.constant 0 : index
      %c0_79 = arith.constant 0 : index
      %c0_80 = arith.constant 0 : index
      %181 = vector.load %arg2[%c0_78, %c0_79, %c0_80] : memref<1x8x128xf32, #tpu.memory_space<vmem>>, vector<1x8x128xf32>
      %182 = vector.shape_cast %181 : vector<1x8x128xf32> to vector<8x128xf32>
      %c0_81 = arith.constant 0 : index
      %c0_82 = arith.constant 0 : index
      %c0_83 = arith.constant 0 : index
      %183 = vector.load %arg16[%c0_81, %c0_82, %c0_83] : memref<1x8x128xf32, #tpu.memory_space<vmem>>, vector<1x8x128xf32>
      %184 = vector.shape_cast %183 : vector<1x8x128xf32> to vector<8x128xf32>
      %185 = vector.shape_cast %182 : vector<8x128xf32> to vector<1x8x128xf32>
      tpu.vector_store %arg16[%c0_81, %c0_82, %c0_83], %185 {strides = array<i32>} : memref<1x8x128xf32, #tpu.memory_space<vmem>>, vector<1x8x128xf32>,
    } else {
    }
    %c0 = arith.constant 0 : index
    %c0_1 = arith.constant 0 : index
    %c0_2 = arith.constant 0 : index
    %3 = vector.load %arg16[%c0, %c0_1, %c0_2] : memref<1x8x128xf32, #tpu.memory_space<vmem>>, vector<1x8x128xf32>
    %4 = vector.shape_cast %3 : vector<1x8x128xf32> to vector<8x128xf32>
    %c0_3 = arith.constant 0 : index
    %c0_4 = arith.constant 0 : index
    %c0_5 = arith.constant 0 : index
    %5 = vector.load %arg3[%c0_3, %c0_4, %c0_5] : memref<1x1x8xf32, #tpu.memory_space<vmem>>, vector<1x1x8xf32>
    %6 = vector.shape_cast %5 : vector<1x1x8xf32> to vector<1x8xf32>
    %7 = arith.truncf %4 : vector<8x128xf32> to vector<8x128xbf16>
    %c0_6 = arith.constant 0 : index
    %c0_7 = arith.constant 0 : index
    %c0_8 = arith.constant 0 : index
    %8 = vector.load %arg4[%c0_6, %c0_7, %c0_8] : memref<1x128x384xbf16, #tpu.memory_space<vmem>>, vector<1x128x384xbf16>
    %9 = vector.shape_cast %8 : vector<1x128x384xbf16> to vector<128x384xbf16>
    %cst = arith.constant dense<0.000000e+00> : vector<8x384xf32>
    %10 = tpu.matmul %7, %9, %cst {dimension_numbers = #tpu.dot_dimension_numbers<[1], [0], [0], [1], [0, 0, 1, 1], [], []>} : vector<8x128xbf16>, vector<128x384xbf16>, vector<8x384xf32> -> vector<8x384xf32>
    %c0_9 = arith.constant 0 : index
    %c0_10 = arith.constant 0 : index
    %c0_11 = arith.constant 0 : index
    %11 = vector.load %arg5[%c0_9, %c0_10, %c0_11] : memref<1x1x384xf32, #tpu.memory_space<vmem>>, vector<1x1x384xf32>
    %12 = vector.shape_cast %11 : vector<1x1x384xf32> to vector<1x384xf32>
    %13 = vector.broadcast %12 : vector<1x384xf32> to vector<8x384xf32>
    %14 = arith.addf %10, %13 : vector<8x384xf32>
    %15 = vector.extract_strided_slice %14 {offsets = [0, 0], sizes = [8, 128], strides = [1, 1]} : vector<8x384xf32> to vector<8x128xf32>
    %16 = vector.extract_strided_slice %14 {offsets = [0, 128], sizes = [8, 128], strides = [1, 1]} : vector<8x384xf32> to vector<8x128xf32>
    %17 = vector.extract_strided_slice %14 {offsets = [0, 256], sizes = [8, 128], strides = [1, 1]} : vector<8x384xf32> to vector<8x128xf32>
    %18 = vector.extract_strided_slice %15 {offsets = [0, 0], sizes = [8, 32], strides = [1, 1]} : vector<8x128xf32> to vector<8x32xf32>
    %19 = vector.extract_strided_slice %16 {offsets = [0, 0], sizes = [8, 32], strides = [1, 1]} : vector<8x128xf32> to vector<8x32xf32>
    %20 = vector.extract_strided_slice %17 {offsets = [0, 0], sizes = [8, 32], strides = [1, 1]} : vector<8x128xf32> to vector<8x32xf32>
    %cst_12 = arith.constant dense<0.000000e+00> : vector<8x8xf32>
    %21 = tpu.matmul %18, %19, %cst_12 {dimension_numbers = #tpu.dot_dimension_numbers<[1], [1], [0], [0], [0, 0, 1, 0], [], []>} : vector<8x32xf32>, vector<8x32xf32>, vector<8x8xf32> -> vector<8x8xf32>
    %22 = vector.broadcast %6 : vector<1x8xf32> to vector<8x8xf32>
    %23 = arith.addf %21, %22 : vector<8x8xf32>
    %cst_13 = arith.constant dense<0xFF800000> : vector<8xf32>
    %24 = vector.multi_reduction <maximumf>, %23, %cst_13 [1] : vector<8x8xf32> to vector<8xf32>
    %25 = vector.shape_cast %24 : vector<8xf32> to vector<8x1xf32>
    %26 = vector.broadcast %25 : vector<8x1xf32> to vector<8x8xf32>
    %27 = arith.subf %23, %26 : vector<8x8xf32>
    %28 = math.exp %27 : vector<8x8xf32>
    %cst_14 = arith.constant dense<0.000000e+00> : vector<8xf32>
    %29 = vector.multi_reduction <add>, %28, %cst_14 [1] : vector<8x8xf32> to vector<8xf32>
    %30 = vector.shape_cast %29 : vector<8xf32> to vector<8x1xf32>
    %31 = tpu.reciprocal %30 {approx = true} : vector<8x1xf32> -> vector<8x1xf32>
    %32 = vector.broadcast %31 : vector<8x1xf32> to vector<8x8xf32>
    %33 = arith.mulf %28, %32 : vector<8x8xf32>
    %cst_15 = arith.constant dense<0.000000e+00> : vector<8x32xf32>
    %34 = tpu.matmul %33, %20, %cst_15 {dimension_numbers = #tpu.dot_dimension_numbers<[1], [0], [0], [1], [0, 0, 1, 1], [], []>} : vector<8x8xf32>, vector<8x32xf32>, vector<8x32xf32> -> vector<8x32xf32>
    %35 = vector.extract_strided_slice %15 {offsets = [0, 32], sizes = [8, 32], strides = [1, 1]} : vector<8x128xf32> to vector<8x32xf32>
    %36 = vector.extract_strided_slice %16 {offsets = [0, 32], sizes = [8, 32], strides = [1, 1]} : vector<8x128xf32> to vector<8x32xf32>
    %37 = vector.extract_strided_slice %17 {offsets = [0, 32], sizes = [8, 32], strides = [1, 1]} : vector<8x128xf32> to vector<8x32xf32>
    %cst_16 = arith.constant dense<0.000000e+00> : vector<8x8xf32>
    %38 = tpu.matmul %35, %36, %cst_16 {dimension_numbers = #tpu.dot_dimension_numbers<[1], [1], [0], [0], [0, 0, 1, 0], [], []>} : vector<8x32xf32>, vector<8x32xf32>, vector<8x8xf32> -> vector<8x8xf32>
    %39 = vector.broadcast %6 : vector<1x8xf32> to vector<8x8xf32>
    %40 = arith.addf %38, %39 : vector<8x8xf32>
    %cst_17 = arith.constant dense<0xFF800000> : vector<8xf32>
    %41 = vector.multi_reduction <maximumf>, %40, %cst_17 [1] : vector<8x8xf32> to vector<8xf32>
    %42 = vector.shape_cast %41 : vector<8xf32> to vector<8x1xf32>
    %43 = vector.broadcast %42 : vector<8x1xf32> to vector<8x8xf32>
    %44 = arith.subf %40, %43 : vector<8x8xf32>
    %45 = math.exp %44 : vector<8x8xf32>
    %cst_18 = arith.constant dense<0.000000e+00> : vector<8xf32>
    %46 = vector.multi_reduction <add>, %45, %cst_18 [1] : vector<8x8xf32> to vector<8xf32>
    %47 = vector.shape_cast %46 : vector<8xf32> to vector<8x1xf32>
    %48 = tpu.reciprocal %47 {approx = true} : vector<8x1xf32> -> vector<8x1xf32>
    %49 = vector.broadcast %48 : vector<8x1xf32> to vector<8x8xf32>
    %50 = arith.mulf %45, %49 : vector<8x8xf32>
    %cst_19 = arith.constant dense<0.000000e+00> : vector<8x32xf32>
    %51 = tpu.matmul %50, %37, %cst_19 {dimension_numbers = #tpu.dot_dimension_numbers<[1], [0], [0], [1], [0, 0, 1, 1], [], []>} : vector<8x8xf32>, vector<8x32xf32>, vector<8x32xf32> -> vector<8x32xf32>
    %52 = vector.extract_strided_slice %15 {offsets = [0, 64], sizes = [8, 32], strides = [1, 1]} : vector<8x128xf32> to vector<8x32xf32>
    %53 = vector.extract_strided_slice %16 {offsets = [0, 64], sizes = [8, 32], strides = [1, 1]} : vector<8x128xf32> to vector<8x32xf32>
    %54 = vector.extract_strided_slice %17 {offsets = [0, 64], sizes = [8, 32], strides = [1, 1]} : vector<8x128xf32> to vector<8x32xf32>
    %cst_20 = arith.constant dense<0.000000e+00> : vector<8x8xf32>
    %55 = tpu.matmul %52, %53, %cst_20 {dimension_numbers = #tpu.dot_dimension_numbers<[1], [1], [0], [0], [0, 0, 1, 0], [], []>} : vector<8x32xf32>, vector<8x32xf32>, vector<8x8xf32> -> vector<8x8xf32>
    %56 = vector.broadcast %6 : vector<1x8xf32> to vector<8x8xf32>
    %57 = arith.addf %55, %56 : vector<8x8xf32>
    %cst_21 = arith.constant dense<0xFF800000> : vector<8xf32>
    %58 = vector.multi_reduction <maximumf>, %57, %cst_21 [1] : vector<8x8xf32> to vector<8xf32>
    %59 = vector.shape_cast %58 : vector<8xf32> to vector<8x1xf32>
    %60 = vector.broadcast %59 : vector<8x1xf32> to vector<8x8xf32>
    %61 = arith.subf %57, %60 : vector<8x8xf32>
    %62 = math.exp %61 : vector<8x8xf32>
    %cst_22 = arith.constant dense<0.000000e+00> : vector<8xf32>
    %63 = vector.multi_reduction <add>, %62, %cst_22 [1] : vector<8x8xf32> to vector<8xf32>
    %64 = vector.shape_cast %63 : vector<8xf32> to vector<8x1xf32>
    %65 = tpu.reciprocal %64 {approx = true} : vector<8x1xf32> -> vector<8x1xf32>
    %66 = vector.broadcast %65 : vector<8x1xf32> to vector<8x8xf32>
    %67 = arith.mulf %62, %66 : vector<8x8xf32>
    %cst_23 = arith.constant dense<0.000000e+00> : vector<8x32xf32>
    %68 = tpu.matmul %67, %54, %cst_23 {dimension_numbers = #tpu.dot_dimension_numbers<[1], [0], [0], [1], [0, 0, 1, 1], [], []>} : vector<8x8xf32>, vector<8x32xf32>, vector<8x32xf32> -> vector<8x32xf32>
    %69 = vector.extract_strided_slice %15 {offsets = [0, 96], sizes = [8, 32], strides = [1, 1]} : vector<8x128xf32> to vector<8x32xf32>
    %70 = vector.extract_strided_slice %16 {offsets = [0, 96], sizes = [8, 32], strides = [1, 1]} : vector<8x128xf32> to vector<8x32xf32>
    %71 = vector.extract_strided_slice %17 {offsets = [0, 96], sizes = [8, 32], strides = [1, 1]} : vector<8x128xf32> to vector<8x32xf32>
    %cst_24 = arith.constant dense<0.000000e+00> : vector<8x8xf32>
    %72 = tpu.matmul %69, %70, %cst_24 {dimension_numbers = #tpu.dot_dimension_numbers<[1], [1], [0], [0], [0, 0, 1, 0], [], []>} : vector<8x32xf32>, vector<8x32xf32>, vector<8x8xf32> -> vector<8x8xf32>
    %73 = vector.broadcast %6 : vector<1x8xf32> to vector<8x8xf32>
    %74 = arith.addf %72, %73 : vector<8x8xf32>
    %cst_25 = arith.constant dense<0xFF800000> : vector<8xf32>
    %75 = vector.multi_reduction <maximumf>, %74, %cst_25 [1] : vector<8x8xf32> to vector<8xf32>
    %76 = vector.shape_cast %75 : vector<8xf32> to vector<8x1xf32>
    %77 = vector.broadcast %76 : vector<8x1xf32> to vector<8x8xf32>
    %78 = arith.subf %74, %77 : vector<8x8xf32>
    %79 = math.exp %78 : vector<8x8xf32>
    %cst_26 = arith.constant dense<0.000000e+00> : vector<8xf32>
    %80 = vector.multi_reduction <add>, %79, %cst_26 [1] : vector<8x8xf32> to vector<8xf32>
    %81 = vector.shape_cast %80 : vector<8xf32> to vector<8x1xf32>
    %82 = tpu.reciprocal %81 {approx = true} : vector<8x1xf32> -> vector<8x1xf32>
    %83 = vector.broadcast %82 : vector<8x1xf32> to vector<8x8xf32>
    %84 = arith.mulf %79, %83 : vector<8x8xf32>
    %cst_27 = arith.constant dense<0.000000e+00> : vector<8x32xf32>
    %85 = tpu.matmul %84, %71, %cst_27 {dimension_numbers = #tpu.dot_dimension_numbers<[1], [0], [0], [1], [0, 0, 1, 1], [], []>} : vector<8x8xf32>, vector<8x32xf32>, vector<8x32xf32> -> vector<8x32xf32>
    %86 = tpu.concatenate %34, %51, %68, %85 in 1 : vector<8x32xf32>, vector<8x32xf32>, vector<8x32xf32>, vector<8x32xf32> -> vector<8x128xf32>
    %87 = arith.truncf %86 : vector<8x128xf32> to vector<8x128xbf16>
    %c0_28 = arith.constant 0 : index
    %c0_29 = arith.constant 0 : index
    %c0_30 = arith.constant 0 : index
    %88 = vector.load %arg6[%c0_28, %c0_29, %c0_30] : memref<1x128x128xbf16, #tpu.memory_space<vmem>>, vector<1x128x128xbf16>
    %89 = vector.shape_cast %88 : vector<1x128x128xbf16> to vector<128x128xbf16>
    %cst_31 = arith.constant dense<0.000000e+00> : vector<8x128xf32>
    %90 = tpu.matmul %87, %89, %cst_31 {dimension_numbers = #tpu.dot_dimension_numbers<[1], [0], [0], [1], [0, 0, 1, 1], [], []>} : vector<8x128xbf16>, vector<128x128xbf16>, vector<8x128xf32> -> vector<8x128xf32>
    %c0_32 = arith.constant 0 : index
    %c0_33 = arith.constant 0 : index
    %c0_34 = arith.constant 0 : index
    %91 = vector.load %arg7[%c0_32, %c0_33, %c0_34] : memref<1x1x128xf32, #tpu.memory_space<vmem>>, vector<1x1x128xf32>
    %92 = vector.shape_cast %91 : vector<1x1x128xf32> to vector<1x128xf32>
    %93 = vector.broadcast %92 : vector<1x128xf32> to vector<8x128xf32>
    %94 = arith.addf %90, %93 : vector<8x128xf32>
    %95 = arith.addf %4, %94 : vector<8x128xf32>
    %c0_35 = arith.constant 0 : index
    %c0_36 = arith.constant 0 : index
    %c0_37 = arith.constant 0 : index
    %96 = vector.load %arg8[%c0_35, %c0_36, %c0_37] : memref<1x1x128xf32, #tpu.memory_space<vmem>>, vector<1x1x128xf32>
    %97 = vector.shape_cast %96 : vector<1x1x128xf32> to vector<1x128xf32>
    %c0_38 = arith.constant 0 : index
    %c0_39 = arith.constant 0 : index
    %c0_40 = arith.constant 0 : index
    %98 = vector.load %arg9[%c0_38, %c0_39, %c0_40] : memref<1x1x128xf32, #tpu.memory_space<vmem>>, vector<1x1x128xf32>
    %99 = vector.shape_cast %98 : vector<1x1x128xf32> to vector<1x128xf32>
    %cst_41 = arith.constant dense<0.000000e+00> : vector<8xf32>
    %100 = vector.multi_reduction <add>, %95, %cst_41 [1] : vector<8x128xf32> to vector<8xf32>
    %101 = vector.shape_cast %100 : vector<8xf32> to vector<8x1xf32>
    %cst_42 = arith.constant 1.280000e+02 : f32
    %102 = vector.broadcast %cst_42 : f32 to vector<8x1xf32>
    %103 = arith.divf %101, %102 : vector<8x1xf32>
    %104 = vector.broadcast %103 : vector<8x1xf32> to vector<8x128xf32>
    %105 = arith.subf %95, %104 : vector<8x128xf32>
    %106 = arith.mulf %105, %105 : vector<8x128xf32>
    %cst_43 = arith.constant dense<0.000000e+00> : vector<8xf32>
    %107 = vector.multi_reduction <add>, %106, %cst_43 [1] : vector<8x128xf32> to vector<8xf32>
    %108 = vector.shape_cast %107 : vector<8xf32> to vector<8x1xf32>
    %cst_44 = arith.constant 1.280000e+02 : f32
    %109 = vector.broadcast %cst_44 : f32 to vector<8x1xf32>
    %110 = arith.divf %108, %109 : vector<8x1xf32>
    %111 = vector.broadcast %103 : vector<8x1xf32> to vector<8x128xf32>
    %112 = arith.subf %95, %111 : vector<8x128xf32>
    %cst_45 = arith.constant 9.99999996E-13 : f32
    %113 = vector.broadcast %cst_45 : f32 to vector<8x1xf32>
    %114 = arith.addf %110, %113 : vector<8x1xf32>
    %115 = math.rsqrt %114 : vector<8x1xf32>
    %116 = vector.broadcast %115 : vector<8x1xf32> to vector<8x128xf32>
    %117 = arith.mulf %112, %116 : vector<8x128xf32>
    %118 = vector.broadcast %97 : vector<1x128xf32> to vector<8x128xf32>
    %119 = arith.mulf %117, %118 : vector<8x128xf32>
    %120 = vector.broadcast %99 : vector<1x128xf32> to vector<8x128xf32>
    %121 = arith.addf %119, %120 : vector<8x128xf32>
    %122 = arith.truncf %121 : vector<8x128xf32> to vector<8x128xbf16>
    %c0_46 = arith.constant 0 : index
    %c0_47 = arith.constant 0 : index
    %c0_48 = arith.constant 0 : index
    %123 = vector.load %arg10[%c0_46, %c0_47, %c0_48] : memref<1x128x512xbf16, #tpu.memory_space<vmem>>, vector<1x128x512xbf16>
    %124 = vector.shape_cast %123 : vector<1x128x512xbf16> to vector<128x512xbf16>
    %cst_49 = arith.constant dense<0.000000e+00> : vector<8x512xf32>
    %125 = tpu.matmul %122, %124, %cst_49 {dimension_numbers = #tpu.dot_dimension_numbers<[1], [0], [0], [1], [0, 0, 1, 1], [], []>} : vector<8x128xbf16>, vector<128x512xbf16>, vector<8x512xf32> -> vector<8x512xf32>
    %c0_50 = arith.constant 0 : index
    %c0_51 = arith.constant 0 : index
    %c0_52 = arith.constant 0 : index
    %126 = vector.load %arg11[%c0_50, %c0_51, %c0_52] : memref<1x1x512xf32, #tpu.memory_space<vmem>>, vector<1x1x512xf32>
    %127 = vector.shape_cast %126 : vector<1x1x512xf32> to vector<1x512xf32>
    %128 = vector.broadcast %127 : vector<1x512xf32> to vector<8x512xf32>
    %129 = arith.addf %125, %128 : vector<8x512xf32>
    %cst_53 = arith.constant 5.000000e-01 : f32
    %130 = vector.broadcast %cst_53 : f32 to vector<8x512xf32>
    %131 = arith.mulf %130, %129 : vector<8x512xf32>
    %cst_54 = arith.constant 4.471500e-02 : f32
    %132 = vector.broadcast %cst_54 : f32 to vector<8x512xf32>
    %133 = arith.mulf %132, %129 : vector<8x512xf32>
    %134 = arith.mulf %133, %129 : vector<8x512xf32>
    %135 = arith.mulf %134, %129 : vector<8x512xf32>
    %136 = arith.addf %129, %135 : vector<8x512xf32>
    %cst_55 = arith.constant 0.797884583 : f32
    %137 = vector.broadcast %cst_55 : f32 to vector<8x512xf32>
    %138 = arith.mulf %137, %136 : vector<8x512xf32>
    %139 = math.tanh %138 : vector<8x512xf32>
    %cst_56 = arith.constant 1.000000e+00 : f32
    %140 = vector.broadcast %cst_56 : f32 to vector<8x512xf32>
    %141 = arith.addf %140, %139 : vector<8x512xf32>
    %142 = arith.mulf %131, %141 : vector<8x512xf32>
    %143 = arith.truncf %142 : vector<8x512xf32> to vector<8x512xbf16>
    %c0_57 = arith.constant 0 : index
    %c0_58 = arith.constant 0 : index
    %c0_59 = arith.constant 0 : index
    %144 = vector.load %arg12[%c0_57, %c0_58, %c0_59] : memref<1x512x128xbf16, #tpu.memory_space<vmem>>, vector<1x512x128xbf16>
    %145 = vector.shape_cast %144 : vector<1x512x128xbf16> to vector<512x128xbf16>
    %cst_60 = arith.constant dense<0.000000e+00> : vector<8x128xf32>
    %146 = tpu.matmul %143, %145, %cst_60 {dimension_numbers = #tpu.dot_dimension_numbers<[1], [0], [0], [1], [0, 0, 1, 1], [], []>} : vector<8x512xbf16>, vector<512x128xbf16>, vector<8x128xf32> -> vector<8x128xf32>
    %c0_61 = arith.constant 0 : index
    %c0_62 = arith.constant 0 : index
    %c0_63 = arith.constant 0 : index
    %147 = vector.load %arg13[%c0_61, %c0_62, %c0_63] : memref<1x1x128xf32, #tpu.memory_space<vmem>>, vector<1x1x128xf32>
    %148 = vector.shape_cast %147 : vector<1x1x128xf32> to vector<1x128xf32>
    %149 = vector.broadcast %148 : vector<1x128xf32> to vector<8x128xf32>
    %150 = arith.addf %146, %149 : vector<8x128xf32>
    %151 = arith.addf %121, %150 : vector<8x128xf32>
    %c0_64 = arith.constant 0 : index
    %c0_65 = arith.constant 0 : index
    %c0_66 = arith.constant 0 : index
    %152 = vector.load %arg14[%c0_64, %c0_65, %c0_66] : memref<1x1x128xf32, #tpu.memory_space<vmem>>, vector<1x1x128xf32>
    %153 = vector.shape_cast %152 : vector<1x1x128xf32> to vector<1x128xf32>
    %c0_67 = arith.constant 0 : index
    %c0_68 = arith.constant 0 : index
    %c0_69 = arith.constant 0 : index
    %154 = vector.load %arg15[%c0_67, %c0_68, %c0_69] : memref<1x1x128xf32, #tpu.memory_space<vmem>>, vector<1x1x128xf32>
    %155 = vector.shape_cast %154 : vector<1x1x128xf32> to vector<1x128xf32>
    %cst_70 = arith.constant dense<0.000000e+00> : vector<8xf32>
    %156 = vector.multi_reduction <add>, %151, %cst_70 [1] : vector<8x128xf32> to vector<8xf32>
    %157 = vector.shape_cast %156 : vector<8xf32> to vector<8x1xf32>
    %cst_71 = arith.constant 1.280000e+02 : f32
    %158 = vector.broadcast %cst_71 : f32 to vector<8x1xf32>
    %159 = arith.divf %157, %158 : vector<8x1xf32>
    %160 = vector.broadcast %159 : vector<8x1xf32> to vector<8x128xf32>
    %161 = arith.subf %151, %160 : vector<8x128xf32>
    %162 = arith.mulf %161, %161 : vector<8x128xf32>
    %cst_72 = arith.constant dense<0.000000e+00> : vector<8xf32>
    %163 = vector.multi_reduction <add>, %162, %cst_72 [1] : vector<8x128xf32> to vector<8xf32>
    %164 = vector.shape_cast %163 : vector<8xf32> to vector<8x1xf32>
    %cst_73 = arith.constant 1.280000e+02 : f32
    %165 = vector.broadcast %cst_73 : f32 to vector<8x1xf32>
    %166 = arith.divf %164, %165 : vector<8x1xf32>
    %167 = vector.broadcast %159 : vector<8x1xf32> to vector<8x128xf32>
    %168 = arith.subf %151, %167 : vector<8x128xf32>
    %cst_74 = arith.constant 9.99999996E-13 : f32
    %169 = vector.broadcast %cst_74 : f32 to vector<8x1xf32>
    %170 = arith.addf %166, %169 : vector<8x1xf32>
    %171 = math.rsqrt %170 : vector<8x1xf32>
    %172 = vector.broadcast %171 : vector<8x1xf32> to vector<8x128xf32>
    %173 = arith.mulf %168, %172 : vector<8x128xf32>
    %174 = vector.broadcast %153 : vector<1x128xf32> to vector<8x128xf32>
    %175 = arith.mulf %173, %174 : vector<8x128xf32>
    %176 = vector.broadcast %155 : vector<1x128xf32> to vector<8x128xf32>
    %177 = arith.addf %175, %176 : vector<8x128xf32>
    %c0_75 = arith.constant 0 : index
    %c0_76 = arith.constant 0 : index
    %c0_77 = arith.constant 0 : index
    %178 = vector.load %arg16[%c0_75, %c0_76, %c0_77] : memref<1x8x128xf32, #tpu.memory_space<vmem>>, vector<1x8x128xf32>
    %179 = vector.shape_cast %178 : vector<1x8x128xf32> to vector<8x128xf32>
    %180 = vector.shape_cast %177 : vector<8x128xf32> to vector<1x8x128xf32>
    tpu.vector_store %arg16[%c0_75, %c0_76, %c0_77], %180 {strides = array<i32>} : memref<1x8x128xf32, #tpu.memory_space<vmem>>, vector<1x8x128xf32>,
    return
  }
  func.func @transform_0(%arg0: i32, %arg1: i32) -> (i32, i32, i32) {
    %c0_i32 = arith.constant 0 : i32
    %c0_i32_0 = arith.constant 0 : i32
    %c0_i32_1 = arith.constant 0 : i32
    return %arg0, %c0_i32, %c0_i32_0 : i32, i32, i32
  }
  func.func @transform_1(%arg0: i32, %arg1: i32) -> (i32, i32, i32) {
    %c0_i32 = arith.constant 0 : i32
    %c0_i32_0 = arith.constant 0 : i32
    %c0_i32_1 = arith.constant 0 : i32
    return %arg0, %c0_i32, %c0_i32_0 : i32, i32, i32
  }
  func.func @transform_2(%arg0: i32, %arg1: i32) -> (i32, i32, i32) {
    %c0_i32 = arith.constant 0 : i32
    %c0_i32_0 = arith.constant 0 : i32
    %c0_i32_1 = arith.constant 0 : i32
    return %arg1, %c0_i32, %c0_i32_0 : i32, i32, i32
  }
  func.func @transform_3(%arg0: i32, %arg1: i32) -> (i32, i32, i32) {
    %c0_i32 = arith.constant 0 : i32
    %c0_i32_0 = arith.constant 0 : i32
    %c0_i32_1 = arith.constant 0 : i32
    return %arg1, %c0_i32, %c0_i32_0 : i32, i32, i32
  }
  func.func @transform_4(%arg0: i32, %arg1: i32) -> (i32, i32, i32) {
    %c0_i32 = arith.constant 0 : i32
    %c0_i32_0 = arith.constant 0 : i32
    %c0_i32_1 = arith.constant 0 : i32
    return %arg1, %c0_i32, %c0_i32_0 : i32, i32, i32
  }
  func.func @transform_5(%arg0: i32, %arg1: i32) -> (i32, i32, i32) {
    %c0_i32 = arith.constant 0 : i32
    %c0_i32_0 = arith.constant 0 : i32
    %c0_i32_1 = arith.constant 0 : i32
    return %arg1, %c0_i32, %c0_i32_0 : i32, i32, i32
  }
  func.func @transform_6(%arg0: i32, %arg1: i32) -> (i32, i32, i32) {
    %c0_i32 = arith.constant 0 : i32
    %c0_i32_0 = arith.constant 0 : i32
    %c0_i32_1 = arith.constant 0 : i32
    return %arg1, %c0_i32, %c0_i32_0 : i32, i32, i32
  }
  func.func @transform_7(%arg0: i32, %arg1: i32) -> (i32, i32, i32) {
    %c0_i32 = arith.constant 0 : i32
    %c0_i32_0 = arith.constant 0 : i32
    %c0_i32_1 = arith.constant 0 : i32
    return %arg1, %c0_i32, %c0_i32_0 : i32, i32, i32
  }
  func.func @transform_8(%arg0: i32, %arg1: i32) -> (i32, i32, i32) {
    %c0_i32 = arith.constant 0 : i32
    %c0_i32_0 = arith.constant 0 : i32
    %c0_i32_1 = arith.constant 0 : i32
    return %arg1, %c0_i32, %c0_i32_0 : i32, i32, i32
  }
  func.func @transform_9(%arg0: i32, %arg1: i32) -> (i32, i32, i32) {
    %c0_i32 = arith.constant 0 : i32
    %c0_i32_0 = arith.constant 0 : i32
    %c0_i32_1 = arith.constant 0 : i32
    return %arg1, %c0_i32, %c0_i32_0 : i32, i32, i32
  }
  func.func @transform_10(%arg0: i32, %arg1: i32) -> (i32, i32, i32) {
    %c0_i32 = arith.constant 0 : i32
    %c0_i32_0 = arith.constant 0 : i32
    %c0_i32_1 = arith.constant 0 : i32
    return %arg1, %c0_i32, %c0_i32_0 : i32, i32, i32
  }
  func.func @transform_11(%arg0: i32, %arg1: i32) -> (i32, i32, i32) {
    %c0_i32 = arith.constant 0 : i32
    %c0_i32_0 = arith.constant 0 : i32
    %c0_i32_1 = arith.constant 0 : i32
    return %arg1, %c0_i32, %c0_i32_0 : i32, i32, i32
  }
  func.func @transform_12(%arg0: i32, %arg1: i32) -> (i32, i32, i32) {
    %c0_i32 = arith.constant 0 : i32
    %c0_i32_0 = arith.constant 0 : i32
    %c0_i32_1 = arith.constant 0 : i32
    return %arg1, %c0_i32, %c0_i32_0 : i32, i32, i32
  }
  func.func @transform_13(%arg0: i32, %arg1: i32) -> (i32, i32, i32) {
    %c0_i32 = arith.constant 0 : i32
    %c0_i32_0 = arith.constant 0 : i32
    %c0_i32_1 = arith.constant 0 : i32
    return %arg1, %c0_i32, %c0_i32_0 : i32, i32, i32
  }
  func.func @transform_14(%arg0: i32, %arg1: i32) -> (i32, i32, i32) {
    %c0_i32 = arith.constant 0 : i32
    %c0_i32_0 = arith.constant 0 : i32
    %c0_i32_1 = arith.constant 0 : i32
    return %arg0, %c0_i32, %c0_i32_0 : i32, i32, i32
  }
}

</mosaic_0001>

<llo_original>
// kernel: text_model_forward.2
$region0: #{text_model_forward.2}
  #allocation0 [shape = 'u32[]', space=smem, size = 0x4, offset = 0x4, fixed_abs, tag = 'smem constant byte address 0x4 - core index']
  #allocation1 [shape = 'u32[144,128]{1,0:T(1,128)}', space=vmem, size = 0x12000, scoped, tag = 'internal scratch']
  %s0 = inlined_call_operand.vmem [shape: f32[16,128], index: 0, kind: input, shape index: {}]
  %s1 = inlined_call_operand.vmem [shape: f32[1,128], index: 1, kind: input, shape index: {}]
  %s2 = inlined_call_operand.vmem [shape: f32[1,128], index: 2, kind: input, shape index: {}]
  %s3 = inlined_call_operand.vmem [shape: f32[16,128], index: 3, kind: output, shape index: {}]
  %s4 = sld [smem:[#allocation0]]
  $region45: #{text_model_forward.2} parent=0
    _
  %s6 = ssub.s32 1, %s4
  %s7 = scalar_select 0, %s6, %s4
  loop: start=0, step=1, limit=4
  $region2: #{text_model_forward.2} parent=0 // loop_pre_header
    _
  $region3: #{text_model_forward.2} parent=0 // loop_header
    %s9 = sphi 0, %s13
    %p10 = scmp.ge.s32.totalorder %s9, 4
    %s19 = sphi 0, %s21
    %s22 = sphi 0, %s19
    %s23 = sphi 0, %s22
    %s39 = sphi 0, %s23
    %s43 = sphi 0, %s43
    %s45 = sphi 0, %s43
    %s46 = sphi 0, %s45
    %s60 = sphi 0, %s46
    %s64 = sphi 0, %s64
    %s66 = sphi 0, %s64
    %s67 = sphi 0, %s66
    %s81 = sphi 0, %s67
    %s87 = sphi 0, %s89
    %s90 = sphi 0, %s87
    %s91 = sphi 0, %s90
    %s107 = sphi 0, %s91
  $region4: #{text_model_forward.2} parent=0 // loop_header_branch
    %12 = sbr.rel (%p10) target = $region8
  $region5: #{text_model_forward.2} parent=0 // loop_body
    %s14 = ssub.s32 %s9, 1
    %s15 = ssub.s32 %s9, 2
    %s16 = sadd.s32 %s9, 1
    %s17 = ssub.s32 %s9, %s16
    %p18 = scmp.eq.s32.totalorder %s17, 0
    %s20 = sadd.s32 %s19, 1
    %s21 = scalar_select %p18, %s19, %s20
    %p24 = pneg %p18
    %p25 = scmp.eq.s32.totalorder %s9, 1
    %p26 = por %p24, %p25
    %p27 = scmp.ne.s32.totalorder %s19, %s22
    %p28 = scmp.eq.s32.totalorder %s9, 0
    %p29 = por %p27, %p28
    %p30 = scmp.ne.s32.totalorder %s19, %s22
    %p31 = scmp.eq.s32.totalorder %s14, 1
    %p32 = por %p30, %p31
    %p33 = scmp.ne.s32.totalorder %s22, %s23
    %p34 = scmp.eq.s32.totalorder %s14, 0
    %p35 = por %p33, %p34
    %p36 = scmp.ne.s32.totalorder %s22, %s23
    %p37 = scmp.eq.s32.totalorder %s15, 1
    %p38 = por %p36, %p37
    %p40 = scmp.ne.s32.totalorder %s23, %s39
    %p41 = scmp.eq.s32.totalorder %s15, 0
    %p42 = por %p40, %p41
    %s44 = sadd.s32 %s43, 1
    %p47 = scmp.eq.s32.totalorder %s9, 1
    %p48 = scmp.ne.s32.totalorder %s43, %s45
    %p49 = scmp.eq.s32.totalorder %s9, 0
    %p50 = por %p48, %p49
    %p51 = scmp.ne.s32.totalorder %s43, %s45
    %p52 = scmp.eq.s32.totalorder %s14, 1
    %p53 = por %p51, %p52
    %p54 = scmp.ne.s32.totalorder %s45, %s46
    %p55 = scmp.eq.s32.totalorder %s14, 0
    %p56 = por %p54, %p55
    %p57 = scmp.ne.s32.totalorder %s45, %s46
    %p58 = scmp.eq.s32.totalorder %s15, 1
    %p59 = por %p57, %p58
    %p61 = scmp.ne.s32.totalorder %s46, %s60
    %p62 = scmp.eq.s32.totalorder %s15, 0
    %p63 = por %p61, %p62
    %s65 = sadd.s32 %s64, 1
    %p68 = scmp.eq.s32.totalorder %s9, 1
    %p69 = scmp.ne.s32.totalorder %s64, %s66
    %p70 = scmp.eq.s32.totalorder %s9, 0
    %p71 = por %p69, %p70
    %p72 = scmp.ne.s32.totalorder %s64, %s66
    %p73 = scmp.eq.s32.totalorder %s14, 1
    %p74 = por %p72, %p73
    %p75 = scmp.ne.s32.totalorder %s66, %s67
    %p76 = scmp.eq.s32.totalorder %s14, 0
    %p77 = por %p75, %p76
    %p78 = scmp.ne.s32.totalorder %s66, %s67
    %p79 = scmp.eq.s32.totalorder %s15, 1
    %p80 = por %p78, %p79
    %p82 = scmp.ne.s32.totalorder %s67, %s81
    %p83 = scmp.eq.s32.totalorder %s15, 0
    %p84 = por %p82, %p83
    %s85 = ssub.s32 %s9, %s16
    %p86 = scmp.eq.s32.totalorder %s85, 0
    %s88 = sadd.s32 %s87, 1
    %s89 = scalar_select %p86, %s87, %s88
    %p92 = pneg %p86
    %p93 = scmp.eq.s32.totalorder %s9, 1
    %p94 = por %p92, %p93
    %p95 = scmp.ne.s32.totalorder %s87, %s90
    %p96 = scmp.eq.s32.totalorder %s9, 0
    %p97 = por %p95, %p96
    %p98 = scmp.ne.s32.totalorder %s87, %s90
    %p99 = scmp.eq.s32.totalorder %s14, 1
    %p100 = por %p98, %p99
    %p101 = scmp.ne.s32.totalorder %s90, %s91
    %p102 = scmp.eq.s32.totalorder %s14, 0
    %p103 = por %p101, %p102
    %p104 = scmp.ne.s32.totalorder %s90, %s91
    %p105 = scmp.eq.s32.totalorder %s15, 1
    %p106 = por %p104, %p105
    %p108 = scmp.ne.s32.totalorder %s91, %s107
    %p109 = scmp.eq.s32.totalorder %s15, 0
    %p110 = por %p108, %p109
    %p111 = scmp.le.s32.totalorder 1, %s9
    %p112 = scmp.lt.s32.totalorder %s9, 3
    %p113 = pnand %p111, %p112
    %p114 = pneg %p113
    // Predicated region
    $region9: #{text_model_forward.2} parent=5 // pred_check
      _
    $region10: #{text_model_forward.2} parent=5 // pred_check_branch
      %116 = sbr.rel (%p113) target = $region12
    $region11: #{text_model_forward.2} parent=5 // pred_region
      %s117 = ssub.s32 %s9, 1
      // Predicated region
      $region13: #{text_model_forward.2} parent=11 // pred_check
        %p118 = pneg %p56
      $region14: #{text_model_forward.2} parent=11 // pred_check_branch
        %120 = sbr.rel (%p118) target = $region16
      $region15: #{text_model_forward.2} parent=11 // pred_region
        _
      $region16: #{text_model_forward.2} parent=11 // pred_fallthru
        _
      // Predicated region
      $region17: #{text_model_forward.2} parent=11 // pred_check
        %p121 = pneg %p77
      $region18: #{text_model_forward.2} parent=11 // pred_check_branch
        %123 = sbr.rel (%p121) target = $region20
      $region19: #{text_model_forward.2} parent=11 // pred_region
        _
      $region20: #{text_model_forward.2} parent=11 // pred_fallthru
        _
    $region12: #{text_model_forward.2} parent=5 // pred_fallthru
      _
    %p124 = scmp.lt.s32.totalorder %s9, 2
    // Predicated region
    $region21: #{text_model_forward.2} parent=5 // pred_check
      %p125 = pneg %p124
    $region22: #{text_model_forward.2} parent=5 // pred_check_branch
      %127 = sbr.rel (%p125) target = $region24
    $region23: #{text_model_forward.2} parent=5 // pred_region
      // Predicated region
      $region25: #{text_model_forward.2} parent=23 // pred_check
        %p128 = pneg %p29
      $region26: #{text_model_forward.2} parent=23 // pred_check_branch
        %130 = sbr.rel (%p128) target = $region28
      $region27: #{text_model_forward.2} parent=23 // pred_region
        %p131 = scmp.lt.s32.totalorder %s9, 1
        %s132 = scalar_select %p131, %s9, 1
        %s133 = smul.addr %s132, 8
        %s134 = scalar_lea.vmem %s0, %s133
      $region28: #{text_model_forward.2} parent=23 // pred_fallthru
        _
    $region24: #{text_model_forward.2} parent=5 // pred_fallthru
      _
    %p135 = scmp.le.s32.totalorder 1, %s9
    %p136 = scmp.lt.s32.totalorder %s9, 3
    %p137 = pnand %p135, %p136
    %p138 = pneg %p137
    // Predicated region
    $region29: #{text_model_forward.2} parent=5 // pred_check
      _
    $region30: #{text_model_forward.2} parent=5 // pred_check_branch
      %140 = sbr.rel (%p137) target = $region32
    $region31: #{text_model_forward.2} parent=5 // pred_region
      %s141 = ssub.s32 %s9, 1
      %p142 = scmp.lt.s32.totalorder %s14, 1
      %s143 = scalar_select %p142, %s14, 1
      %s144 = smul.addr %s143, 8
      %s145 = scalar_lea.vmem %s0, %s144
      %p146 = pneg %p35
      %p147 = pneg %p32
      %p148 = pneg %p56
      %p149 = pneg %p53
      %p150 = pneg %p77
      %p151 = pneg %p74
      %p152 = pneg %p103
      %p153 = pneg %p100
      %p154 = scmp.lt.s32.totalorder %s14, 1
      %s155 = scalar_select %p154, %s14, 1
      %s156 = smul.addr %s155, 8
      %s157 = scalar_lea.vmem %s3, %s156
      %p158 = scmp.lt.s32.totalorder %s14, 1
      %s159 = scalar_select %p158, %s14, 1
      %s160 = smul.addr %s159, 8
      %s161 = scalar_lea.vmem %s0, %s160
      %p162 = scmp.lt.s32.totalorder %s14, 1
      %s163 = scalar_select %p162, %s14, 1
      %s164 = smul.addr %s163, 8
      %s165 = scalar_lea.vmem %s3, %s164
      %v166 = vld [vmem:[%s161] sm:$0xff]
      %v167 = vld [vmem:[%s1] sm:$0x1]
      %v168 = vld [vmem:[%s2] sm:$0x1]
      %169 = vadd.xlane.f32.xlu0 %v166
      %v170 = vpop.xlane.xlu0 %169
      %v171 = vrcp.pop 128.0
      %v172 = vmul.f32 %v170, %v171
      %v173 = vsub.f32 %v166, %v172
      %v174 = vmul.f32 %v173, %v173
      %175 = vadd.xlane.f32.xlu0 %v174
      %v176 = vpop.xlane.xlu0 %175
      %v177 = vmul.f32 %v176, %v171
      %v178 = vadd.f32 %v177, 1e-12
      %v179 = vrsqrt.pop %v178
      %v180 = vmul.f32 %v173, %v179
      %v182 = vlaneseq
      %v183 = vshrl.u32 %v182, 7
      %v184 = vsub.s32 0, %v183
      %v185 = vrot.slane %v167, %v184
      %v187 = vmul.f32 %v180, %v185
      %v189 = vlaneseq
      %v190 = vshrl.u32 %v189, 7
      %v191 = vsub.s32 0, %v190
      %v192 = vrot.slane %v168, %v191
      %v194 = vadd.f32 %v187, %v192
      %195 = vst [vmem:[%s165] sm:$0xff] %v194
      %p196 = scmp.lt.s32.totalorder %s14, 1
      %s197 = scalar_select %p196, %s14, 1
      %s198 = smul.addr %s197, 8
      %s199 = scalar_lea.vmem %s3, %s198
      // Predicated region
      $region33: #{text_model_forward.2} parent=31 // pred_check
        %p200 = pneg %p100
      $region34: #{text_model_forward.2} parent=31 // pred_check_branch
        %202 = sbr.rel (%p200) target = $region36
      $region35: #{text_model_forward.2} parent=31 // pred_region
        _
      $region36: #{text_model_forward.2} parent=31 // pred_fallthru
        _
    $region32: #{text_model_forward.2} parent=5 // pred_fallthru
      _
    %p203 = scmp.le.s32.totalorder 2, %s9
    // Predicated region
    $region37: #{text_model_forward.2} parent=5 // pred_check
      %p204 = pneg %p203
    $region38: #{text_model_forward.2} parent=5 // pred_check_branch
      %206 = sbr.rel (%p204) target = $region40
    $region39: #{text_model_forward.2} parent=5 // pred_region
      %s207 = ssub.s32 %s9, 2
      // Predicated region
      $region41: #{text_model_forward.2} parent=39 // pred_check
        %p208 = pneg %p106
      $region42: #{text_model_forward.2} parent=39 // pred_check_branch
        %210 = sbr.rel (%p208) target = $region44
      $region43: #{text_model_forward.2} parent=39 // pred_region
        %p211 = scmp.lt.s32.totalorder %s15, 1
        %s212 = scalar_select %p211, %s15, 1
        %s213 = smul.addr %s212, 8
        %s214 = scalar_lea.vmem %s3, %s213
      $region44: #{text_model_forward.2} parent=39 // pred_fallthru
        _
    $region40: #{text_model_forward.2} parent=5 // pred_fallthru
      _
  $region6: #{text_model_forward.2} parent=0 // loop_footer
    %s13 = sadd.s32 1, %s9
  $region7: #{text_model_forward.2} parent=0 // loop_footer_branch
    %8 = sbr.rel target = $region3
  $region8: #{text_model_forward.2} parent=0 // loop_exit
    _

// kernel: text_model_forward.3
$region0: #{text_model_forward.3}
  #allocation0 [shape = 'u32[]', space=smem, size = 0x4, offset = 0x4, fixed_abs, tag = 'smem constant byte address 0x4 - core index']
  #allocation1 [shape = 'u32[144,128]{1,0:T(1,128)}', space=vmem, size = 0x12000, scoped, tag = 'internal scratch']
  %s0 = inlined_call_operand.vmem [shape: f32[2,8,128], index: 0, kind: input, shape index: {}]
  %s1 = inlined_call_operand.vmem [shape: f32[2,1,8], index: 1, kind: input, shape index: {}]
  %s2 = inlined_call_operand.hbm [shape: bf16[2,128,384], index: 2, kind: input, shape index: {}]
  %s3 = inlined_call_operand.vmem [shape: f32[2,1,384], index: 3, kind: input, shape index: {}]
  %s4 = inlined_call_operand.vmem [shape: bf16[2,128,128], index: 4, kind: input, shape index: {}]
  %s5 = inlined_call_operand.vmem [shape: f32[2,1,128], index: 5, kind: input, shape index: {}]
  %s6 = inlined_call_operand.vmem [shape: f32[2,1,128], index: 6, kind: input, shape index: {}]
  %s7 = inlined_call_operand.vmem [shape: f32[2,1,128], index: 7, kind: input, shape index: {}]
  %s8 = inlined_call_operand.hbm [shape: bf16[2,128,512], index: 8, kind: input, shape index: {}]
  %s9 = inlined_call_operand.vmem [shape: f32[2,1,512], index: 9, kind: input, shape index: {}]
  %s10 = inlined_call_operand.hbm [shape: bf16[2,512,128], index: 10, kind: input, shape index: {}]
  %s11 = inlined_call_operand.vmem [shape: f32[2,1,128], index: 11, kind: input, shape index: {}]
  %s12 = inlined_call_operand.vmem [shape: f32[2,1,128], index: 12, kind: input, shape index: {}]
  %s13 = inlined_call_operand.vmem [shape: f32[2,1,128], index: 13, kind: input, shape index: {}]
  %s14 = inlined_call_operand.vmem [shape: f32[2,8,128], index: 14, kind: output, shape index: {}]
  %s15 = sld [smem:[#allocation0]]
  $region105: #{text_model_forward.3} parent=0
    _
  %s17 = ssub.s32 1, %s15
  %s18 = scalar_select 0, %s17, %s15
  $region1: #{text_model_forward.3} parent=0
    #allocation2 [shape = 'u8[196608]{0}', space=vmem, size = 0x30000, scoped, tag = 'input window, operand 2']
    #allocation3 [shape = 's32[2]{0}', space=sflag, size = 0x8, scoped, tag = 'scoped memory for text_model_forward.3']
    #allocation4 [shape = 'u8[262144]{0}', space=vmem, size = 0x40000, scoped, tag = 'input window, operand 8']
    #allocation5 [shape = 's32[2]{0}', space=sflag, size = 0x8, scoped, tag = 'scoped memory for text_model_forward.3']
    #allocation6 [shape = 'u8[262144]{0}', space=vmem, size = 0x40000, scoped, tag = 'input window, operand 10']
    %19 = vsyncpa [#allocation3], 0
    %s20 = scalar_lea.sflag [#allocation3], 1
    %21 = vsyncpa %s20, 0
    %22 = vsyncpa [#allocation5], 0
    %s23 = scalar_lea.sflag [#allocation5], 1
    %24 = vsyncpa %s23, 0
    loop: start=0, step=1, limit=6
    $region2: #{text_model_forward.3} parent=1 // loop_pre_header
      _
    $region3: #{text_model_forward.3} parent=1 // loop_header
      %s26 = sphi 0, %s30
      %p27 = scmp.ge.s32.totalorder %s26, 6
      %s33 = sphi 0, %s45
      %s34 = sphi 0, %s41
      %s35 = sphi 0, %s33
      %s36 = sphi 0, %s34
      %s37 = sphi 0, %s35
      %s38 = sphi 0, %s36
      %s48 = sphi 0, %s50
      %s51 = sphi 0, %s48
      %s52 = sphi 0, %s51
      %s68 = sphi 0, %s52
      %s74 = sphi 0, %s76
      %s77 = sphi 0, %s74
      %s78 = sphi 0, %s77
      %s94 = sphi 0, %s78
      %s100 = sphi 0, %s102
      %s103 = sphi 0, %s100
      %s104 = sphi 0, %s103
      %s120 = sphi 0, %s104
      %s126 = sphi 0, %s128
      %s129 = sphi 0, %s126
      %s130 = sphi 0, %s129
      %s146 = sphi 0, %s130
      %s152 = sphi 0, %s154
      %s155 = sphi 0, %s152
      %s156 = sphi 0, %s155
      %s172 = sphi 0, %s156
      %s178 = sphi 0, %s180
      %s181 = sphi 0, %s178
      %s182 = sphi 0, %s181
      %s198 = sphi 0, %s182
      %s204 = sphi 0, %s206
      %s207 = sphi 0, %s204
      %s208 = sphi 0, %s207
      %s224 = sphi 0, %s208
      %s230 = sphi 0, %s232
      %s233 = sphi 0, %s230
      %s234 = sphi 0, %s233
      %s250 = sphi 0, %s234
      %s256 = sphi 0, %s258
      %s259 = sphi 0, %s256
      %s260 = sphi 0, %s259
      %s276 = sphi 0, %s260
      %s282 = sphi 0, %s284
      %s285 = sphi 0, %s282
      %s286 = sphi 0, %s285
      %s302 = sphi 0, %s286
      %s308 = sphi 0, %s310
      %s311 = sphi 0, %s308
      %s312 = sphi 0, %s311
      %s328 = sphi 0, %s312
      %s334 = sphi 0, %s336
      %s337 = sphi 0, %s334
      %s338 = sphi 0, %s337
      %s354 = sphi 0, %s338
      %s360 = sphi 0, %s362
      %s363 = sphi 0, %s360
      %s364 = sphi 0, %s363
      %s380 = sphi 0, %s364
      %s386 = sphi 0, %s388
      %s389 = sphi 0, %s386
      %s390 = sphi 0, %s389
      %s406 = sphi 0, %s390
      %s412 = sphi 0, %s414
      %s415 = sphi 0, %s412
      %s416 = sphi 0, %s415
      %s432 = sphi 0, %s416
    $region4: #{text_model_forward.3} parent=1 // loop_header_branch
      %29 = sbr.rel (%p27) target = $region8
    $region5: #{text_model_forward.3} parent=1 // loop_body
      %s31 = ssub.s32 %s26, 1
      %s32 = ssub.s32 %s26, 2
      %s39 = sadd.s32 1, %s34
      %p40 = scmp.ge.s32.totalorder %s39, 2
      %s41 = scalar_select %p40, 0, %s39
      %s42 = sadd.s32 1, %s33
      %s43 = scalar_select %p40, %s42, %s33
      %p44 = scmp.ge.s32.totalorder %s43, 2
      %s45 = scalar_select %p44, 0, %s43
      %s46 = ssub.s32 %s33, %s45
      %p47 = scmp.eq.s32.totalorder %s46, 0
      %s49 = sadd.s32 %s48, 1
      %s50 = scalar_select %p47, %s48, %s49
      %p53 = pneg %p47
      %p54 = scmp.eq.s32.totalorder %s26, 3
      %p55 = por %p53, %p54
      %p56 = scmp.ne.s32.totalorder %s48, %s51
      %p57 = scmp.eq.s32.totalorder %s26, 0
      %p58 = por %p56, %p57
      %p59 = scmp.ne.s32.totalorder %s48, %s51
      %p60 = scmp.eq.s32.totalorder %s31, 3
      %p61 = por %p59, %p60
      %p62 = scmp.ne.s32.totalorder %s51, %s52
      %p63 = scmp.eq.s32.totalorder %s31, 0
      %p64 = por %p62, %p63
      %p65 = scmp.ne.s32.totalorder %s51, %s52
      %p66 = scmp.eq.s32.totalorder %s32, 3
      %p67 = por %p65, %p66
      %p69 = scmp.ne.s32.totalorder %s52, %s68
      %p70 = scmp.eq.s32.totalorder %s32, 0
      %p71 = por %p69, %p70
      %s72 = ssub.s32 %s33, %s45
      %p73 = scmp.eq.s32.totalorder %s72, 0
      %s75 = sadd.s32 %s74, 1
      %s76 = scalar_select %p73, %s74, %s75
      %p79 = pneg %p73
      %p80 = scmp.eq.s32.totalorder %s26, 3
      %p81 = por %p79, %p80
      %p82 = scmp.ne.s32.totalorder %s74, %s77
      %p83 = scmp.eq.s32.totalorder %s26, 0
      %p84 = por %p82, %p83
      %p85 = scmp.ne.s32.totalorder %s74, %s77
      %p86 = scmp.eq.s32.totalorder %s31, 3
      %p87 = por %p85, %p86
      %p88 = scmp.ne.s32.totalorder %s77, %s78
      %p89 = scmp.eq.s32.totalorder %s31, 0
      %p90 = por %p88, %p89
      %p91 = scmp.ne.s32.totalorder %s77, %s78
      %p92 = scmp.eq.s32.totalorder %s32, 3
      %p93 = por %p91, %p92
      %p95 = scmp.ne.s32.totalorder %s78, %s94
      %p96 = scmp.eq.s32.totalorder %s32, 0
      %p97 = por %p95, %p96
      %s98 = ssub.s32 %s34, %s41
      %p99 = scmp.eq.s32.totalorder %s98, 0
      %s101 = sadd.s32 %s100, 1
      %s102 = scalar_select %p99, %s100, %s101
      %p105 = pneg %p99
      %p106 = scmp.eq.s32.totalorder %s26, 3
      %p107 = por %p105, %p106
      %p108 = scmp.ne.s32.totalorder %s100, %s103
      %p109 = scmp.eq.s32.totalorder %s26, 0
      %p110 = por %p108, %p109
      %p111 = scmp.ne.s32.totalorder %s100, %s103
      %p112 = scmp.eq.s32.totalorder %s31, 3
      %p113 = por %p111, %p112
      %p114 = scmp.ne.s32.totalorder %s103, %s104
      %p115 = scmp.eq.s32.totalorder %s31, 0
      %p116 = por %p114, %p115
      %p117 = scmp.ne.s32.totalorder %s103, %s104
      %p118 = scmp.eq.s32.totalorder %s32, 3
      %p119 = por %p117, %p118
      %p121 = scmp.ne.s32.totalorder %s104, %s120
      %p122 = scmp.eq.s32.totalorder %s32, 0
      %p123 = por %p121, %p122
      %s124 = ssub.s32 %s34, %s41
      %p125 = scmp.eq.s32.totalorder %s124, 0
      %s127 = sadd.s32 %s126, 1
      %s128 = scalar_select %p125, %s126, %s127
      %p131 = pneg %p125
      %p132 = scmp.eq.s32.totalorder %s26, 3
      %p133 = por %p131, %p132
      %p134 = scmp.ne.s32.totalorder %s126, %s129
      %p135 = scmp.eq.s32.totalorder %s26, 0
      %p136 = por %p134, %p135
      %p137 = scmp.ne.s32.totalorder %s126, %s129
      %p138 = scmp.eq.s32.totalorder %s31, 3
      %p139 = por %p137, %p138
      %p140 = scmp.ne.s32.totalorder %s129, %s130
      %p141 = scmp.eq.s32.totalorder %s31, 0
      %p142 = por %p140, %p141
      %p143 = scmp.ne.s32.totalorder %s129, %s130
      %p144 = scmp.eq.s32.totalorder %s32, 3
      %p145 = por %p143, %p144
      %p147 = scmp.ne.s32.totalorder %s130, %s146
      %p148 = scmp.eq.s32.totalorder %s32, 0
      %p149 = por %p147, %p148
      %s150 = ssub.s32 %s34, %s41
      %p151 = scmp.eq.s32.totalorder %s150, 0
      %s153 = sadd.s32 %s152, 1
      %s154 = scalar_select %p151, %s152, %s153
      %p157 = pneg %p151
      %p158 = scmp.eq.s32.totalorder %s26, 3
      %p159 = por %p157, %p158
      %p160 = scmp.ne.s32.totalorder %s152, %s155
      %p161 = scmp.eq.s32.totalorder %s26, 0
      %p162 = por %p160, %p161
      %p163 = scmp.ne.s32.totalorder %s152, %s155
      %p164 = scmp.eq.s32.totalorder %s31, 3
      %p165 = por %p163, %p164
      %p166 = scmp.ne.s32.totalorder %s155, %s156
      %p167 = scmp.eq.s32.totalorder %s31, 0
      %p168 = por %p166, %p167
      %p169 = scmp.ne.s32.totalorder %s155, %s156
      %p170 = scmp.eq.s32.totalorder %s32, 3
      %p171 = por %p169, %p170
      %p173 = scmp.ne.s32.totalorder %s156, %s172
      %p174 = scmp.eq.s32.totalorder %s32, 0
      %p175 = por %p173, %p174
      %s176 = ssub.s32 %s34, %s41
      %p177 = scmp.eq.s32.totalorder %s176, 0
      %s179 = sadd.s32 %s178, 1
      %s180 = scalar_select %p177, %s178, %s179
      %p183 = pneg %p177
      %p184 = scmp.eq.s32.totalorder %s26, 3
      %p185 = por %p183, %p184
      %p186 = scmp.ne.s32.totalorder %s178, %s181
      %p187 = scmp.eq.s32.totalorder %s26, 0
      %p188 = por %p186, %p187
      %p189 = scmp.ne.s32.totalorder %s178, %s181
      %p190 = scmp.eq.s32.totalorder %s31, 3
      %p191 = por %p189, %p190
      %p192 = scmp.ne.s32.totalorder %s181, %s182
      %p193 = scmp.eq.s32.totalorder %s31, 0
      %p194 = por %p192, %p193
      %p195 = scmp.ne.s32.totalorder %s181, %s182
      %p196 = scmp.eq.s32.totalorder %s32, 3
      %p197 = por %p195, %p196
      %p199 = scmp.ne.s32.totalorder %s182, %s198
      %p200 = scmp.eq.s32.totalorder %s32, 0
      %p201 = por %p199, %p200
      %s202 = ssub.s32 %s34, %s41
      %p203 = scmp.eq.s32.totalorder %s202, 0
      %s205 = sadd.s32 %s204, 1
      %s206 = scalar_select %p203, %s204, %s205
      %p209 = pneg %p203
      %p210 = scmp.eq.s32.totalorder %s26, 3
      %p211 = por %p209, %p210
      %p212 = scmp.ne.s32.totalorder %s204, %s207
      %p213 = scmp.eq.s32.totalorder %s26, 0
      %p214 = por %p212, %p213
      %p215 = scmp.ne.s32.totalorder %s204, %s207
      %p216 = scmp.eq.s32.totalorder %s31, 3
      %p217 = por %p215, %p216
      %p218 = scmp.ne.s32.totalorder %s207, %s208
      %p219 = scmp.eq.s32.totalorder %s31, 0
      %p220 = por %p218, %p219
      %p221 = scmp.ne.s32.totalorder %s207, %s208
      %p222 = scmp.eq.s32.totalorder %s32, 3
      %p223 = por %p221, %p222
      %p225 = scmp.ne.s32.totalorder %s208, %s224
      %p226 = scmp.eq.s32.totalorder %s32, 0
      %p227 = por %p225, %p226
      %s228 = ssub.s32 %s34, %s41
      %p229 = scmp.eq.s32.totalorder %s228, 0
      %s231 = sadd.s32 %s230, 1
      %s232 = scalar_select %p229, %s230, %s231
      %p235 = pneg %p229
      %p236 = scmp.eq.s32.totalorder %s26, 3
      %p237 = por %p235, %p236
      %p238 = scmp.ne.s32.totalorder %s230, %s233
      %p239 = scmp.eq.s32.totalorder %s26, 0
      %p240 = por %p238, %p239
      %p241 = scmp.ne.s32.totalorder %s230, %s233
      %p242 = scmp.eq.s32.totalorder %s31, 3
      %p243 = por %p241, %p242
      %p244 = scmp.ne.s32.totalorder %s233, %s234
      %p245 = scmp.eq.s32.totalorder %s31, 0
      %p246 = por %p244, %p245
      %p247 = scmp.ne.s32.totalorder %s233, %s234
      %p248 = scmp.eq.s32.totalorder %s32, 3
      %p249 = por %p247, %p248
      %p251 = scmp.ne.s32.totalorder %s234, %s250
      %p252 = scmp.eq.s32.totalorder %s32, 0
      %p253 = por %p251, %p252
      %s254 = ssub.s32 %s34, %s41
      %p255 = scmp.eq.s32.totalorder %s254, 0
      %s257 = sadd.s32 %s256, 1
      %s258 = scalar_select %p255, %s256, %s257
      %p261 = pneg %p255
      %p262 = scmp.eq.s32.totalorder %s26, 3
      %p263 = por %p261, %p262
      %p264 = scmp.ne.s32.totalorder %s256, %s259
      %p265 = scmp.eq.s32.totalorder %s26, 0
      %p266 = por %p264, %p265
      %p267 = scmp.ne.s32.totalorder %s256, %s259
      %p268 = scmp.eq.s32.totalorder %s31, 3
      %p269 = por %p267, %p268
      %p270 = scmp.ne.s32.totalorder %s259, %s260
      %p271 = scmp.eq.s32.totalorder %s31, 0
      %p272 = por %p270, %p271
      %p273 = scmp.ne.s32.totalorder %s259, %s260
      %p274 = scmp.eq.s32.totalorder %s32, 3
      %p275 = por %p273, %p274
      %p277 = scmp.ne.s32.totalorder %s260, %s276
      %p278 = scmp.eq.s32.totalorder %s32, 0
      %p279 = por %p277, %p278
      %s280 = ssub.s32 %s34, %s41
      %p281 = scmp.eq.s32.totalorder %s280, 0
      %s283 = sadd.s32 %s282, 1
      %s284 = scalar_select %p281, %s282, %s283
      %p287 = pneg %p281
      %p288 = scmp.eq.s32.totalorder %s26, 3
      %p289 = por %p287, %p288
      %p290 = scmp.ne.s32.totalorder %s282, %s285
      %p291 = scmp.eq.s32.totalorder %s26, 0
      %p292 = por %p290, %p291
      %p293 = scmp.ne.s32.totalorder %s282, %s285
      %p294 = scmp.eq.s32.totalorder %s31, 3
      %p295 = por %p293, %p294
      %p296 = scmp.ne.s32.totalorder %s285, %s286
      %p297 = scmp.eq.s32.totalorder %s31, 0
      %p298 = por %p296, %p297
      %p299 = scmp.ne.s32.totalorder %s285, %s286
      %p300 = scmp.eq.s32.totalorder %s32, 3
      %p301 = por %p299, %p300
      %p303 = scmp.ne.s32.totalorder %s286, %s302
      %p304 = scmp.eq.s32.totalorder %s32, 0
      %p305 = por %p303, %p304
      %s306 = ssub.s32 %s34, %s41
      %p307 = scmp.eq.s32.totalorder %s306, 0
      %s309 = sadd.s32 %s308, 1
      %s310 = scalar_select %p307, %s308, %s309
      %p313 = pneg %p307
      %p314 = scmp.eq.s32.totalorder %s26, 3
      %p315 = por %p313, %p314
      %p316 = scmp.ne.s32.totalorder %s308, %s311
      %p317 = scmp.eq.s32.totalorder %s26, 0
      %p318 = por %p316, %p317
      %p319 = scmp.ne.s32.totalorder %s308, %s311
      %p320 = scmp.eq.s32.totalorder %s31, 3
      %p321 = por %p319, %p320
      %p322 = scmp.ne.s32.totalorder %s311, %s312
      %p323 = scmp.eq.s32.totalorder %s31, 0
      %p324 = por %p322, %p323
      %p325 = scmp.ne.s32.totalorder %s311, %s312
      %p326 = scmp.eq.s32.totalorder %s32, 3
      %p327 = por %p325, %p326
      %p329 = scmp.ne.s32.totalorder %s312, %s328
      %p330 = scmp.eq.s32.totalorder %s32, 0
      %p331 = por %p329, %p330
      %s332 = ssub.s32 %s34, %s41
      %p333 = scmp.eq.s32.totalorder %s332, 0
      %s335 = sadd.s32 %s334, 1
      %s336 = scalar_select %p333, %s334, %s335
      %p339 = pneg %p333
      %p340 = scmp.eq.s32.totalorder %s26, 3
      %p341 = por %p339, %p340
      %p342 = scmp.ne.s32.totalorder %s334, %s337
      %p343 = scmp.eq.s32.totalorder %s26, 0
      %p344 = por %p342, %p343
      %p345 = scmp.ne.s32.totalorder %s334, %s337
      %p346 = scmp.eq.s32.totalorder %s31, 3
      %p347 = por %p345, %p346
      %p348 = scmp.ne.s32.totalorder %s337, %s338
      %p349 = scmp.eq.s32.totalorder %s31, 0
      %p350 = por %p348, %p349
      %p351 = scmp.ne.s32.totalorder %s337, %s338
      %p352 = scmp.eq.s32.totalorder %s32, 3
      %p353 = por %p351, %p352
      %p355 = scmp.ne.s32.totalorder %s338, %s354
      %p356 = scmp.eq.s32.totalorder %s32, 0
      %p357 = por %p355, %p356
      %s358 = ssub.s32 %s34, %s41
      %p359 = scmp.eq.s32.totalorder %s358, 0
      %s361 = sadd.s32 %s360, 1
      %s362 = scalar_select %p359, %s360, %s361
      %p365 = pneg %p359
      %p366 = scmp.eq.s32.totalorder %s26, 3
      %p367 = por %p365, %p366
      %p368 = scmp.ne.s32.totalorder %s360, %s363
      %p369 = scmp.eq.s32.totalorder %s26, 0
      %p370 = por %p368, %p369
      %p371 = scmp.ne.s32.totalorder %s360, %s363
      %p372 = scmp.eq.s32.totalorder %s31, 3
      %p373 = por %p371, %p372
      %p374 = scmp.ne.s32.totalorder %s363, %s364
      %p375 = scmp.eq.s32.totalorder %s31, 0
      %p376 = por %p374, %p375
      %p377 = scmp.ne.s32.totalorder %s363, %s364
      %p378 = scmp.eq.s32.totalorder %s32, 3
      %p379 = por %p377, %p378
      %p381 = scmp.ne.s32.totalorder %s364, %s380
      %p382 = scmp.eq.s32.totalorder %s32, 0
      %p383 = por %p381, %p382
      %s384 = ssub.s32 %s34, %s41
      %p385 = scmp.eq.s32.totalorder %s384, 0
      %s387 = sadd.s32 %s386, 1
      %s388 = scalar_select %p385, %s386, %s387
      %p391 = pneg %p385
      %p392 = scmp.eq.s32.totalorder %s26, 3
      %p393 = por %p391, %p392
      %p394 = scmp.ne.s32.totalorder %s386, %s389
      %p395 = scmp.eq.s32.totalorder %s26, 0
      %p396 = por %p394, %p395
      %p397 = scmp.ne.s32.totalorder %s386, %s389
      %p398 = scmp.eq.s32.totalorder %s31, 3
      %p399 = por %p397, %p398
      %p400 = scmp.ne.s32.totalorder %s389, %s390
      %p401 = scmp.eq.s32.totalorder %s31, 0
      %p402 = por %p400, %p401
      %p403 = scmp.ne.s32.totalorder %s389, %s390
      %p404 = scmp.eq.s32.totalorder %s32, 3
      %p405 = por %p403, %p404
      %p407 = scmp.ne.s32.totalorder %s390, %s406
      %p408 = scmp.eq.s32.totalorder %s32, 0
      %p409 = por %p407, %p408
      %s410 = ssub.s32 %s33, %s45
      %p411 = scmp.eq.s32.totalorder %s410, 0
      %s413 = sadd.s32 %s412, 1
      %s414 = scalar_select %p411, %s412, %s413
      %p417 = pneg %p411
      %p418 = scmp.eq.s32.totalorder %s26, 3
      %p419 = por %p417, %p418
      %p420 = scmp.ne.s32.totalorder %s412, %s415
      %p421 = scmp.eq.s32.totalorder %s26, 0
      %p422 = por %p420, %p421
      %p423 = scmp.ne.s32.totalorder %s412, %s415
      %p424 = scmp.eq.s32.totalorder %s31, 3
      %p425 = por %p423, %p424
      %p426 = scmp.ne.s32.totalorder %s415, %s416
      %p427 = scmp.eq.s32.totalorder %s31, 0
      %p428 = por %p426, %p427
      %p429 = scmp.ne.s32.totalorder %s415, %s416
      %p430 = scmp.eq.s32.totalorder %s32, 3
      %p431 = por %p429, %p430
      %p433 = scmp.ne.s32.totalorder %s416, %s432
      %p434 = scmp.eq.s32.totalorder %s32, 0
      %p435 = por %p433, %p434
      %p436 = scmp.le.s32.totalorder 1, %s26
      %p437 = scmp.lt.s32.totalorder %s26, 5
      %p438 = pnand %p436, %p437
      %p439 = pneg %p438
      // Predicated region
      $region9: #{text_model_forward.3} parent=5 // pred_check
        _
      $region10: #{text_model_forward.3} parent=5 // pred_check_branch
        %441 = sbr.rel (%p438) target = $region12
      $region11: #{text_model_forward.3} parent=5 // pred_region
        %s442 = ssub.s32 %s26, 1
      $region12: #{text_model_forward.3} parent=5 // pred_fallthru
        _
      %p443 = scmp.lt.s32.totalorder %s26, 4
      // Predicated region
      $region13: #{text_model_forward.3} parent=5 // pred_check
        %p444 = pneg %p443
      $region14: #{text_model_forward.3} parent=5 // pred_check_branch
        %446 = sbr.rel (%p444) target = $region16
      $region15: #{text_model_forward.3} parent=5 // pred_region
        // Predicated region
        $region17: #{text_model_forward.3} parent=15 // pred_check
          %p447 = pneg %p58
        $region18: #{text_model_forward.3} parent=15 // pred_check_branch
          %449 = sbr.rel (%p447) target = $region20
        $region19: #{text_model_forward.3} parent=15 // pred_region
          %p450 = scmp.lt.s32.totalorder %s33, 1
          %s451 = scalar_select %p450, %s33, 1
          %s452 = smul.addr %s451, 8
          %s453 = scalar_lea.vmem %s0, %s452
        $region20: #{text_model_forward.3} parent=15 // pred_fallthru
          _
        // Predicated region
        $region21: #{text_model_forward.3} parent=15 // pred_check
          %p454 = pneg %p84
        $region22: #{text_model_forward.3} parent=15 // pred_check_branch
          %456 = sbr.rel (%p454) target = $region24
        $region23: #{text_model_forward.3} parent=15 // pred_region
          %p457 = scmp.lt.s32.totalorder %s33, 1
          %s458 = scalar_select %p457, %s33, 1
          %s459 = scalar_lea.vmem %s1, %s458
        $region24: #{text_model_forward.3} parent=15 // pred_fallthru
          _
        // Predicated region
        $region25: #{text_model_forward.3} parent=15 // pred_check
          %p460 = pneg %p110
        $region26: #{text_model_forward.3} parent=15 // pred_check_branch
          %462 = sbr.rel (%p460) target = $region28
        $region27: #{text_model_forward.3} parent=15 // pred_region
          %s463 = sand.u32 %s100, 1
          %s464 = scalar_lea.sflag [#allocation3], %s463
          %s465 = sand.u32 %s100, 1
          %s466 = smul.addr %s465, 192
          %s467 = scalar_lea.vmem [#allocation2], %s466
          %s469 = ssub.s32 3072, 3072
          %470 = vsyncadd %s464, %s469
          %s471 = smul.addr %s34, 48
          %s472 = smul.addr %s471, 64
          %s473 = scalar_lea.hbm %s2, %s472
          %s474 = sshll.u32 %s467, 4
          %s475 = int_to_ptr.vmem [resolvable:$true] %s474
          %480 = dma.hbm_to_vmem [thread:$0]  %s473, 3072, %s475, %s464, 192, 192, 12
        $region28: #{text_model_forward.3} parent=15 // pred_fallthru
          _
        // Predicated region
        $region29: #{text_model_forward.3} parent=15 // pred_check
          %p481 = pneg %p136
        $region30: #{text_model_forward.3} parent=15 // pred_check_branch
          %483 = sbr.rel (%p481) target = $region32
        $region31: #{text_model_forward.3} parent=15 // pred_region
          %p484 = scmp.lt.s32.totalorder %s34, 1
          %s485 = scalar_select %p484, %s34, 1
          %s486 = smul.addr %s485, 3
          %s487 = scalar_lea.vmem %s3, %s486
        $region32: #{text_model_forward.3} parent=15 // pred_fallthru
          _
        // Predicated region
        $region33: #{text_model_forward.3} parent=15 // pred_check
          %p488 = pneg %p162
        $region34: #{text_model_forward.3} parent=15 // pred_check_branch
          %490 = sbr.rel (%p488) target = $region36
        $region35: #{text_model_forward.3} parent=15 // pred_region
          %p491 = scmp.lt.s32.totalorder %s34, 1
          %s492 = scalar_select %p491, %s34, 1
          %s493 = smul.addr %s492, 16
          %s494 = smul.addr %s493, 4
          %s495 = scalar_lea.vmem %s4, %s494
        $region36: #{text_model_forward.3} parent=15 // pred_fallthru
          _
        // Predicated region
        $region37: #{text_model_forward.3} parent=15 // pred_check
          %p496 = pneg %p188
        $region38: #{text_model_forward.3} parent=15 // pred_check_branch
          %498 = sbr.rel (%p496) target = $region40
        $region39: #{text_model_forward.3} parent=15 // pred_region
          %p499 = scmp.lt.s32.totalorder %s34, 1
          %s500 = scalar_select %p499, %s34, 1
          %s501 = scalar_lea.vmem %s5, %s500
        $region40: #{text_model_forward.3} parent=15 // pred_fallthru
          _
        // Predicated region
        $region41: #{text_model_forward.3} parent=15 // pred_check
          %p502 = pneg %p214
        $region42: #{text_model_forward.3} parent=15 // pred_check_branch
          %504 = sbr.rel (%p502) target = $region44
        $region43: #{text_model_forward.3} parent=15 // pred_region
          %p505 = scmp.lt.s32.totalorder %s34, 1
          %s506 = scalar_select %p505, %s34, 1
          %s507 = scalar_lea.vmem %s6, %s506
        $region44: #{text_model_forward.3} parent=15 // pred_fallthru
          _
        // Predicated region
        $region45: #{text_model_forward.3} parent=15 // pred_check
          %p508 = pneg %p240
        $region46: #{text_model_forward.3} parent=15 // pred_check_branch
          %510 = sbr.rel (%p508) target = $region48
        $region47: #{text_model_forward.3} parent=15 // pred_region
          %p511 = scmp.lt.s32.totalorder %s34, 1
          %s512 = scalar_select %p511, %s34, 1
          %s513 = scalar_lea.vmem %s7, %s512
        $region48: #{text_model_forward.3} parent=15 // pred_fallthru
          _
        // Predicated region
        $region49: #{text_model_forward.3} parent=15 // pred_check
          %p514 = pneg %p266
        $region50: #{text_model_forward.3} parent=15 // pred_check_branch
          %516 = sbr.rel (%p514) target = $region52
        $region51: #{text_model_forward.3} parent=15 // pred_region
          %s517 = sand.u32 %s26, 1
          %s518 = scalar_lea.sflag [#allocation5], %s517
          %s519 = sand.u32 %s256, 1
          %s520 = smul.addr %s519, 256
          %s521 = scalar_lea.vmem [#allocation4], %s520
          %s523 = ssub.s32 4096, 4096
          %524 = vsyncadd %s518, %s523
          %s525 = smul.addr %s34, 64
          %s526 = smul.addr %s525, 64
          %s527 = scalar_lea.hbm %s8, %s526
          %s528 = sshll.u32 %s521, 4
          %s529 = int_to_ptr.vmem [resolvable:$true] %s528
          %534 = dma.hbm_to_vmem [thread:$0]  %s527, 4096, %s529, %s518, 256, 256, 16
        $region52: #{text_model_forward.3} parent=15 // pred_fallthru
          _
        // Predicated region
        $region53: #{text_model_forward.3} parent=15 // pred_check
          %p535 = pneg %p292
        $region54: #{text_model_forward.3} parent=15 // pred_check_branch
          %537 = sbr.rel (%p535) target = $region56
        $region55: #{text_model_forward.3} parent=15 // pred_region
          %p538 = scmp.lt.s32.totalorder %s34, 1
          %s539 = scalar_select %p538, %s34, 1
          %s540 = smul.addr %s539, 4
          %s541 = scalar_lea.vmem %s9, %s540
        $region56: #{text_model_forward.3} parent=15 // pred_fallthru
          _
        // Predicated region
        $region57: #{text_model_forward.3} parent=15 // pred_check
          %p542 = pneg %p318
        $region58: #{text_model_forward.3} parent=15 // pred_check_branch
          %544 = sbr.rel (%p542) target = $region60
        $region59: #{text_model_forward.3} parent=15 // pred_region
          %s545 = sand.u32 %s26, 1
          %s546 = scalar_lea.sflag [#allocation5], %s545
          %s547 = sand.u32 %s308, 1
          %s548 = smul.addr %s547, 256
          %s549 = scalar_lea.vmem [#allocation6], %s548
          %s551 = ssub.s32 4096, 4096
          %552 = vsyncadd %s546, %s551
          %s553 = smul.addr %s34, 64
          %s554 = smul.addr %s553, 64
          %s555 = scalar_lea.hbm %s10, %s554
          %s556 = sshll.u32 %s549, 4
          %s557 = int_to_ptr.vmem [resolvable:$true] %s556
          %562 = dma.hbm_to_vmem [thread:$0]  %s555, 4096, %s557, %s546, 64, 64, 4
        $region60: #{text_model_forward.3} parent=15 // pred_fallthru
          _
        // Predicated region
        $region61: #{text_model_forward.3} parent=15 // pred_check
          %p563 = pneg %p344
        $region62: #{text_model_forward.3} parent=15 // pred_check_branch
          %565 = sbr.rel (%p563) target = $region64
        $region63: #{text_model_forward.3} parent=15 // pred_region
          %p566 = scmp.lt.s32.totalorder %s34, 1
          %s567 = scalar_select %p566, %s34, 1
          %s568 = scalar_lea.vmem %s11, %s567
        $region64: #{text_model_forward.3} parent=15 // pred_fallthru
          _
        // Predicated region
        $region65: #{text_model_forward.3} parent=15 // pred_check
          %p569 = pneg %p370
        $region66: #{text_model_forward.3} parent=15 // pred_check_branch
          %571 = sbr.rel (%p569) target = $region68
        $region67: #{text_model_forward.3} parent=15 // pred_region
          %p572 = scmp.lt.s32.totalorder %s34, 1
          %s573 = scalar_select %p572, %s34, 1
          %s574 = scalar_lea.vmem %s12, %s573
        $region68: #{text_model_forward.3} parent=15 // pred_fallthru
          _
        // Predicated region
        $region69: #{text_model_forward.3} parent=15 // pred_check
          %p575 = pneg %p396
        $region70: #{text_model_forward.3} parent=15 // pred_check_branch
          %577 = sbr.rel (%p575) target = $region72
        $region71: #{text_model_forward.3} parent=15 // pred_region
          %p578 = scmp.lt.s32.totalorder %s34, 1
          %s579 = scalar_select %p578, %s34, 1
          %s580 = scalar_lea.vmem %s13, %s579
        $region72: #{text_model_forward.3} parent=15 // pred_fallthru
          _
      $region16: #{text_model_forward.3} parent=5 // pred_fallthru
        _
      %p581 = scmp.le.s32.totalorder 1, %s26
      %p582 = scmp.lt.s32.totalorder %s26, 5
      %p583 = pnand %p581, %p582
      %p584 = pneg %p583
      // Predicated region
      $region73: #{text_model_forward.3} parent=5 // pred_check
        _
      $region74: #{text_model_forward.3} parent=5 // pred_check_branch
        %586 = sbr.rel (%p583) target = $region76
      $region75: #{text_model_forward.3} parent=5 // pred_region
        %s587 = ssub.s32 %s26, 1
        %s588 = sand.u32 %s103, 1
        %s589 = scalar_lea.sflag [#allocation3], %s588
        %s590 = sand.u32 %s103, 1
        %s591 = smul.addr %s590, 192
        %s592 = scalar_lea.vmem [#allocation2], %s591
        // Predicated region
        $region77: #{text_model_forward.3} parent=75 // pred_check
          %p593 = pneg %p116
        $region78: #{text_model_forward.3} parent=75 // pred_check_branch
          %595 = sbr.rel (%p593) target = $region80
        $region79: #{text_model_forward.3} parent=75 // pred_region
          %596 = dma.done %s589, 3072
        $region80: #{text_model_forward.3} parent=75 // pred_fallthru
          _
        %s597 = sand.u32 %s31, 1
        %s598 = scalar_lea.sflag [#allocation5], %s597
        %s599 = sand.u32 %s259, 1
        %s600 = smul.addr %s599, 256
        %s601 = scalar_lea.vmem [#allocation4], %s600
        // Predicated region
        $region81: #{text_model_forward.3} parent=75 // pred_check
          %p602 = pneg %p272
        $region82: #{text_model_forward.3} parent=75 // pred_check_branch
          %604 = sbr.rel (%p602) target = $region84
        $region83: #{text_model_forward.3} parent=75 // pred_region
          %605 = dma.done %s598, 4096
        $region84: #{text_model_forward.3} parent=75 // pred_fallthru
          _
        %s606 = sand.u32 %s31, 1
        %s607 = scalar_lea.sflag [#allocation5], %s606
        %s608 = sand.u32 %s311, 1
        %s609 = smul.addr %s608, 256
        %s610 = scalar_lea.vmem [#allocation6], %s609
        // Predicated region
        $region85: #{text_model_forward.3} parent=75 // pred_check
          %p611 = pneg %p324
        $region86: #{text_model_forward.3} parent=75 // pred_check_branch
          %613 = sbr.rel (%p611) target = $region88
        $region87: #{text_model_forward.3} parent=75 // pred_region
          %614 = dma.done %s607, 4096
        $region88: #{text_model_forward.3} parent=75 // pred_fallthru
          _
        %p615 = scmp.lt.s32.totalorder %s35, 1
        %s616 = scalar_select %p615, %s35, 1
        %s617 = smul.addr %s616, 8
        %s618 = scalar_lea.vmem %s0, %s617
        %p619 = pneg %p64
        %p620 = pneg %p61
        %p621 = scmp.lt.s32.totalorder %s35, 1
        %s622 = scalar_select %p621, %s35, 1
        %s623 = scalar_lea.vmem %s1, %s622
        %p624 = pneg %p90
        %p625 = pneg %p87
        %s626 = sand.u32 %s103, 1
        %s627 = scalar_lea.sflag [#allocation3], %s626
        %s628 = sand.u32 %s103, 1
        %s629 = smul.addr %s628, 192
        %s630 = scalar_lea.vmem [#allocation2], %s629
        %p631 = pneg %p116
        %p632 = pneg %p113
        %p633 = scmp.lt.s32.totalorder %s36, 1
        %s634 = scalar_select %p633, %s36, 1
        %s635 = smul.addr %s634, 3
        %s636 = scalar_lea.vmem %s3, %s635
        %p637 = pneg %p142
        %p638 = pneg %p139
        %p639 = scmp.lt.s32.totalorder %s36, 1
        %s640 = scalar_select %p639, %s36, 1
        %s641 = smul.addr %s640, 16
        %s642 = smul.addr %s641, 4
        %s643 = scalar_lea.vmem %s4, %s642
        %p644 = pneg %p168
        %p645 = pneg %p165
        %p646 = scmp.lt.s32.totalorder %s36, 1
        %s647 = scalar_select %p646, %s36, 1
        %s648 = scalar_lea.vmem %s5, %s647
        %p649 = pneg %p194
        %p650 = pneg %p191
        %p651 = scmp.lt.s32.totalorder %s36, 1
        %s652 = scalar_select %p651, %s36, 1
        %s653 = scalar_lea.vmem %s6, %s652
        %p654 = pneg %p220
        %p655 = pneg %p217
        %p656 = scmp.lt.s32.totalorder %s36, 1
        %s657 = scalar_select %p656, %s36, 1
        %s658 = scalar_lea.vmem %s7, %s657
        %p659 = pneg %p246
        %p660 = pneg %p243
        %s661 = sand.u32 %s31, 1
        %s662 = scalar_lea.sflag [#allocation5], %s661
        %s663 = sand.u32 %s259, 1
        %s664 = smul.addr %s663, 256
        %s665 = scalar_lea.vmem [#allocation4], %s664
        %p666 = pneg %p272
        %p667 = pneg %p269
        %p668 = scmp.lt.s32.totalorder %s36, 1
        %s669 = scalar_select %p668, %s36, 1
        %s670 = smul.addr %s669, 4
        %s671 = scalar_lea.vmem %s9, %s670
        %p672 = pneg %p298
        %p673 = pneg %p295
        %s674 = sand.u32 %s31, 1
        %s675 = scalar_lea.sflag [#allocation5], %s674
        %s676 = sand.u32 %s311, 1
        %s677 = smul.addr %s676, 256
        %s678 = scalar_lea.vmem [#allocation6], %s677
        %p679 = pneg %p324
        %p680 = pneg %p321
        %p681 = scmp.lt.s32.totalorder %s36, 1
        %s682 = scalar_select %p681, %s36, 1
        %s683 = scalar_lea.vmem %s11, %s682
        %p684 = pneg %p350
        %p685 = pneg %p347
        %p686 = scmp.lt.s32.totalorder %s36, 1
        %s687 = scalar_select %p686, %s36, 1
        %s688 = scalar_lea.vmem %s12, %s687
        %p689 = pneg %p376
        %p690 = pneg %p373
        %p691 = scmp.lt.s32.totalorder %s36, 1
        %s692 = scalar_select %p691, %s36, 1
        %s693 = scalar_lea.vmem %s13, %s692
        %p694 = pneg %p402
        %p695 = pneg %p399
        %p696 = pneg %p428
        %p697 = pneg %p425
        %p698 = scmp.lt.s32.totalorder %s35, 1
        %s699 = scalar_select %p698, %s35, 1
        %s700 = smul.addr %s699, 8
        %s701 = scalar_lea.vmem %s14, %s700
        %p702 = scmp.lt.s32.totalorder %s35, 1
        %s703 = scalar_select %p702, %s35, 1
        %s704 = smul.addr %s703, 8
        %s705 = scalar_lea.vmem %s0, %s704
        %p706 = scmp.lt.s32.totalorder %s35, 1
        %s707 = scalar_select %p706, %s35, 1
        %s708 = scalar_lea.vmem %s1, %s707
        %p709 = scmp.lt.s32.totalorder %s36, 1
        %s710 = scalar_select %p709, %s36, 1
        %s711 = smul.addr %s710, 3
        %s712 = scalar_lea.vmem %s3, %s711
        %p713 = scmp.lt.s32.totalorder %s36, 1
        %s714 = scalar_select %p713, %s36, 1
        %s715 = smul.addr %s714, 16
        %s716 = smul.addr %s715, 4
        %s717 = scalar_lea.vmem %s4, %s716
        %p718 = scmp.lt.s32.totalorder %s36, 1
        %s719 = scalar_select %p718, %s36, 1
        %s720 = scalar_lea.vmem %s5, %s719
        %p721 = scmp.lt.s32.totalorder %s36, 1
        %s722 = scalar_select %p721, %s36, 1
        %s723 = scalar_lea.vmem %s6, %s722
        %p724 = scmp.lt.s32.totalorder %s36, 1
        %s725 = scalar_select %p724, %s36, 1
        %s726 = scalar_lea.vmem %s7, %s725
        %p727 = scmp.lt.s32.totalorder %s36, 1
        %s728 = scalar_select %p727, %s36, 1
        %s729 = smul.addr %s728, 4
        %s730 = scalar_lea.vmem %s9, %s729
        %p731 = scmp.lt.s32.totalorder %s36, 1
        %s732 = scalar_select %p731, %s36, 1
        %s733 = scalar_lea.vmem %s11, %s732
        %p734 = scmp.lt.s32.totalorder %s36, 1
        %s735 = scalar_select %p734, %s36, 1
        %s736 = scalar_lea.vmem %s12, %s735
        %p737 = scmp.lt.s32.totalorder %s36, 1
        %s738 = scalar_select %p737, %s36, 1
        %s739 = scalar_lea.vmem %s13, %s738
        %p740 = scmp.lt.s32.totalorder %s35, 1
        %s741 = scalar_select %p740, %s35, 1
        %s742 = smul.addr %s741, 8
        %s743 = scalar_lea.vmem %s14, %s742
        %p745 = scmp.eq.s32.totalorder %s36, 0
        // Predicated region
        $region89: #{text_model_forward.3} parent=75 // pred_check
          %p746 = pneg %p745
        $region90: #{text_model_forward.3} parent=75 // pred_check_branch
          %748 = sbr.rel (%p746) target = $region92
        $region91: #{text_model_forward.3} parent=75 // pred_region
          %v749 = vld [vmem:[%s705] sm:$0xff]
          %750 = vst [vmem:[%s743] sm:$0xff] %v749
        $region92: #{text_model_forward.3} parent=75 // pred_fallthru
          _
        %v751 = vld [vmem:[%s743] sm:$0xff]
        %v752 = vld [vmem:[%s708] sm:$0x1]
        %v753 = vpack.c.bf16 %v751, %v751
        %v754 = vld [vmem:[%s592] sm:$0xff]
        %v755 = vld [vmem:[%s592 + $0x8] sm:$0xf]
        %v756 = vld [vmem:[%s592 + $0xc] sm:$0xff]
        %v757 = vld [vmem:[%s592 + $0x14] sm:$0xf]
        %v758 = vld [vmem:[%s592 + $0x18] sm:$0xff]
        %v759 = vld [vmem:[%s592 + $0x20] sm:$0xf]
        %v760 = vld [vmem:[%s592 + $0x24] sm:$0xff]
        %v761 = vld [vmem:[%s592 + $0x2c] sm:$0xf]
        %v762 = vld [vmem:[%s592 + $0x30] sm:$0xff]
        %v763 = vld [vmem:[%s592 + $0x38] sm:$0xf]
        %v764 = vld [vmem:[%s592 + $0x3c] sm:$0xff]
        %v765 = vld [vmem:[%s592 + $0x44] sm:$0xf]
        %v766 = vld [vmem:[%s592 + $0x48] sm:$0xff]
        %v767 = vld [vmem:[%s592 + $0x50] sm:$0xf]
        %v768 = vld [vmem:[%s592 + $0x54] sm:$0xff]
        %v769 = vld [vmem:[%s592 + $0x5c] sm:$0xf]
        %v770 = vld [vmem:[%s592 + $0x60] sm:$0xff]
        %v771 = vld [vmem:[%s592 + $0x68] sm:$0xf]
        %v772 = vld [vmem:[%s592 + $0x6c] sm:$0xff]
        %v773 = vld [vmem:[%s592 + $0x74] sm:$0xf]
        %v774 = vld [vmem:[%s592 + $0x78] sm:$0xff]
        %v775 = vld [vmem:[%s592 + $0x80] sm:$0xf]
        %v776 = vld [vmem:[%s592 + $0x84] sm:$0xff]
        %v777 = vld [vmem:[%s592 + $0x8c] sm:$0xf]
        %v778 = vld [vmem:[%s592 + $0x90] sm:$0xff]
        %v779 = vld [vmem:[%s592 + $0x98] sm:$0xf]
        %v780 = vld [vmem:[%s592 + $0x9c] sm:$0xff]
        %v781 = vld [vmem:[%s592 + $0xa4] sm:$0xf]
        %v782 = vld [vmem:[%s592 + $0xa8] sm:$0xff]
        %v783 = vld [vmem:[%s592 + $0xb0] sm:$0xf]
        %v784 = vld [vmem:[%s592 + $0xb4] sm:$0xff]
        %v785 = vld [vmem:[%s592 + $0xbc] sm:$0xf]
        %v786 = vld [vmem:[%s712] sm:$0x7]
        %v788 = vlaneseq
        %v789 = vshrl.u32 %v788, 7
        %v790 = vsub.s32 0, %v789
        %v791 = vrot.slane %v786, %v790
        %v792 = vlaneseq
        %v793 = vshrl.u32 %v792, 7
        %v794 = vsub.s32 1, %v793
        %v795 = vrot.slane %v786, %v794
        %v796 = vlaneseq
        %v797 = vshrl.u32 %v796, 7
        %v798 = vsub.s32 2, %v797
        %v799 = vrot.slane %v786, %v798
        %v835 = vunpack.c.l.b16 %v754
        %v836 = vunpack.c.h.b16 %v754
        %v837 = vunpack.c.l.b16 %v755
        %v838 = vunpack.c.l.b16 %v756
        %v839 = vunpack.c.h.b16 %v756
        %v840 = vunpack.c.l.b16 %v757
        %v841 = vunpack.c.l.b16 %v758
        %v842 = vunpack.c.h.b16 %v758
        %v843 = vunpack.c.l.b16 %v759
        %v844 = vunpack.c.l.b16 %v760
        %v845 = vunpack.c.h.b16 %v760
        %v846 = vunpack.c.l.b16 %v761
        %v847 = vunpack.c.l.b16 %v762
        %v848 = vunpack.c.h.b16 %v762
        %v849 = vunpack.c.l.b16 %v763
        %v850 = vunpack.c.l.b16 %v764
        %v851 = vunpack.c.h.b16 %v764
        %v852 = vunpack.c.l.b16 %v765
        %v853 = vunpack.c.l.b16 %v766
        %v854 = vunpack.c.h.b16 %v766
        %v855 = vunpack.c.l.b16 %v767
        %v856 = vunpack.c.l.b16 %v768
        %v857 = vunpack.c.h.b16 %v768
        %v858 = vunpack.c.l.b16 %v769
        %v859 = vunpack.c.l.b16 %v770
        %v860 = vunpack.c.h.b16 %v770
        %v861 = vunpack.c.l.b16 %v771
        %v862 = vunpack.c.l.b16 %v772
        %v863 = vunpack.c.h.b16 %v772
        %v864 = vunpack.c.l.b16 %v773
        %v865 = vunpack.c.l.b16 %v774
        %v866 = vunpack.c.h.b16 %v774
        %v867 = vunpack.c.l.b16 %v775
        %v868 = vunpack.c.l.b16 %v776
        %v869 = vunpack.c.h.b16 %v776
        %v870 = vunpack.c.l.b16 %v777
        %v871 = vunpack.c.l.b16 %v778
        %v872 = vunpack.c.h.b16 %v778
        %v873 = vunpack.c.l.b16 %v779
        %v874 = vunpack.c.l.b16 %v780
        %v875 = vunpack.c.h.b16 %v780
        %v876 = vunpack.c.l.b16 %v781
        %v877 = vunpack.c.l.b16 %v782
        %v878 = vunpack.c.h.b16 %v782
        %v879 = vunpack.c.l.b16 %v783
        %v880 = vunpack.c.l.b16 %v784
        %v881 = vunpack.c.h.b16 %v784
        %v882 = vunpack.c.l.b16 %v785
        %v883 = vpack.c.b16 %v838, %v835
        %v884 = vpack.c.b16 %v839, %v836
        %v885 = vpack.c.b16 %v840, %v837
        %v886 = vpack.c.b16 %v844, %v841
        %v887 = vpack.c.b16 %v845, %v842
        %v888 = vpack.c.b16 %v846, %v843
        %v889 = vpack.c.b16 %v850, %v847
        %v890 = vpack.c.b16 %v851, %v848
        %v891 = vpack.c.b16 %v852, %v849
        %v892 = vpack.c.b16 %v856, %v853
        %v893 = vpack.c.b16 %v857, %v854
        %v894 = vpack.c.b16 %v858, %v855
        %v895 = vpack.c.b16 %v862, %v859
        %v896 = vpack.c.b16 %v863, %v860
        %v897 = vpack.c.b16 %v864, %v861
        %v898 = vpack.c.b16 %v868, %v865
        %v899 = vpack.c.b16 %v869, %v866
        %v900 = vpack.c.b16 %v870, %v867
        %v901 = vpack.c.b16 %v874, %v871
        %v902 = vpack.c.b16 %v875, %v872
        %v903 = vpack.c.b16 %v876, %v873
        %v904 = vpack.c.b16 %v880, %v877
        %v905 = vpack.c.b16 %v881, %v878
        %v906 = vpack.c.b16 %v882, %v879
        %931 = vmatprep.subr.bf16.mxu0 %v884
        %932 = vmatpush1.bf16.msra.mxu0 %v883
        %933 = vmatprep.subr.bf16.mxu0 %v887
        %934 = vmatpush1.bf16.msra.mxu0 %v886
        %935 = vmatprep.subr.bf16.mxu0 %v890
        %936 = vmatpush1.bf16.msra.mxu0 %v889
        %937 = vmatprep.subr.bf16.mxu0 %v893
        %938 = vmatpush1.bf16.msra.mxu0 %v892
        %939 = vmatprep.subr.bf16.mxu0 %v896
        %940 = vmatpush1.bf16.msra.mxu0 %v895
        %941 = vmatprep.subr.bf16.mxu0 %v899
        %942 = vmatpush1.bf16.msra.mxu0 %v898
        %943 = vmatprep.subr.bf16.mxu0 %v902
        %944 = vmatpush1.bf16.msra.mxu0 %v901
        %945 = vmatprep.subr.bf16.mxu0 %v905
        %946 = vmatpush1.bf16.msra.mxu0 %v904
        %947 = vmatprep.subr.bf16.mxu0 0
        %948 = vmatpush1.bf16.msra.mxu0 0
        %949 = vmatprep.subr.bf16.mxu0 0
        %950 = vmatpush1.bf16.msra.mxu0 0
        %951 = vmatprep.subr.bf16.mxu0 0
        %952 = vmatpush1.bf16.msra.mxu0 0
        %953 = vmatprep.subr.bf16.mxu0 0
        %954 = vmatpush1.bf16.msra.mxu0 0
        %955 = vmatprep.subr.bf16.mxu0 0
        %956 = vmatpush1.bf16.msra.mxu0 0
        %957 = vmatprep.subr.bf16.mxu0 0
        %958 = vmatpush1.bf16.msra.mxu0 0
        %959 = vmatprep.subr.bf16.mxu0 0
        %960 = vmatpush1.bf16.msra.mxu0 0
        %961 = vmatprep.subr.bf16.mxu0 0
        %962 = vmatpush1.bf16.msra.mxu0 0
        %963 = vmatprep.mubr.bf16.mxu0 0
        %964 = vmatmul.mubr.bf16.gmra.mrb[0].mxu0 %v753
        %v965 = vpop.f32.mrb[0].mxu0
        %v966 = vadd.f32 %v791, %v965
        %v967 = vpop.f32.mrb[0].mxu0
        %v968 = vadd.f32 %v795, %v967
        %v969 = vpop.f32.mrb[0].mxu0
        %v970 = vpop.f32.mrb[0].mxu0
        %971 = vdwg.mxu0
        %972 = vmatprep.subr.bf16.mxu0 0
        %973 = vmatpush1.bf16.msra.mxu0 %v885
        %974 = vmatprep.subr.bf16.mxu0 0
        %975 = vmatpush1.bf16.msra.mxu0 %v888
        %976 = vmatprep.subr.bf16.mxu0 0
        %977 = vmatpush1.bf16.msra.mxu0 %v891
        %978 = vmatprep.subr.bf16.mxu0 0
        %979 = vmatpush1.bf16.msra.mxu0 %v894
        %980 = vmatprep.subr.bf16.mxu0 0
        %981 = vmatpush1.bf16.msra.mxu0 %v897
        %982 = vmatprep.subr.bf16.mxu0 0
        %983 = vmatpush1.bf16.msra.mxu0 %v900
        %984 = vmatprep.subr.bf16.mxu0 0
        %985 = vmatpush1.bf16.msra.mxu0 %v903
        %986 = vmatprep.subr.bf16.mxu0 0
        %987 = vmatpush1.bf16.msra.mxu0 %v906
        %988 = vmatprep.subr.bf16.mxu0 0
        %989 = vmatpush1.bf16.msra.mxu0 0
        %990 = vmatprep.subr.bf16.mxu0 0
        %991 = vmatpush1.bf16.msra.mxu0 0
        %992 = vmatprep.subr.bf16.mxu0 0
        %993 = vmatpush1.bf16.msra.mxu0 0
        %994 = vmatprep.subr.bf16.mxu0 0
        %995 = vmatpush1.bf16.msra.mxu0 0
        %996 = vmatprep.subr.bf16.mxu0 0
        %997 = vmatpush1.bf16.msra.mxu0 0
        %998 = vmatprep.subr.bf16.mxu0 0
        %999 = vmatpush1.bf16.msra.mxu0 0
        %1000 = vmatprep.subr.bf16.mxu0 0
        %1001 = vmatpush1.bf16.msra.mxu0 0
        %1002 = vmatprep.subr.bf16.mxu0 0
        %1003 = vmatpush1.bf16.msra.mxu0 0
        %1004 = vmatprep.mubr.bf16.mxu0 0
        %1005 = vmatmul.mubr.bf16.gmra.mrb[0].mxu0 %v753
        %v1006 = vpop.f32.mrb[0].mxu0
        %v1007 = vadd.f32 %v799, %v1006
        %v1008 = vpop.f32.mrb[0].mxu0
        %v1009 = vpop.f32.mrb[0].mxu0
        %v1010 = vpop.f32.mrb[0].mxu0
        %1011 = vdwg.mxu0
        %v1013 = vlaneseq
        %v1014 = vshrl.u32 %v1013, 7
        %v1015 = vsub.s32 0, %v1014
        %v1016 = vrot.slane %v752, %v1015
        %vm1018 = vcmask 261120
        %v1020 = vsel %vm1018, %v966, 0
        %v1023 = vsel %vm1018, %v968, 0
        %1025 = vmatprep.subr.mxu0 0.0
        %1026 = vmatpush1.xpose.msra.mxu0 %v1023
        %1027 = vmatprep.subr.mxu0 0.0
        %1028 = vmatpush1.xpose.msra.mxu0 0.0
        %1029 = vmatprep.subr.mxu0 0.0
        %1030 = vmatpush1.xpose.msra.mxu0 0.0
        %1031 = vmatprep.subr.mxu0 0.0
        %1032 = vmatpush1.xpose.msra.mxu0 0.0
        %1033 = vmatprep.subr.mxu0 0.0
        %1034 = vmatpush1.xpose.msra.mxu0 0.0
        %1035 = vmatprep.subr.mxu0 0.0
        %1036 = vmatpush1.xpose.msra.mxu0 0.0
        %1037 = vmatprep.subr.mxu0 0.0
        %1038 = vmatpush1.xpose.msra.mxu0 0.0
        %1039 = vmatprep.subr.mxu0 0.0
        %1040 = vmatpush1.xpose.msra.mxu0 0.0
        %1041 = vmatprep.subr.mxu0 0.0
        %1042 = vmatpush1.xpose.msra.mxu0 0.0
        %1043 = vmatprep.subr.mxu0 0.0
        %1044 = vmatpush1.xpose.msra.mxu0 0.0
        %1045 = vmatprep.subr.mxu0 0.0
        %1046 = vmatpush1.xpose.msra.mxu0 0.0
        %1047 = vmatprep.subr.mxu0 0.0
        %1048 = vmatpush1.xpose.msra.mxu0 0.0
        %1049 = vmatprep.subr.mxu0 0.0
        %1050 = vmatpush1.xpose.msra.mxu0 0.0
        %1051 = vmatprep.subr.mxu0 0.0
        %1052 = vmatpush1.xpose.msra.mxu0 0.0
        %1053 = vmatprep.subr.mxu0 0.0
        %1054 = vmatpush1.xpose.msra.mxu0 0.0
        %1055 = vmatprep.subr.mxu0 0.0
        %1056 = vmatpush1.xpose.msra.mxu0 0.0
        %1057 = vmatprep.subr.mxu0 0.0
        %1058 = vmatpush1.xpose.msra.mxu0 0.0
        %1059 = vmatprep.subr.mxu0 0.0
        %1060 = vmatpush1.xpose.msra.mxu0 0.0
        %1061 = vmatprep.subr.mxu0 0.0
        %1062 = vmatpush1.xpose.msra.mxu0 0.0
        %1063 = vmatprep.subr.mxu0 0.0
        %1064 = vmatpush1.xpose.msra.mxu0 0.0
        %1065 = vmatprep.subr.mxu0 0.0
        %1066 = vmatpush1.xpose.msra.mxu0 0.0
        %1067 = vmatprep.subr.mxu0 0.0
        %1068 = vmatpush1.xpose.msra.mxu0 0.0
        %1069 = vmatprep.subr.mxu0 0.0
        %1070 = vmatpush1.xpose.msra.mxu0 0.0
        %1071 = vmatprep.subr.mxu0 0.0
        %1072 = vmatpush1.xpose.msra.mxu0 0.0
        %1073 = vmatprep.subr.mxu0 0.0
        %1074 = vmatpush1.xpose.msra.mxu0 0.0
        %1075 = vmatprep.subr.mxu0 0.0
        %1076 = vmatpush1.xpose.msra.mxu0 0.0
        %1077 = vmatprep.subr.mxu0 0.0
        %1078 = vmatpush1.xpose.msra.mxu0 0.0
        %1079 = vmatprep.subr.mxu0 0.0
        %1080 = vmatpush1.xpose.msra.mxu0 0.0
        %1081 = vmatprep.subr.mxu0 0.0
        %1082 = vmatpush1.xpose.msra.mxu0 0.0
        %1083 = vmatprep.subr.mxu0 0.0
        %1084 = vmatpush1.xpose.msra.mxu0 0.0
        %1085 = vmatprep.subr.mxu0 0.0
        %1086 = vmatpush1.xpose.msra.mxu0 0.0
        %1087 = vmatprep.subr.mxu0 0.0
        %1088 = vmatpush1.xpose.msra.mxu0 0.0
        %1089 = vmatprep.mubr.f32.mxu0 0.0
        %1090 = vmatmul.mubr.f32.gmra.mrb[0].mxu0 %v1020
        %v1091 = vpop.f32.mrb[0].mxu0
        %v1092 = vadd.f32 %v1016, %v1091
        %v1093 = vpop.f32.mrb[0].mxu0
        %1094 = vdwg.mxu0
        %vm1095 = vcmask 64512
        %v1096 = vsel %vm1095, %v1092, -inf
        %1097 = vmax.xlane.f32.xlu0 %v1096
        %v1098 = vpop.xlane.xlu0 %1097
        %v1099 = vsub.f32 %v1092, %v1098
        %v1100 = vmul.f32 %v1099, 1.442695
        %v1101 = vpow.pop %v1100
        %v1102 = vsel %vm1095, %v1101, 0.0
        %1103 = vadd.xlane.f32.xlu0 %v1102
        %v1104 = vpop.xlane.xlu0 %1103
        %v1105 = vrcp.pop %v1104
        %v1106 = vmul.f32 %v1101, %v1105
        %v1108 = vsel %vm1095, %v1106, 0
        %1110 = vmatprep.subr.mxu0 0.0
        %1111 = vmatpush1.msra.mxu0 %v1007
        %1112 = vmatprep.subr.mxu0 0.0
        %1113 = vmatpush1.msra.mxu0 0.0
        %1114 = vmatprep.subr.mxu0 0.0
        %1115 = vmatpush1.msra.mxu0 0.0
        %1116 = vmatprep.subr.mxu0 0.0
        %1117 = vmatpush1.msra.mxu0 0.0
        %1118 = vmatprep.subr.mxu0 0.0
        %1119 = vmatpush1.msra.mxu0 0.0
        %1120 = vmatprep.subr.mxu0 0.0
        %1121 = vmatpush1.msra.mxu0 0.0
        %1122 = vmatprep.subr.mxu0 0.0
        %1123 = vmatpush1.msra.mxu0 0.0
        %1124 = vmatprep.subr.mxu0 0.0
        %1125 = vmatpush1.msra.mxu0 0.0
        %1126 = vmatprep.subr.mxu0 0.0
        %1127 = vmatpush1.msra.mxu0 0.0
        %1128 = vmatprep.subr.mxu0 0.0
        %1129 = vmatpush1.msra.mxu0 0.0
        %1130 = vmatprep.subr.mxu0 0.0
        %1131 = vmatpush1.msra.mxu0 0.0
        %1132 = vmatprep.subr.mxu0 0.0
        %1133 = vmatpush1.msra.mxu0 0.0
        %1134 = vmatprep.subr.mxu0 0.0
        %1135 = vmatpush1.msra.mxu0 0.0
        %1136 = vmatprep.subr.mxu0 0.0
        %1137 = vmatpush1.msra.mxu0 0.0
        %1138 = vmatprep.subr.mxu0 0.0
        %1139 = vmatpush1.msra.mxu0 0.0
        %1140 = vmatprep.subr.mxu0 0.0
        %1141 = vmatpush1.msra.mxu0 0.0
        %1142 = vmatprep.subr.mxu0 0.0
        %1143 = vmatpush1.msra.mxu0 0.0
        %1144 = vmatprep.subr.mxu0 0.0
        %1145 = vmatpush1.msra.mxu0 0.0
        %1146 = vmatprep.subr.mxu0 0.0
        %1147 = vmatpush1.msra.mxu0 0.0
        %1148 = vmatprep.subr.mxu0 0.0
        %1149 = vmatpush1.msra.mxu0 0.0
        %1150 = vmatprep.subr.mxu0 0.0
        %1151 = vmatpush1.msra.mxu0 0.0
        %1152 = vmatprep.subr.mxu0 0.0
        %1153 = vmatpush1.msra.mxu0 0.0
        %1154 = vmatprep.subr.mxu0 0.0
        %1155 = vmatpush1.msra.mxu0 0.0
        %1156 = vmatprep.subr.mxu0 0.0
        %1157 = vmatpush1.msra.mxu0 0.0
        %1158 = vmatprep.subr.mxu0 0.0
        %1159 = vmatpush1.msra.mxu0 0.0
        %1160 = vmatprep.subr.mxu0 0.0
        %1161 = vmatpush1.msra.mxu0 0.0
        %1162 = vmatprep.subr.mxu0 0.0
        %1163 = vmatpush1.msra.mxu0 0.0
        %1164 = vmatprep.subr.mxu0 0.0
        %1165 = vmatpush1.msra.mxu0 0.0
        %1166 = vmatprep.subr.mxu0 0.0
        %1167 = vmatpush1.msra.mxu0 0.0
        %1168 = vmatprep.subr.mxu0 0.0
        %1169 = vmatpush1.msra.mxu0 0.0
        %1170 = vmatprep.subr.mxu0 0.0
        %1171 = vmatpush1.msra.mxu0 0.0
        %1172 = vmatprep.subr.mxu0 0.0
        %1173 = vmatpush1.msra.mxu0 0.0
        %1174 = vmatprep.mubr.f32.mxu0 0.0
        %1175 = vmatmul.mubr.f32.gmra.mrb[0].mxu0 %v1108
        %v1176 = vpop.f32.mrb[0].mxu0
        %v1177 = vadd.f32 0.0, %v1176
        %v1178 = vpop.f32.mrb[0].mxu0
        %1179 = vdwg.mxu0
        %1180 = vrot.lane.b32.xlu0 %v966, 96
        %v1181 = vpop.permute.xlu0 %1180
        %1182 = vrot.lane.b32.xlu0 %v968, 96
        %v1183 = vpop.permute.xlu0 %1182
        %v1184 = vsel %vm1018, %v1181, 0
        %v1186 = vsel %vm1018, %v1183, 0
        %1188 = vmatprep.subr.mxu0 0.0
        %1189 = vmatpush1.xpose.msra.mxu0 %v1186
        %1190 = vmatprep.subr.mxu0 0.0
        %1191 = vmatpush1.xpose.msra.mxu0 0.0
        %1192 = vmatprep.subr.mxu0 0.0
        %1193 = vmatpush1.xpose.msra.mxu0 0.0
        %1194 = vmatprep.subr.mxu0 0.0
        %1195 = vmatpush1.xpose.msra.mxu0 0.0
        %1196 = vmatprep.subr.mxu0 0.0
        %1197 = vmatpush1.xpose.msra.mxu0 0.0
        %1198 = vmatprep.subr.mxu0 0.0
        %1199 = vmatpush1.xpose.msra.mxu0 0.0
        %1200 = vmatprep.subr.mxu0 0.0
        %1201 = vmatpush1.xpose.msra.mxu0 0.0
        %1202 = vmatprep.subr.mxu0 0.0
        %1203 = vmatpush1.xpose.msra.mxu0 0.0
        %1204 = vmatprep.subr.mxu0 0.0
        %1205 = vmatpush1.xpose.msra.mxu0 0.0
        %1206 = vmatprep.subr.mxu0 0.0
        %1207 = vmatpush1.xpose.msra.mxu0 0.0
        %1208 = vmatprep.subr.mxu0 0.0
        %1209 = vmatpush1.xpose.msra.mxu0 0.0
        %1210 = vmatprep.subr.mxu0 0.0
        %1211 = vmatpush1.xpose.msra.mxu0 0.0
        %1212 = vmatprep.subr.mxu0 0.0
        %1213 = vmatpush1.xpose.msra.mxu0 0.0
        %1214 = vmatprep.subr.mxu0 0.0
        %1215 = vmatpush1.xpose.msra.mxu0 0.0
        %1216 = vmatprep.subr.mxu0 0.0
        %1217 = vmatpush1.xpose.msra.mxu0 0.0
        %1218 = vmatprep.subr.mxu0 0.0
        %1219 = vmatpush1.xpose.msra.mxu0 0.0
        %1220 = vmatprep.subr.mxu0 0.0
        %1221 = vmatpush1.xpose.msra.mxu0 0.0
        %1222 = vmatprep.subr.mxu0 0.0
        %1223 = vmatpush1.xpose.msra.mxu0 0.0
        %1224 = vmatprep.subr.mxu0 0.0
        %1225 = vmatpush1.xpose.msra.mxu0 0.0
        %1226 = vmatprep.subr.mxu0 0.0
        %1227 = vmatpush1.xpose.msra.mxu0 0.0
        %1228 = vmatprep.subr.mxu0 0.0
        %1229 = vmatpush1.xpose.msra.mxu0 0.0
        %1230 = vmatprep.subr.mxu0 0.0
        %1231 = vmatpush1.xpose.msra.mxu0 0.0
        %1232 = vmatprep.subr.mxu0 0.0
        %1233 = vmatpush1.xpose.msra.mxu0 0.0
        %1234 = vmatprep.subr.mxu0 0.0
        %1235 = vmatpush1.xpose.msra.mxu0 0.0
        %1236 = vmatprep.subr.mxu0 0.0
        %1237 = vmatpush1.xpose.msra.mxu0 0.0
        %1238 = vmatprep.subr.mxu0 0.0
        %1239 = vmatpush1.xpose.msra.mxu0 0.0
        %1240 = vmatprep.subr.mxu0 0.0
        %1241 = vmatpush1.xpose.msra.mxu0 0.0
        %1242 = vmatprep.subr.mxu0 0.0
        %1243 = vmatpush1.xpose.msra.mxu0 0.0
        %1244 = vmatprep.subr.mxu0 0.0
        %1245 = vmatpush1.xpose.msra.mxu0 0.0
        %1246 = vmatprep.subr.mxu0 0.0
        %1247 = vmatpush1.xpose.msra.mxu0 0.0
        %1248 = vmatprep.subr.mxu0 0.0
        %1249 = vmatpush1.xpose.msra.mxu0 0.0
        %1250 = vmatprep.subr.mxu0 0.0
        %1251 = vmatpush1.xpose.msra.mxu0 0.0
        %1252 = vmatprep.mubr.f32.mxu0 0.0
        %1253 = vmatmul.mubr.f32.gmra.mrb[0].mxu0 %v1184
        %v1254 = vpop.f32.mrb[0].mxu0
        %v1255 = vadd.f32 %v1016, %v1254
        %v1256 = vpop.f32.mrb[0].mxu0
        %1257 = vdwg.mxu0
        %v1258 = vsel %vm1095, %v1255, -inf
        %1259 = vmax.xlane.f32.xlu0 %v1258
        %v1260 = vpop.xlane.xlu0 %1259
        %v1261 = vsub.f32 %v1255, %v1260
        %v1262 = vmul.f32 %v1261, 1.442695
        %v1263 = vpow.pop %v1262
        %v1264 = vsel %vm1095, %v1263, 0.0
        %1265 = vadd.xlane.f32.xlu0 %v1264
        %v1266 = vpop.xlane.xlu0 %1265
        %v1267 = vrcp.pop %v1266
        %v1268 = vmul.f32 %v1263, %v1267
        %1270 = vrot.lane.b32.xlu0 %v1007, 96
        %v1271 = vpop.permute.xlu0 %1270
        %v1274 = vsel %vm1095, %v1268, 0
        %1276 = vmatprep.subr.mxu0 0.0
        %1277 = vmatpush1.msra.mxu0 %v1271
        %1278 = vmatprep.subr.mxu0 0.0
        %1279 = vmatpush1.msra.mxu0 0.0
        %1280 = vmatprep.subr.mxu0 0.0
        %1281 = vmatpush1.msra.mxu0 0.0
        %1282 = vmatprep.subr.mxu0 0.0
        %1283 = vmatpush1.msra.mxu0 0.0
        %1284 = vmatprep.subr.mxu0 0.0
        %1285 = vmatpush1.msra.mxu0 0.0
        %1286 = vmatprep.subr.mxu0 0.0
        %1287 = vmatpush1.msra.mxu0 0.0
        %1288 = vmatprep.subr.mxu0 0.0
        %1289 = vmatpush1.msra.mxu0 0.0
        %1290 = vmatprep.subr.mxu0 0.0
        %1291 = vmatpush1.msra.mxu0 0.0
        %1292 = vmatprep.subr.mxu0 0.0
        %1293 = vmatpush1.msra.mxu0 0.0
        %1294 = vmatprep.subr.mxu0 0.0
        %1295 = vmatpush1.msra.mxu0 0.0
        %1296 = vmatprep.subr.mxu0 0.0
        %1297 = vmatpush1.msra.mxu0 0.0
        %1298 = vmatprep.subr.mxu0 0.0
        %1299 = vmatpush1.msra.mxu0 0.0
        %1300 = vmatprep.subr.mxu0 0.0
        %1301 = vmatpush1.msra.mxu0 0.0
        %1302 = vmatprep.subr.mxu0 0.0
        %1303 = vmatpush1.msra.mxu0 0.0
        %1304 = vmatprep.subr.mxu0 0.0
        %1305 = vmatpush1.msra.mxu0 0.0
        %1306 = vmatprep.subr.mxu0 0.0
        %1307 = vmatpush1.msra.mxu0 0.0
        %1308 = vmatprep.subr.mxu0 0.0
        %1309 = vmatpush1.msra.mxu0 0.0
        %1310 = vmatprep.subr.mxu0 0.0
        %1311 = vmatpush1.msra.mxu0 0.0
        %1312 = vmatprep.subr.mxu0 0.0
        %1313 = vmatpush1.msra.mxu0 0.0
        %1314 = vmatprep.subr.mxu0 0.0
        %1315 = vmatpush1.msra.mxu0 0.0
        %1316 = vmatprep.subr.mxu0 0.0
        %1317 = vmatpush1.msra.mxu0 0.0
        %1318 = vmatprep.subr.mxu0 0.0
        %1319 = vmatpush1.msra.mxu0 0.0
        %1320 = vmatprep.subr.mxu0 0.0
        %1321 = vmatpush1.msra.mxu0 0.0
        %1322 = vmatprep.subr.mxu0 0.0
        %1323 = vmatpush1.msra.mxu0 0.0
        %1324 = vmatprep.subr.mxu0 0.0
        %1325 = vmatpush1.msra.mxu0 0.0
        %1326 = vmatprep.subr.mxu0 0.0
        %1327 = vmatpush1.msra.mxu0 0.0
        %1328 = vmatprep.subr.mxu0 0.0
        %1329 = vmatpush1.msra.mxu0 0.0
        %1330 = vmatprep.subr.mxu0 0.0
        %1331 = vmatpush1.msra.mxu0 0.0
        %1332 = vmatprep.subr.mxu0 0.0
        %1333 = vmatpush1.msra.mxu0 0.0
        %1334 = vmatprep.subr.mxu0 0.0
        %1335 = vmatpush1.msra.mxu0 0.0
        %1336 = vmatprep.subr.mxu0 0.0
        %1337 = vmatpush1.msra.mxu0 0.0
        %1338 = vmatprep.subr.mxu0 0.0
        %1339 = vmatpush1.msra.mxu0 0.0
        %1340 = vmatprep.mubr.f32.mxu0 0.0
        %1341 = vmatmul.mubr.f32.gmra.mrb[0].mxu0 %v1274
        %v1342 = vpop.f32.mrb[0].mxu0
        %v1343 = vadd.f32 0.0, %v1342
        %v1344 = vpop.f32.mrb[0].mxu0
        %1345 = vdwg.mxu0
        %1346 = vrot.lane.b32.xlu0 %v966, 64
        %v1347 = vpop.permute.xlu0 %1346
        %1348 = vrot.lane.b32.xlu0 %v968, 64
        %v1349 = vpop.permute.xlu0 %1348
        %v1350 = vsel %vm1018, %v1347, 0
        %v1352 = vsel %vm1018, %v1349, 0
        %1354 = vmatprep.subr.mxu0 0.0
        %1355 = vmatpush1.xpose.msra.mxu0 %v1352
        %1356 = vmatprep.subr.mxu0 0.0
        %1357 = vmatpush1.xpose.msra.mxu0 0.0
        %1358 = vmatprep.subr.mxu0 0.0
        %1359 = vmatpush1.xpose.msra.mxu0 0.0
        %1360 = vmatprep.subr.mxu0 0.0
        %1361 = vmatpush1.xpose.msra.mxu0 0.0
        %1362 = vmatprep.subr.mxu0 0.0
        %1363 = vmatpush1.xpose.msra.mxu0 0.0
        %1364 = vmatprep.subr.mxu0 0.0
        %1365 = vmatpush1.xpose.msra.mxu0 0.0
        %1366 = vmatprep.subr.mxu0 0.0
        %1367 = vmatpush1.xpose.msra.mxu0 0.0
        %1368 = vmatprep.subr.mxu0 0.0
        %1369 = vmatpush1.xpose.msra.mxu0 0.0
        %1370 = vmatprep.subr.mxu0 0.0
        %1371 = vmatpush1.xpose.msra.mxu0 0.0
        %1372 = vmatprep.subr.mxu0 0.0
        %1373 = vmatpush1.xpose.msra.mxu0 0.0
        %1374 = vmatprep.subr.mxu0 0.0
        %1375 = vmatpush1.xpose.msra.mxu0 0.0
        %1376 = vmatprep.subr.mxu0 0.0
        %1377 = vmatpush1.xpose.msra.mxu0 0.0
        %1378 = vmatprep.subr.mxu0 0.0
        %1379 = vmatpush1.xpose.msra.mxu0 0.0
        %1380 = vmatprep.subr.mxu0 0.0
        %1381 = vmatpush1.xpose.msra.mxu0 0.0
        %1382 = vmatprep.subr.mxu0 0.0
        %1383 = vmatpush1.xpose.msra.mxu0 0.0
        %1384 = vmatprep.subr.mxu0 0.0
        %1385 = vmatpush1.xpose.msra.mxu0 0.0
        %1386 = vmatprep.subr.mxu0 0.0
        %1387 = vmatpush1.xpose.msra.mxu0 0.0
        %1388 = vmatprep.subr.mxu0 0.0
        %1389 = vmatpush1.xpose.msra.mxu0 0.0
        %1390 = vmatprep.subr.mxu0 0.0
        %1391 = vmatpush1.xpose.msra.mxu0 0.0
        %1392 = vmatprep.subr.mxu0 0.0
        %1393 = vmatpush1.xpose.msra.mxu0 0.0
        %1394 = vmatprep.subr.mxu0 0.0
        %1395 = vmatpush1.xpose.msra.mxu0 0.0
        %1396 = vmatprep.subr.mxu0 0.0
        %1397 = vmatpush1.xpose.msra.mxu0 0.0
        %1398 = vmatprep.subr.mxu0 0.0
        %1399 = vmatpush1.xpose.msra.mxu0 0.0
        %1400 = vmatprep.subr.mxu0 0.0
        %1401 = vmatpush1.xpose.msra.mxu0 0.0
        %1402 = vmatprep.subr.mxu0 0.0
        %1403 = vmatpush1.xpose.msra.mxu0 0.0
        %1404 = vmatprep.subr.mxu0 0.0
        %1405 = vmatpush1.xpose.msra.mxu0 0.0
        %1406 = vmatprep.subr.mxu0 0.0
        %1407 = vmatpush1.xpose.msra.mxu0 0.0
        %1408 = vmatprep.subr.mxu0 0.0
        %1409 = vmatpush1.xpose.msra.mxu0 0.0
        %1410 = vmatprep.subr.mxu0 0.0
        %1411 = vmatpush1.xpose.msra.mxu0 0.0
        %1412 = vmatprep.subr.mxu0 0.0
        %1413 = vmatpush1.xpose.msra.mxu0 0.0
        %1414 = vmatprep.subr.mxu0 0.0
        %1415 = vmatpush1.xpose.msra.mxu0 0.0
        %1416 = vmatprep.subr.mxu0 0.0
        %1417 = vmatpush1.xpose.msra.mxu0 0.0
        %1418 = vmatprep.mubr.f32.mxu0 0.0
        %1419 = vmatmul.mubr.f32.gmra.mrb[0].mxu0 %v1350
        %v1420 = vpop.f32.mrb[0].mxu0
        %v1421 = vadd.f32 %v1016, %v1420
        %v1422 = vpop.f32.mrb[0].mxu0
        %1423 = vdwg.mxu0
        %v1424 = vsel %vm1095, %v1421, -inf
        %1425 = vmax.xlane.f32.xlu0 %v1424
        %v1426 = vpop.xlane.xlu0 %1425
        %v1427 = vsub.f32 %v1421, %v1426
        %v1428 = vmul.f32 %v1427, 1.442695
        %v1429 = vpow.pop %v1428
        %v1430 = vsel %vm1095, %v1429, 0.0
        %1431 = vadd.xlane.f32.xlu0 %v1430
        %v1432 = vpop.xlane.xlu0 %1431
        %v1433 = vrcp.pop %v1432
        %v1434 = vmul.f32 %v1429, %v1433
        %1435 = vrot.lane.b32.xlu0 %v1007, 64
        %v1436 = vpop.permute.xlu0 %1435
        %v1439 = vsel %vm1095, %v1434, 0
        %1441 = vmatprep.subr.mxu0 0.0
        %1442 = vmatpush1.msra.mxu0 %v1436
        %1443 = vmatprep.subr.mxu0 0.0
        %1444 = vmatpush1.msra.mxu0 0.0
        %1445 = vmatprep.subr.mxu0 0.0
        %1446 = vmatpush1.msra.mxu0 0.0
        %1447 = vmatprep.subr.mxu0 0.0
        %1448 = vmatpush1.msra.mxu0 0.0
        %1449 = vmatprep.subr.mxu0 0.0
        %1450 = vmatpush1.msra.mxu0 0.0
        %1451 = vmatprep.subr.mxu0 0.0
        %1452 = vmatpush1.msra.mxu0 0.0
        %1453 = vmatprep.subr.mxu0 0.0
        %1454 = vmatpush1.msra.mxu0 0.0
        %1455 = vmatprep.subr.mxu0 0.0
        %1456 = vmatpush1.msra.mxu0 0.0
        %1457 = vmatprep.subr.mxu0 0.0
        %1458 = vmatpush1.msra.mxu0 0.0
        %1459 = vmatprep.subr.mxu0 0.0
        %1460 = vmatpush1.msra.mxu0 0.0
        %1461 = vmatprep.subr.mxu0 0.0
        %1462 = vmatpush1.msra.mxu0 0.0
        %1463 = vmatprep.subr.mxu0 0.0
        %1464 = vmatpush1.msra.mxu0 0.0
        %1465 = vmatprep.subr.mxu0 0.0
        %1466 = vmatpush1.msra.mxu0 0.0
        %1467 = vmatprep.subr.mxu0 0.0
        %1468 = vmatpush1.msra.mxu0 0.0
        %1469 = vmatprep.subr.mxu0 0.0
        %1470 = vmatpush1.msra.mxu0 0.0
        %1471 = vmatprep.subr.mxu0 0.0
        %1472 = vmatpush1.msra.mxu0 0.0
        %1473 = vmatprep.subr.mxu0 0.0
        %1474 = vmatpush1.msra.mxu0 0.0
        %1475 = vmatprep.subr.mxu0 0.0
        %1476 = vmatpush1.msra.mxu0 0.0
        %1477 = vmatprep.subr.mxu0 0.0
        %1478 = vmatpush1.msra.mxu0 0.0
        %1479 = vmatprep.subr.mxu0 0.0
        %1480 = vmatpush1.msra.mxu0 0.0
        %1481 = vmatprep.subr.mxu0 0.0
        %1482 = vmatpush1.msra.mxu0 0.0
        %1483 = vmatprep.subr.mxu0 0.0
        %1484 = vmatpush1.msra.mxu0 0.0
        %1485 = vmatprep.subr.mxu0 0.0
        %1486 = vmatpush1.msra.mxu0 0.0
        %1487 = vmatprep.subr.mxu0 0.0
        %1488 = vmatpush1.msra.mxu0 0.0
        %1489 = vmatprep.subr.mxu0 0.0
        %1490 = vmatpush1.msra.mxu0 0.0
        %1491 = vmatprep.subr.mxu0 0.0
        %1492 = vmatpush1.msra.mxu0 0.0
        %1493 = vmatprep.subr.mxu0 0.0
        %1494 = vmatpush1.msra.mxu0 0.0
        %1495 = vmatprep.subr.mxu0 0.0
        %1496 = vmatpush1.msra.mxu0 0.0
        %1497 = vmatprep.subr.mxu0 0.0
        %1498 = vmatpush1.msra.mxu0 0.0
        %1499 = vmatprep.subr.mxu0 0.0
        %1500 = vmatpush1.msra.mxu0 0.0
        %1501 = vmatprep.subr.mxu0 0.0
        %1502 = vmatpush1.msra.mxu0 0.0
        %1503 = vmatprep.subr.mxu0 0.0
        %1504 = vmatpush1.msra.mxu0 0.0
        %1505 = vmatprep.mubr.f32.mxu0 0.0
        %1506 = vmatmul.mubr.f32.gmra.mrb[0].mxu0 %v1439
        %v1507 = vpop.f32.mrb[0].mxu0
        %v1508 = vadd.f32 0.0, %v1507
        %v1509 = vpop.f32.mrb[0].mxu0
        %1510 = vdwg.mxu0
        %1511 = vrot.lane.b32.xlu0 %v966, 32
        %v1512 = vpop.permute.xlu0 %1511
        %1513 = vrot.lane.b32.xlu0 %v968, 32
        %v1514 = vpop.permute.xlu0 %1513
        %v1515 = vsel %vm1018, %v1512, 0
        %v1517 = vsel %vm1018, %v1514, 0
        %1519 = vmatprep.subr.mxu0 0.0
        %1520 = vmatpush1.xpose.msra.mxu0 %v1517
        %1521 = vmatprep.subr.mxu0 0.0
        %1522 = vmatpush1.xpose.msra.mxu0 0.0
        %1523 = vmatprep.subr.mxu0 0.0
        %1524 = vmatpush1.xpose.msra.mxu0 0.0
        %1525 = vmatprep.subr.mxu0 0.0
        %1526 = vmatpush1.xpose.msra.mxu0 0.0
        %1527 = vmatprep.subr.mxu0 0.0
        %1528 = vmatpush1.xpose.msra.mxu0 0.0
        %1529 = vmatprep.subr.mxu0 0.0
        %1530 = vmatpush1.xpose.msra.mxu0 0.0
        %1531 = vmatprep.subr.mxu0 0.0
        %1532 = vmatpush1.xpose.msra.mxu0 0.0
        %1533 = vmatprep.subr.mxu0 0.0
        %1534 = vmatpush1.xpose.msra.mxu0 0.0
        %1535 = vmatprep.subr.mxu0 0.0
        %1536 = vmatpush1.xpose.msra.mxu0 0.0
        %1537 = vmatprep.subr.mxu0 0.0
        %1538 = vmatpush1.xpose.msra.mxu0 0.0
        %1539 = vmatprep.subr.mxu0 0.0
        %1540 = vmatpush1.xpose.msra.mxu0 0.0
        %1541 = vmatprep.subr.mxu0 0.0
        %1542 = vmatpush1.xpose.msra.mxu0 0.0
        %1543 = vmatprep.subr.mxu0 0.0
        %1544 = vmatpush1.xpose.msra.mxu0 0.0
        %1545 = vmatprep.subr.mxu0 0.0
        %1546 = vmatpush1.xpose.msra.mxu0 0.0
        %1547 = vmatprep.subr.mxu0 0.0
        %1548 = vmatpush1.xpose.msra.mxu0 0.0
        %1549 = vmatprep.subr.mxu0 0.0
        %1550 = vmatpush1.xpose.msra.mxu0 0.0
        %1551 = vmatprep.subr.mxu0 0.0
        %1552 = vmatpush1.xpose.msra.mxu0 0.0
        %1553 = vmatprep.subr.mxu0 0.0
        %1554 = vmatpush1.xpose.msra.mxu0 0.0
        %1555 = vmatprep.subr.mxu0 0.0
        %1556 = vmatpush1.xpose.msra.mxu0 0.0
        %1557 = vmatprep.subr.mxu0 0.0
        %1558 = vmatpush1.xpose.msra.mxu0 0.0
        %1559 = vmatprep.subr.mxu0 0.0
        %1560 = vmatpush1.xpose.msra.mxu0 0.0
        %1561 = vmatprep.subr.mxu0 0.0
        %1562 = vmatpush1.xpose.msra.mxu0 0.0
        %1563 = vmatprep.subr.mxu0 0.0
        %1564 = vmatpush1.xpose.msra.mxu0 0.0
        %1565 = vmatprep.subr.mxu0 0.0
        %1566 = vmatpush1.xpose.msra.mxu0 0.0
        %1567 = vmatprep.subr.mxu0 0.0
        %1568 = vmatpush1.xpose.msra.mxu0 0.0
        %1569 = vmatprep.subr.mxu0 0.0
        %1570 = vmatpush1.xpose.msra.mxu0 0.0
        %1571 = vmatprep.subr.mxu0 0.0
        %1572 = vmatpush1.xpose.msra.mxu0 0.0
        %1573 = vmatprep.subr.mxu0 0.0
        %1574 = vmatpush1.xpose.msra.mxu0 0.0
        %1575 = vmatprep.subr.mxu0 0.0
        %1576 = vmatpush1.xpose.msra.mxu0 0.0
        %1577 = vmatprep.subr.mxu0 0.0
        %1578 = vmatpush1.xpose.msra.mxu0 0.0
        %1579 = vmatprep.subr.mxu0 0.0
        %1580 = vmatpush1.xpose.msra.mxu0 0.0
        %1581 = vmatprep.subr.mxu0 0.0
        %1582 = vmatpush1.xpose.msra.mxu0 0.0
        %1583 = vmatprep.mubr.f32.mxu0 0.0
        %1584 = vmatmul.mubr.f32.gmra.mrb[0].mxu0 %v1515
        %v1585 = vpop.f32.mrb[0].mxu0
        %v1586 = vadd.f32 %v1016, %v1585
        %v1587 = vpop.f32.mrb[0].mxu0
        %1588 = vdwg.mxu0
        %v1589 = vsel %vm1095, %v1586, -inf
        %1590 = vmax.xlane.f32.xlu0 %v1589
        %v1591 = vpop.xlane.xlu0 %1590
        %v1592 = vsub.f32 %v1586, %v1591
        %v1593 = vmul.f32 %v1592, 1.442695
        %v1594 = vpow.pop %v1593
        %v1595 = vsel %vm1095, %v1594, 0.0
        %1596 = vadd.xlane.f32.xlu0 %v1595
        %v1597 = vpop.xlane.xlu0 %1596
        %v1598 = vrcp.pop %v1597
        %v1599 = vmul.f32 %v1594, %v1598
        %1600 = vrot.lane.b32.xlu0 %v1007, 32
        %v1601 = vpop.permute.xlu0 %1600
        %v1604 = vsel %vm1095, %v1599, 0
        %1606 = vmatprep.subr.mxu0 0.0
        %1607 = vmatpush1.msra.mxu0 %v1601
        %1608 = vmatprep.subr.mxu0 0.0
        %1609 = vmatpush1.msra.mxu0 0.0
        %1610 = vmatprep.subr.mxu0 0.0
        %1611 = vmatpush1.msra.mxu0 0.0
        %1612 = vmatprep.subr.mxu0 0.0
        %1613 = vmatpush1.msra.mxu0 0.0
        %1614 = vmatprep.subr.mxu0 0.0
        %1615 = vmatpush1.msra.mxu0 0.0
        %1616 = vmatprep.subr.mxu0 0.0
        %1617 = vmatpush1.msra.mxu0 0.0
        %1618 = vmatprep.subr.mxu0 0.0
        %1619 = vmatpush1.msra.mxu0 0.0
        %1620 = vmatprep.subr.mxu0 0.0
        %1621 = vmatpush1.msra.mxu0 0.0
        %1622 = vmatprep.subr.mxu0 0.0
        %1623 = vmatpush1.msra.mxu0 0.0
        %1624 = vmatprep.subr.mxu0 0.0
        %1625 = vmatpush1.msra.mxu0 0.0
        %1626 = vmatprep.subr.mxu0 0.0
        %1627 = vmatpush1.msra.mxu0 0.0
        %1628 = vmatprep.subr.mxu0 0.0
        %1629 = vmatpush1.msra.mxu0 0.0
        %1630 = vmatprep.subr.mxu0 0.0
        %1631 = vmatpush1.msra.mxu0 0.0
        %1632 = vmatprep.subr.mxu0 0.0
        %1633 = vmatpush1.msra.mxu0 0.0
        %1634 = vmatprep.subr.mxu0 0.0
        %1635 = vmatpush1.msra.mxu0 0.0
        %1636 = vmatprep.subr.mxu0 0.0
        %1637 = vmatpush1.msra.mxu0 0.0
        %1638 = vmatprep.subr.mxu0 0.0
        %1639 = vmatpush1.msra.mxu0 0.0
        %1640 = vmatprep.subr.mxu0 0.0
        %1641 = vmatpush1.msra.mxu0 0.0
        %1642 = vmatprep.subr.mxu0 0.0
        %1643 = vmatpush1.msra.mxu0 0.0
        %1644 = vmatprep.subr.mxu0 0.0
        %1645 = vmatpush1.msra.mxu0 0.0
        %1646 = vmatprep.subr.mxu0 0.0
        %1647 = vmatpush1.msra.mxu0 0.0
        %1648 = vmatprep.subr.mxu0 0.0
        %1649 = vmatpush1.msra.mxu0 0.0
        %1650 = vmatprep.subr.mxu0 0.0
        %1651 = vmatpush1.msra.mxu0 0.0
        %1652 = vmatprep.subr.mxu0 0.0
        %1653 = vmatpush1.msra.mxu0 0.0
        %1654 = vmatprep.subr.mxu0 0.0
        %1655 = vmatpush1.msra.mxu0 0.0
        %1656 = vmatprep.subr.mxu0 0.0
        %1657 = vmatpush1.msra.mxu0 0.0
        %1658 = vmatprep.subr.mxu0 0.0
        %1659 = vmatpush1.msra.mxu0 0.0
        %1660 = vmatprep.subr.mxu0 0.0
        %1661 = vmatpush1.msra.mxu0 0.0
        %1662 = vmatprep.subr.mxu0 0.0
        %1663 = vmatpush1.msra.mxu0 0.0
        %1664 = vmatprep.subr.mxu0 0.0
        %1665 = vmatpush1.msra.mxu0 0.0
        %1666 = vmatprep.subr.mxu0 0.0
        %1667 = vmatpush1.msra.mxu0 0.0
        %1668 = vmatprep.subr.mxu0 0.0
        %1669 = vmatpush1.msra.mxu0 0.0
        %1670 = vmatprep.mubr.f32.mxu0 0.0
        %1671 = vmatmul.mubr.f32.gmra.mrb[0].mxu0 %v1604
        %v1672 = vpop.f32.mrb[0].mxu0
        %v1673 = vadd.f32 0.0, %v1672
        %v1674 = vpop.f32.mrb[0].mxu0
        %1675 = vdwg.mxu0
        %1677 = vrot.lane.b32.xlu0 %v1343, 32
        %v1678 = vpop.permute.xlu0 %1677
        %1681 = vrot.lane.b32.xlu0 %v1508, 64
        %v1682 = vpop.permute.xlu0 %1681
        %1685 = vrot.lane.b32.xlu0 %v1673, 96
        %v1686 = vpop.permute.xlu0 %1685
        %v1688 = vsel %vm1018, %v1177, %v1678
        %vm1689 = vcmask 523264
        %v1690 = vsel %vm1689, %v1688, %v1682
        %vm1691 = vcmask 785408
        %v1692 = vsel %vm1691, %v1690, %v1686
        %v1693 = vpack.c.bf16 %v1692, %v1692
        %v1694 = vld [vmem:[%s717] sm:$0xf]
        %v1695 = vld [vmem:[%s717 + $0x4] sm:$0xf]
        %v1696 = vld [vmem:[%s717 + $0x8] sm:$0xf]
        %v1697 = vld [vmem:[%s717 + $0xc] sm:$0xf]
        %v1698 = vld [vmem:[%s717 + $0x10] sm:$0xf]
        %v1699 = vld [vmem:[%s717 + $0x14] sm:$0xf]
        %v1700 = vld [vmem:[%s717 + $0x18] sm:$0xf]
        %v1701 = vld [vmem:[%s717 + $0x1c] sm:$0xf]
        %v1702 = vld [vmem:[%s717 + $0x20] sm:$0xf]
        %v1703 = vld [vmem:[%s717 + $0x24] sm:$0xf]
        %v1704 = vld [vmem:[%s717 + $0x28] sm:$0xf]
        %v1705 = vld [vmem:[%s717 + $0x2c] sm:$0xf]
        %v1706 = vld [vmem:[%s717 + $0x30] sm:$0xf]
        %v1707 = vld [vmem:[%s717 + $0x34] sm:$0xf]
        %v1708 = vld [vmem:[%s717 + $0x38] sm:$0xf]
        %v1709 = vld [vmem:[%s717 + $0x3c] sm:$0xf]
        %v1710 = vld [vmem:[%s720] sm:$0x1]
        %v1712 = vlaneseq
        %v1713 = vshrl.u32 %v1712, 7
        %v1714 = vsub.s32 0, %v1713
        %v1715 = vrot.slane %v1710, %v1714
        %v1733 = vunpack.c.l.b16 %v1694
        %v1734 = vunpack.c.l.b16 %v1695
        %v1735 = vunpack.c.l.b16 %v1696
        %v1736 = vunpack.c.l.b16 %v1697
        %v1737 = vunpack.c.l.b16 %v1698
        %v1738 = vunpack.c.l.b16 %v1699
        %v1739 = vunpack.c.l.b16 %v1700
        %v1740 = vunpack.c.l.b16 %v1701
        %v1741 = vunpack.c.l.b16 %v1702
        %v1742 = vunpack.c.l.b16 %v1703
        %v1743 = vunpack.c.l.b16 %v1704
        %v1744 = vunpack.c.l.b16 %v1705
        %v1745 = vunpack.c.l.b16 %v1706
        %v1746 = vunpack.c.l.b16 %v1707
        %v1747 = vunpack.c.l.b16 %v1708
        %v1748 = vunpack.c.l.b16 %v1709
        %v1749 = vpack.c.b16 %v1734, %v1733
        %v1750 = vpack.c.b16 %v1736, %v1735
        %v1751 = vpack.c.b16 %v1738, %v1737
        %v1752 = vpack.c.b16 %v1740, %v1739
        %v1753 = vpack.c.b16 %v1742, %v1741
        %v1754 = vpack.c.b16 %v1744, %v1743
        %v1755 = vpack.c.b16 %v1746, %v1745
        %v1756 = vpack.c.b16 %v1748, %v1747
        %1765 = vmatprep.subr.bf16.mxu0 0
        %1766 = vmatpush1.bf16.msra.mxu0 %v1749
        %1767 = vmatprep.subr.bf16.mxu0 0
        %1768 = vmatpush1.bf16.msra.mxu0 %v1750
        %1769 = vmatprep.subr.bf16.mxu0 0
        %1770 = vmatpush1.bf16.msra.mxu0 %v1751
        %1771 = vmatprep.subr.bf16.mxu0 0
        %1772 = vmatpush1.bf16.msra.mxu0 %v1752
        %1773 = vmatprep.subr.bf16.mxu0 0
        %1774 = vmatpush1.bf16.msra.mxu0 %v1753
        %1775 = vmatprep.subr.bf16.mxu0 0
        %1776 = vmatpush1.bf16.msra.mxu0 %v1754
        %1777 = vmatprep.subr.bf16.mxu0 0
        %1778 = vmatpush1.bf16.msra.mxu0 %v1755
        %1779 = vmatprep.subr.bf16.mxu0 0
        %1780 = vmatpush1.bf16.msra.mxu0 %v1756
        %1781 = vmatprep.subr.bf16.mxu0 0
        %1782 = vmatpush1.bf16.msra.mxu0 0
        %1783 = vmatprep.subr.bf16.mxu0 0
        %1784 = vmatpush1.bf16.msra.mxu0 0
        %1785 = vmatprep.subr.bf16.mxu0 0
        %1786 = vmatpush1.bf16.msra.mxu0 0
        %1787 = vmatprep.subr.bf16.mxu0 0
        %1788 = vmatpush1.bf16.msra.mxu0 0
        %1789 = vmatprep.subr.bf16.mxu0 0
        %1790 = vmatpush1.bf16.msra.mxu0 0
        %1791 = vmatprep.subr.bf16.mxu0 0
        %1792 = vmatpush1.bf16.msra.mxu0 0
        %1793 = vmatprep.subr.bf16.mxu0 0
        %1794 = vmatpush1.bf16.msra.mxu0 0
        %1795 = vmatprep.subr.bf16.mxu0 0
        %1796 = vmatpush1.bf16.msra.mxu0 0
        %1797 = vmatprep.mubr.bf16.mxu0 0
        %1798 = vmatmul.mubr.bf16.gmra.mrb[0].mxu0 %v1693
        %v1799 = vpop.f32.mrb[0].mxu0
        %v1800 = vadd.f32 %v1715, %v1799
        %v1801 = vpop.f32.mrb[0].mxu0
        %v1802 = vpop.f32.mrb[0].mxu0
        %v1803 = vpop.f32.mrb[0].mxu0
        %1804 = vdwg.mxu0
        %v1805 = vadd.f32 %v751, %v1800
        %v1806 = vld [vmem:[%s723] sm:$0x1]
        %v1807 = vld [vmem:[%s726] sm:$0x1]
        %1808 = vadd.xlane.f32.xlu0 %v1805
        %v1809 = vpop.xlane.xlu0 %1808
        %v1810 = vrcp.pop 128.0
        %v1811 = vmul.f32 %v1809, %v1810
        %v1812 = vsub.f32 %v1805, %v1811
        %v1813 = vmul.f32 %v1812, %v1812
        %1814 = vadd.xlane.f32.xlu0 %v1813
        %v1815 = vpop.xlane.xlu0 %1814
        %v1816 = vmul.f32 %v1815, %v1810
        %v1817 = vadd.f32 %v1816, 1e-12
        %v1818 = vrsqrt.pop %v1817
        %v1819 = vmul.f32 %v1812, %v1818
        %v1821 = vlaneseq
        %v1822 = vshrl.u32 %v1821, 7
        %v1823 = vsub.s32 0, %v1822
        %v1824 = vrot.slane %v1806, %v1823
        %v1826 = vmul.f32 %v1819, %v1824
        %v1828 = vlaneseq
        %v1829 = vshrl.u32 %v1828, 7
        %v1830 = vsub.s32 0, %v1829
        %v1831 = vrot.slane %v1807, %v1830
        %v1833 = vadd.f32 %v1826, %v1831
        %v1834 = vpack.c.bf16 %v1833, %v1833
        %v1835 = vld [vmem:[%s601] sm:$0xff]
        %v1836 = vld [vmem:[%s601 + $0x8] sm:$0xff]
        %v1837 = vld [vmem:[%s601 + $0x10] sm:$0xff]
        %v1838 = vld [vmem:[%s601 + $0x18] sm:$0xff]
        %v1839 = vld [vmem:[%s601 + $0x20] sm:$0xff]
        %v1840 = vld [vmem:[%s601 + $0x28] sm:$0xff]
        %v1841 = vld [vmem:[%s601 + $0x30] sm:$0xff]
        %v1842 = vld [vmem:[%s601 + $0x38] sm:$0xff]
        %v1843 = vld [vmem:[%s601 + $0x40] sm:$0xff]
        %v1844 = vld [vmem:[%s601 + $0x48] sm:$0xff]
        %v1845 = vld [vmem:[%s601 + $0x50] sm:$0xff]
        %v1846 = vld [vmem:[%s601 + $0x58] sm:$0xff]
        %v1847 = vld [vmem:[%s601 + $0x60] sm:$0xff]
        %v1848 = vld [vmem:[%s601 + $0x68] sm:$0xff]
        %v1849 = vld [vmem:[%s601 + $0x70] sm:$0xff]
        %v1850 = vld [vmem:[%s601 + $0x78] sm:$0xff]
        %v1851 = vld [vmem:[%s601 + $0x80] sm:$0xff]
        %v1852 = vld [vmem:[%s601 + $0x88] sm:$0xff]
        %v1853 = vld [vmem:[%s601 + $0x90] sm:$0xff]
        %v1854 = vld [vmem:[%s601 + $0x98] sm:$0xff]
        %v1855 = vld [vmem:[%s601 + $0xa0] sm:$0xff]
        %v1856 = vld [vmem:[%s601 + $0xa8] sm:$0xff]
        %v1857 = vld [vmem:[%s601 + $0xb0] sm:$0xff]
        %v1858 = vld [vmem:[%s601 + $0xb8] sm:$0xff]
        %v1859 = vld [vmem:[%s601 + $0xc0] sm:$0xff]
        %v1860 = vld [vmem:[%s601 + $0xc8] sm:$0xff]
        %v1861 = vld [vmem:[%s601 + $0xd0] sm:$0xff]
        %v1862 = vld [vmem:[%s601 + $0xd8] sm:$0xff]
        %v1863 = vld [vmem:[%s601 + $0xe0] sm:$0xff]
        %v1864 = vld [vmem:[%s601 + $0xe8] sm:$0xff]
        %v1865 = vld [vmem:[%s601 + $0xf0] sm:$0xff]
        %v1866 = vld [vmem:[%s601 + $0xf8] sm:$0xff]
        %v1867 = vld [vmem:[%s730] sm:$0xf]
        %v1869 = vlaneseq
        %v1870 = vshrl.u32 %v1869, 7
        %v1871 = vsub.s32 0, %v1870
        %v1872 = vrot.slane %v1867, %v1871
        %v1873 = vlaneseq
        %v1874 = vshrl.u32 %v1873, 7
        %v1875 = vsub.s32 1, %v1874
        %v1876 = vrot.slane %v1867, %v1875
        %v1877 = vlaneseq
        %v1878 = vshrl.u32 %v1877, 7
        %v1879 = vsub.s32 2, %v1878
        %v1880 = vrot.slane %v1867, %v1879
        %v1881 = vlaneseq
        %v1882 = vshrl.u32 %v1881, 7
        %v1883 = vsub.s32 3, %v1882
        %v1884 = vrot.slane %v1867, %v1883
        %v1921 = vunpack.c.l.b16 %v1835
        %v1922 = vunpack.c.h.b16 %v1835
        %v1923 = vunpack.c.l.b16 %v1836
        %v1924 = vunpack.c.h.b16 %v1836
        %v1925 = vunpack.c.l.b16 %v1837
        %v1926 = vunpack.c.h.b16 %v1837
        %v1927 = vunpack.c.l.b16 %v1838
        %v1928 = vunpack.c.h.b16 %v1838
        %v1929 = vunpack.c.l.b16 %v1839
        %v1930 = vunpack.c.h.b16 %v1839
        %v1931 = vunpack.c.l.b16 %v1840
        %v1932 = vunpack.c.h.b16 %v1840
        %v1933 = vunpack.c.l.b16 %v1841
        %v1934 = vunpack.c.h.b16 %v1841
        %v1935 = vunpack.c.l.b16 %v1842
        %v1936 = vunpack.c.h.b16 %v1842
        %v1937 = vunpack.c.l.b16 %v1843
        %v1938 = vunpack.c.h.b16 %v1843
        %v1939 = vunpack.c.l.b16 %v1844
        %v1940 = vunpack.c.h.b16 %v1844
        %v1941 = vunpack.c.l.b16 %v1845
        %v1942 = vunpack.c.h.b16 %v1845
        %v1943 = vunpack.c.l.b16 %v1846
        %v1944 = vunpack.c.h.b16 %v1846
        %v1945 = vunpack.c.l.b16 %v1847
        %v1946 = vunpack.c.h.b16 %v1847
        %v1947 = vunpack.c.l.b16 %v1848
        %v1948 = vunpack.c.h.b16 %v1848
        %v1949 = vunpack.c.l.b16 %v1849
        %v1950 = vunpack.c.h.b16 %v1849
        %v1951 = vunpack.c.l.b16 %v1850
        %v1952 = vunpack.c.h.b16 %v1850
        %v1953 = vunpack.c.l.b16 %v1851
        %v1954 = vunpack.c.h.b16 %v1851
        %v1955 = vunpack.c.l.b16 %v1852
        %v1956 = vunpack.c.h.b16 %v1852
        %v1957 = vunpack.c.l.b16 %v1853
        %v1958 = vunpack.c.h.b16 %v1853
        %v1959 = vunpack.c.l.b16 %v1854
        %v1960 = vunpack.c.h.b16 %v1854
        %v1961 = vunpack.c.l.b16 %v1855
        %v1962 = vunpack.c.h.b16 %v1855
        %v1963 = vunpack.c.l.b16 %v1856
        %v1964 = vunpack.c.h.b16 %v1856
        %v1965 = vunpack.c.l.b16 %v1857
        %v1966 = vunpack.c.h.b16 %v1857
        %v1967 = vunpack.c.l.b16 %v1858
        %v1968 = vunpack.c.h.b16 %v1858
        %v1969 = vunpack.c.l.b16 %v1859
        %v1970 = vunpack.c.h.b16 %v1859
        %v1971 = vunpack.c.l.b16 %v1860
        %v1972 = vunpack.c.h.b16 %v1860
        %v1973 = vunpack.c.l.b16 %v1861
        %v1974 = vunpack.c.h.b16 %v1861
        %v1975 = vunpack.c.l.b16 %v1862
        %v1976 = vunpack.c.h.b16 %v1862
        %v1977 = vunpack.c.l.b16 %v1863
        %v1978 = vunpack.c.h.b16 %v1863
        %v1979 = vunpack.c.l.b16 %v1864
        %v1980 = vunpack.c.h.b16 %v1864
        %v1981 = vunpack.c.l.b16 %v1865
        %v1982 = vunpack.c.h.b16 %v1865
        %v1983 = vunpack.c.l.b16 %v1866
        %v1984 = vunpack.c.h.b16 %v1866
        %v1985 = vpack.c.b16 %v1925, %v1921
        %v1986 = vpack.c.b16 %v1926, %v1922
        %v1987 = vpack.c.b16 %v1927, %v1923
        %v1988 = vpack.c.b16 %v1928, %v1924
        %v1989 = vpack.c.b16 %v1933, %v1929
        %v1990 = vpack.c.b16 %v1934, %v1930
        %v1991 = vpack.c.b16 %v1935, %v1931
        %v1992 = vpack.c.b16 %v1936, %v1932
        %v1993 = vpack.c.b16 %v1941, %v1937
        %v1994 = vpack.c.b16 %v1942, %v1938
        %v1995 = vpack.c.b16 %v1943, %v1939
        %v1996 = vpack.c.b16 %v1944, %v1940
        %v1997 = vpack.c.b16 %v1949, %v1945
        %v1998 = vpack.c.b16 %v1950, %v1946
        %v1999 = vpack.c.b16 %v1951, %v1947
        %v2000 = vpack.c.b16 %v1952, %v1948
        %v2001 = vpack.c.b16 %v1957, %v1953
        %v2002 = vpack.c.b16 %v1958, %v1954
        %v2003 = vpack.c.b16 %v1959, %v1955
        %v2004 = vpack.c.b16 %v1960, %v1956
        %v2005 = vpack.c.b16 %v1965, %v1961
        %v2006 = vpack.c.b16 %v1966, %v1962
        %v2007 = vpack.c.b16 %v1967, %v1963
        %v2008 = vpack.c.b16 %v1968, %v1964
        %v2009 = vpack.c.b16 %v1973, %v1969
        %v2010 = vpack.c.b16 %v1974, %v1970
        %v2011 = vpack.c.b16 %v1975, %v1971
        %v2012 = vpack.c.b16 %v1976, %v1972
        %v2013 = vpack.c.b16 %v1981, %v1977
        %v2014 = vpack.c.b16 %v1982, %v1978
        %v2015 = vpack.c.b16 %v1983, %v1979
        %v2016 = vpack.c.b16 %v1984, %v1980
        %2049 = vmatprep.subr.bf16.mxu0 %v1986
        %2050 = vmatpush1.bf16.msra.mxu0 %v1985
        %2051 = vmatprep.subr.bf16.mxu0 %v1990
        %2052 = vmatpush1.bf16.msra.mxu0 %v1989
        %2053 = vmatprep.subr.bf16.mxu0 %v1994
        %2054 = vmatpush1.bf16.msra.mxu0 %v1993
        %2055 = vmatprep.subr.bf16.mxu0 %v1998
        %2056 = vmatpush1.bf16.msra.mxu0 %v1997
        %2057 = vmatprep.subr.bf16.mxu0 %v2002
        %2058 = vmatpush1.bf16.msra.mxu0 %v2001
        %2059 = vmatprep.subr.bf16.mxu0 %v2006
        %2060 = vmatpush1.bf16.msra.mxu0 %v2005
        %2061 = vmatprep.subr.bf16.mxu0 %v2010
        %2062 = vmatpush1.bf16.msra.mxu0 %v2009
        %2063 = vmatprep.subr.bf16.mxu0 %v2014
        %2064 = vmatpush1.bf16.msra.mxu0 %v2013
        %2065 = vmatprep.subr.bf16.mxu0 0
        %2066 = vmatpush1.bf16.msra.mxu0 0
        %2067 = vmatprep.subr.bf16.mxu0 0
        %2068 = vmatpush1.bf16.msra.mxu0 0
        %2069 = vmatprep.subr.bf16.mxu0 0
        %2070 = vmatpush1.bf16.msra.mxu0 0
        %2071 = vmatprep.subr.bf16.mxu0 0
        %2072 = vmatpush1.bf16.msra.mxu0 0
        %2073 = vmatprep.subr.bf16.mxu0 0
        %2074 = vmatpush1.bf16.msra.mxu0 0
        %2075 = vmatprep.subr.bf16.mxu0 0
        %2076 = vmatpush1.bf16.msra.mxu0 0
        %2077 = vmatprep.subr.bf16.mxu0 0
        %2078 = vmatpush1.bf16.msra.mxu0 0
        %2079 = vmatprep.subr.bf16.mxu0 0
        %2080 = vmatpush1.bf16.msra.mxu0 0
        %2081 = vmatprep.mubr.bf16.mxu0 0
        %2082 = vmatmul.mubr.bf16.gmra.mrb[0].mxu0 %v1834
        %v2083 = vpop.f32.mrb[0].mxu0
        %v2084 = vadd.f32 %v1872, %v2083
        %v2085 = vpop.f32.mrb[0].mxu0
        %v2086 = vadd.f32 %v1876, %v2085
        %v2087 = vpop.f32.mrb[0].mxu0
        %v2088 = vpop.f32.mrb[0].mxu0
        %2089 = vdwg.mxu0
        %2090 = vmatprep.subr.bf16.mxu0 %v1988
        %2091 = vmatpush1.bf16.msra.mxu0 %v1987
        %2092 = vmatprep.subr.bf16.mxu0 %v1992
        %2093 = vmatpush1.bf16.msra.mxu0 %v1991
        %2094 = vmatprep.subr.bf16.mxu0 %v1996
        %2095 = vmatpush1.bf16.msra.mxu0 %v1995
        %2096 = vmatprep.subr.bf16.mxu0 %v2000
        %2097 = vmatpush1.bf16.msra.mxu0 %v1999
        %2098 = vmatprep.subr.bf16.mxu0 %v2004
        %2099 = vmatpush1.bf16.msra.mxu0 %v2003
        %2100 = vmatprep.subr.bf16.mxu0 %v2008
        %2101 = vmatpush1.bf16.msra.mxu0 %v2007
        %2102 = vmatprep.subr.bf16.mxu0 %v2012
        %2103 = vmatpush1.bf16.msra.mxu0 %v2011
        %2104 = vmatprep.subr.bf16.mxu0 %v2016
        %2105 = vmatpush1.bf16.msra.mxu0 %v2015
        %2106 = vmatprep.subr.bf16.mxu0 0
        %2107 = vmatpush1.bf16.msra.mxu0 0
        %2108 = vmatprep.subr.bf16.mxu0 0
        %2109 = vmatpush1.bf16.msra.mxu0 0
        %2110 = vmatprep.subr.bf16.mxu0 0
        %2111 = vmatpush1.bf16.msra.mxu0 0
        %2112 = vmatprep.subr.bf16.mxu0 0
        %2113 = vmatpush1.bf16.msra.mxu0 0
        %2114 = vmatprep.subr.bf16.mxu0 0
        %2115 = vmatpush1.bf16.msra.mxu0 0
        %2116 = vmatprep.subr.bf16.mxu0 0
        %2117 = vmatpush1.bf16.msra.mxu0 0
        %2118 = vmatprep.subr.bf16.mxu0 0
        %2119 = vmatpush1.bf16.msra.mxu0 0
        %2120 = vmatprep.subr.bf16.mxu0 0
        %2121 = vmatpush1.bf16.msra.mxu0 0
        %2122 = vmatprep.mubr.bf16.mxu0 0
        %2123 = vmatmul.mubr.bf16.gmra.mrb[0].mxu0 %v1834
        %v2124 = vpop.f32.mrb[0].mxu0
        %v2125 = vadd.f32 %v1880, %v2124
        %v2126 = vpop.f32.mrb[0].mxu0
        %v2127 = vadd.f32 %v1884, %v2126
        %v2128 = vpop.f32.mrb[0].mxu0
        %v2129 = vpop.f32.mrb[0].mxu0
        %2130 = vdwg.mxu0
        %v2131 = vmul.f32 %v2084, 0.5
        %v2132 = vmul.f32 %v2086, 0.5
        %v2133 = vmul.f32 %v2125, 0.5
        %v2134 = vmul.f32 %v2127, 0.5
        %v2135 = vmul.f32 %v2084, 0.044715
        %v2136 = vmul.f32 %v2086, 0.044715
        %v2137 = vmul.f32 %v2125, 0.044715
        %v2138 = vmul.f32 %v2127, 0.044715
        %v2139 = vmul.f32 %v2135, %v2084
        %v2140 = vmul.f32 %v2136, %v2086
        %v2141 = vmul.f32 %v2137, %v2125
        %v2142 = vmul.f32 %v2138, %v2127
        %v2143 = vmul.f32 %v2139, %v2084
        %v2144 = vmul.f32 %v2140, %v2086
        %v2145 = vmul.f32 %v2141, %v2125
        %v2146 = vmul.f32 %v2142, %v2127
        %v2147 = vadd.f32 %v2084, %v2143
        %v2148 = vadd.f32 %v2086, %v2144
        %v2149 = vadd.f32 %v2125, %v2145
        %v2150 = vadd.f32 %v2127, %v2146
        %v2151 = vmul.f32 %v2147, 0.7978846
        %v2152 = vmul.f32 %v2148, 0.7978846
        %v2153 = vmul.f32 %v2149, 0.7978846
        %v2154 = vmul.f32 %v2150, 0.7978846
        %v2155 = vtanh.pop %v2151
        %v2156 = vtanh.pop %v2152
        %v2157 = vtanh.pop %v2153
        %v2158 = vtanh.pop %v2154
        %v2159 = vadd.f32 %v2155, 1.0
        %v2160 = vadd.f32 %v2156, 1.0
        %v2161 = vadd.f32 %v2157, 1.0
        %v2162 = vadd.f32 %v2158, 1.0
        %v2163 = vmul.f32 %v2131, %v2159
        %v2164 = vmul.f32 %v2132, %v2160
        %v2165 = vmul.f32 %v2133, %v2161
        %v2166 = vmul.f32 %v2134, %v2162
        %v2167 = vpack.c.bf16 %v2163, %v2163
        %v2168 = vpack.c.bf16 %v2164, %v2164
        %v2169 = vpack.c.bf16 %v2165, %v2165
        %v2170 = vpack.c.bf16 %v2166, %v2166
        %v2171 = vld [vmem:[%s610] sm:$0xf]
        %v2172 = vld [vmem:[%s610 + $0x4] sm:$0xf]
        %v2173 = vld [vmem:[%s610 + $0x8] sm:$0xf]
        %v2174 = vld [vmem:[%s610 + $0xc] sm:$0xf]
        %v2175 = vld [vmem:[%s610 + $0x10] sm:$0xf]
        %v2176 = vld [vmem:[%s610 + $0x14] sm:$0xf]
        %v2177 = vld [vmem:[%s610 + $0x18] sm:$0xf]
        %v2178 = vld [vmem:[%s610 + $0x1c] sm:$0xf]
        %v2179 = vld [vmem:[%s610 + $0x20] sm:$0xf]
        %v2180 = vld [vmem:[%s610 + $0x24] sm:$0xf]
        %v2181 = vld [vmem:[%s610 + $0x28] sm:$0xf]
        %v2182 = vld [vmem:[%s610 + $0x2c] sm:$0xf]
        %v2183 = vld [vmem:[%s610 + $0x30] sm:$0xf]
        %v2184 = vld [vmem:[%s610 + $0x34] sm:$0xf]
        %v2185 = vld [vmem:[%s610 + $0x38] sm:$0xf]
        %v2186 = vld [vmem:[%s610 + $0x3c] sm:$0xf]
        %v2187 = vld [vmem:[%s610 + $0x40] sm:$0xf]
        %v2188 = vld [vmem:[%s610 + $0x44] sm:$0xf]
        %v2189 = vld [vmem:[%s610 + $0x48] sm:$0xf]
        %v2190 = vld [vmem:[%s610 + $0x4c] sm:$0xf]
        %v2191 = vld [vmem:[%s610 + $0x50] sm:$0xf]
        %v2192 = vld [vmem:[%s610 + $0x54] sm:$0xf]
        %v2193 = vld [vmem:[%s610 + $0x58] sm:$0xf]
        %v2194 = vld [vmem:[%s610 + $0x5c] sm:$0xf]
        %v2195 = vld [vmem:[%s610 + $0x60] sm:$0xf]
        %v2196 = vld [vmem:[%s610 + $0x64] sm:$0xf]
        %v2197 = vld [vmem:[%s610 + $0x68] sm:$0xf]
        %v2198 = vld [vmem:[%s610 + $0x6c] sm:$0xf]
        %v2199 = vld [vmem:[%s610 + $0x70] sm:$0xf]
        %v2200 = vld [vmem:[%s610 + $0x74] sm:$0xf]
        %v2201 = vld [vmem:[%s610 + $0x78] sm:$0xf]
        %v2202 = vld [vmem:[%s610 + $0x7c] sm:$0xf]
        %v2203 = vld [vmem:[%s610 + $0x80] sm:$0xf]
        %v2204 = vld [vmem:[%s610 + $0x84] sm:$0xf]
        %v2205 = vld [vmem:[%s610 + $0x88] sm:$0xf]
        %v2206 = vld [vmem:[%s610 + $0x8c] sm:$0xf]
        %v2207 = vld [vmem:[%s610 + $0x90] sm:$0xf]
        %v2208 = vld [vmem:[%s610 + $0x94] sm:$0xf]
        %v2209 = vld [vmem:[%s610 + $0x98] sm:$0xf]
        %v2210 = vld [vmem:[%s610 + $0x9c] sm:$0xf]
        %v2211 = vld [vmem:[%s610 + $0xa0] sm:$0xf]
        %v2212 = vld [vmem:[%s610 + $0xa4] sm:$0xf]
        %v2213 = vld [vmem:[%s610 + $0xa8] sm:$0xf]
        %v2214 = vld [vmem:[%s610 + $0xac] sm:$0xf]
        %v2215 = vld [vmem:[%s610 + $0xb0] sm:$0xf]
        %v2216 = vld [vmem:[%s610 + $0xb4] sm:$0xf]
        %v2217 = vld [vmem:[%s610 + $0xb8] sm:$0xf]
        %v2218 = vld [vmem:[%s610 + $0xbc] sm:$0xf]
        %v2219 = vld [vmem:[%s610 + $0xc0] sm:$0xf]
        %v2220 = vld [vmem:[%s610 + $0xc4] sm:$0xf]
        %v2221 = vld [vmem:[%s610 + $0xc8] sm:$0xf]
        %v2222 = vld [vmem:[%s610 + $0xcc] sm:$0xf]
        %v2223 = vld [vmem:[%s610 + $0xd0] sm:$0xf]
        %v2224 = vld [vmem:[%s610 + $0xd4] sm:$0xf]
        %v2225 = vld [vmem:[%s610 + $0xd8] sm:$0xf]
        %v2226 = vld [vmem:[%s610 + $0xdc] sm:$0xf]
        %v2227 = vld [vmem:[%s610 + $0xe0] sm:$0xf]
        %v2228 = vld [vmem:[%s610 + $0xe4] sm:$0xf]
        %v2229 = vld [vmem:[%s610 + $0xe8] sm:$0xf]
        %v2230 = vld [vmem:[%s610 + $0xec] sm:$0xf]
        %v2231 = vld [vmem:[%s610 + $0xf0] sm:$0xf]
        %v2232 = vld [vmem:[%s610 + $0xf4] sm:$0xf]
        %v2233 = vld [vmem:[%s610 + $0xf8] sm:$0xf]
        %v2234 = vld [vmem:[%s610 + $0xfc] sm:$0xf]
        %v2235 = vld [vmem:[%s733] sm:$0x1]
        %v2237 = vlaneseq
        %v2238 = vshrl.u32 %v2237, 7
        %v2239 = vsub.s32 0, %v2238
        %v2240 = vrot.slane %v2235, %v2239
        %v2306 = vunpack.c.l.b16 %v2171
        %v2307 = vunpack.c.l.b16 %v2172
        %v2308 = vunpack.c.l.b16 %v2173
        %v2309 = vunpack.c.l.b16 %v2174
        %v2310 = vunpack.c.l.b16 %v2175
        %v2311 = vunpack.c.l.b16 %v2176
        %v2312 = vunpack.c.l.b16 %v2177
        %v2313 = vunpack.c.l.b16 %v2178
        %v2314 = vunpack.c.l.b16 %v2179
        %v2315 = vunpack.c.l.b16 %v2180
        %v2316 = vunpack.c.l.b16 %v2181
        %v2317 = vunpack.c.l.b16 %v2182
        %v2318 = vunpack.c.l.b16 %v2183
        %v2319 = vunpack.c.l.b16 %v2184
        %v2320 = vunpack.c.l.b16 %v2185
        %v2321 = vunpack.c.l.b16 %v2186
        %v2322 = vunpack.c.l.b16 %v2187
        %v2323 = vunpack.c.l.b16 %v2188
        %v2324 = vunpack.c.l.b16 %v2189
        %v2325 = vunpack.c.l.b16 %v2190
        %v2326 = vunpack.c.l.b16 %v2191
        %v2327 = vunpack.c.l.b16 %v2192
        %v2328 = vunpack.c.l.b16 %v2193
        %v2329 = vunpack.c.l.b16 %v2194
        %v2330 = vunpack.c.l.b16 %v2195
        %v2331 = vunpack.c.l.b16 %v2196
        %v2332 = vunpack.c.l.b16 %v2197
        %v2333 = vunpack.c.l.b16 %v2198
        %v2334 = vunpack.c.l.b16 %v2199
        %v2335 = vunpack.c.l.b16 %v2200
        %v2336 = vunpack.c.l.b16 %v2201
        %v2337 = vunpack.c.l.b16 %v2202
        %v2338 = vunpack.c.l.b16 %v2203
        %v2339 = vunpack.c.l.b16 %v2204
        %v2340 = vunpack.c.l.b16 %v2205
        %v2341 = vunpack.c.l.b16 %v2206
        %v2342 = vunpack.c.l.b16 %v2207
        %v2343 = vunpack.c.l.b16 %v2208
        %v2344 = vunpack.c.l.b16 %v2209
        %v2345 = vunpack.c.l.b16 %v2210
        %v2346 = vunpack.c.l.b16 %v2211
        %v2347 = vunpack.c.l.b16 %v2212
        %v2348 = vunpack.c.l.b16 %v2213
        %v2349 = vunpack.c.l.b16 %v2214
        %v2350 = vunpack.c.l.b16 %v2215
        %v2351 = vunpack.c.l.b16 %v2216
        %v2352 = vunpack.c.l.b16 %v2217
        %v2353 = vunpack.c.l.b16 %v2218
        %v2354 = vunpack.c.l.b16 %v2219
        %v2355 = vunpack.c.l.b16 %v2220
        %v2356 = vunpack.c.l.b16 %v2221
        %v2357 = vunpack.c.l.b16 %v2222
        %v2358 = vunpack.c.l.b16 %v2223
        %v2359 = vunpack.c.l.b16 %v2224
        %v2360 = vunpack.c.l.b16 %v2225
        %v2361 = vunpack.c.l.b16 %v2226
        %v2362 = vunpack.c.l.b16 %v2227
        %v2363 = vunpack.c.l.b16 %v2228
        %v2364 = vunpack.c.l.b16 %v2229
        %v2365 = vunpack.c.l.b16 %v2230
        %v2366 = vunpack.c.l.b16 %v2231
        %v2367 = vunpack.c.l.b16 %v2232
        %v2368 = vunpack.c.l.b16 %v2233
        %v2369 = vunpack.c.l.b16 %v2234
        %v2370 = vpack.c.b16 %v2307, %v2306
        %v2371 = vpack.c.b16 %v2309, %v2308
        %v2372 = vpack.c.b16 %v2311, %v2310
        %v2373 = vpack.c.b16 %v2313, %v2312
        %v2374 = vpack.c.b16 %v2315, %v2314
        %v2375 = vpack.c.b16 %v2317, %v2316
        %v2376 = vpack.c.b16 %v2319, %v2318
        %v2377 = vpack.c.b16 %v2321, %v2320
        %v2378 = vpack.c.b16 %v2323, %v2322
        %v2379 = vpack.c.b16 %v2325, %v2324
        %v2380 = vpack.c.b16 %v2327, %v2326
        %v2381 = vpack.c.b16 %v2329, %v2328
        %v2382 = vpack.c.b16 %v2331, %v2330
        %v2383 = vpack.c.b16 %v2333, %v2332
        %v2384 = vpack.c.b16 %v2335, %v2334
        %v2385 = vpack.c.b16 %v2337, %v2336
        %v2386 = vpack.c.b16 %v2339, %v2338
        %v2387 = vpack.c.b16 %v2341, %v2340
        %v2388 = vpack.c.b16 %v2343, %v2342
        %v2389 = vpack.c.b16 %v2345, %v2344
        %v2390 = vpack.c.b16 %v2347, %v2346
        %v2391 = vpack.c.b16 %v2349, %v2348
        %v2392 = vpack.c.b16 %v2351, %v2350
        %v2393 = vpack.c.b16 %v2353, %v2352
        %v2394 = vpack.c.b16 %v2355, %v2354
        %v2395 = vpack.c.b16 %v2357, %v2356
        %v2396 = vpack.c.b16 %v2359, %v2358
        %v2397 = vpack.c.b16 %v2361, %v2360
        %v2398 = vpack.c.b16 %v2363, %v2362
        %v2399 = vpack.c.b16 %v2365, %v2364
        %v2400 = vpack.c.b16 %v2367, %v2366
        %v2401 = vpack.c.b16 %v2369, %v2368
        %2434 = vmatprep.subr.bf16.mxu0 0
        %2435 = vmatpush1.bf16.msra.mxu0 %v2370
        %2436 = vmatprep.subr.bf16.mxu0 0
        %2437 = vmatpush1.bf16.msra.mxu0 %v2371
        %2438 = vmatprep.subr.bf16.mxu0 0
        %2439 = vmatpush1.bf16.msra.mxu0 %v2372
        %2440 = vmatprep.subr.bf16.mxu0 0
        %2441 = vmatpush1.bf16.msra.mxu0 %v2373
        %2442 = vmatprep.subr.bf16.mxu0 0
        %2443 = vmatpush1.bf16.msra.mxu0 %v2374
        %2444 = vmatprep.subr.bf16.mxu0 0
        %2445 = vmatpush1.bf16.msra.mxu0 %v2375
        %2446 = vmatprep.subr.bf16.mxu0 0
        %2447 = vmatpush1.bf16.msra.mxu0 %v2376
        %2448 = vmatprep.subr.bf16.mxu0 0
        %2449 = vmatpush1.bf16.msra.mxu0 %v2377
        %2450 = vmatprep.subr.bf16.mxu0 0
        %2451 = vmatpush1.bf16.msra.mxu0 %v2378
        %2452 = vmatprep.subr.bf16.mxu0 0
        %2453 = vmatpush1.bf16.msra.mxu0 %v2379
        %2454 = vmatprep.subr.bf16.mxu0 0
        %2455 = vmatpush1.bf16.msra.mxu0 %v2380
        %2456 = vmatprep.subr.bf16.mxu0 0
        %2457 = vmatpush1.bf16.msra.mxu0 %v2381
        %2458 = vmatprep.subr.bf16.mxu0 0
        %2459 = vmatpush1.bf16.msra.mxu0 %v2382
        %2460 = vmatprep.subr.bf16.mxu0 0
        %2461 = vmatpush1.bf16.msra.mxu0 %v2383
        %2462 = vmatprep.subr.bf16.mxu0 0
        %2463 = vmatpush1.bf16.msra.mxu0 %v2384
        %2464 = vmatprep.subr.bf16.mxu0 0
        %2465 = vmatpush1.bf16.msra.mxu0 %v2385
        %2466 = vmatprep.mubr.bf16.mxu0 %v2168
        %2467 = vmatmul.mubr.bf16.gmra.mrb[0].mxu0 %v2167
        %v2468 = vpop.f32.mrb[0].mxu0
        %v2469 = vadd.f32 %v2240, %v2468
        %v2470 = vpop.f32.mrb[0].mxu0
        %v2471 = vpop.f32.mrb[0].mxu0
        %v2472 = vpop.f32.mrb[0].mxu0
        %2473 = vdwg.mxu0
        %2474 = vmatprep.subr.bf16.mxu0 0
        %2475 = vmatpush1.bf16.msra.mxu0 %v2386
        %2476 = vmatprep.subr.bf16.mxu0 0
        %2477 = vmatpush1.bf16.msra.mxu0 %v2387
        %2478 = vmatprep.subr.bf16.mxu0 0
        %2479 = vmatpush1.bf16.msra.mxu0 %v2388
        %2480 = vmatprep.subr.bf16.mxu0 0
        %2481 = vmatpush1.bf16.msra.mxu0 %v2389
        %2482 = vmatprep.subr.bf16.mxu0 0
        %2483 = vmatpush1.bf16.msra.mxu0 %v2390
        %2484 = vmatprep.subr.bf16.mxu0 0
        %2485 = vmatpush1.bf16.msra.mxu0 %v2391
        %2486 = vmatprep.subr.bf16.mxu0 0
        %2487 = vmatpush1.bf16.msra.mxu0 %v2392
        %2488 = vmatprep.subr.bf16.mxu0 0
        %2489 = vmatpush1.bf16.msra.mxu0 %v2393
        %2490 = vmatprep.subr.bf16.mxu0 0
        %2491 = vmatpush1.bf16.msra.mxu0 %v2394
        %2492 = vmatprep.subr.bf16.mxu0 0
        %2493 = vmatpush1.bf16.msra.mxu0 %v2395
        %2494 = vmatprep.subr.bf16.mxu0 0
        %2495 = vmatpush1.bf16.msra.mxu0 %v2396
        %2496 = vmatprep.subr.bf16.mxu0 0
        %2497 = vmatpush1.bf16.msra.mxu0 %v2397
        %2498 = vmatprep.subr.bf16.mxu0 0
        %2499 = vmatpush1.bf16.msra.mxu0 %v2398
        %2500 = vmatprep.subr.bf16.mxu0 0
        %2501 = vmatpush1.bf16.msra.mxu0 %v2399
        %2502 = vmatprep.subr.bf16.mxu0 0
        %2503 = vmatpush1.bf16.msra.mxu0 %v2400
        %2504 = vmatprep.subr.bf16.mxu0 0
        %2505 = vmatpush1.bf16.msra.mxu0 %v2401
        %2506 = vmatprep.mubr.bf16.mxu0 %v2170
        %2507 = vmatmul.mubr.bf16.gmra.mrb[0].mxu0 %v2169
        %v2508 = vpop.f32.mrb[0].mxu0
        %v2509 = vadd.f32 %v2469, %v2508
        %v2510 = vpop.f32.mrb[0].mxu0
        %v2511 = vpop.f32.mrb[0].mxu0
        %v2512 = vpop.f32.mrb[0].mxu0
        %2513 = vdwg.mxu0
        %v2514 = vadd.f32 %v1833, %v2509
        %v2515 = vld [vmem:[%s736] sm:$0x1]
        %v2516 = vld [vmem:[%s739] sm:$0x1]
        %2517 = vadd.xlane.f32.xlu0 %v2514
        %v2518 = vpop.xlane.xlu0 %2517
        %v2519 = vmul.f32 %v2518, %v1810
        %v2520 = vsub.f32 %v2514, %v2519
        %v2521 = vmul.f32 %v2520, %v2520
        %2522 = vadd.xlane.f32.xlu0 %v2521
        %v2523 = vpop.xlane.xlu0 %2522
        %v2524 = vmul.f32 %v2523, %v1810
        %v2525 = vadd.f32 %v2524, 1e-12
        %v2526 = vrsqrt.pop %v2525
        %v2527 = vmul.f32 %v2520, %v2526
        %v2529 = vlaneseq
        %v2530 = vshrl.u32 %v2529, 7
        %v2531 = vsub.s32 0, %v2530
        %v2532 = vrot.slane %v2515, %v2531
        %v2534 = vmul.f32 %v2527, %v2532
        %v2536 = vlaneseq
        %v2537 = vshrl.u32 %v2536, 7
        %v2538 = vsub.s32 0, %v2537
        %v2539 = vrot.slane %v2516, %v2538
        %v2541 = vadd.f32 %v2534, %v2539
        %2542 = vst [vmem:[%s743] sm:$0xff] %v2541
        %p2543 = scmp.lt.s32.totalorder %s35, 1
        %s2544 = scalar_select %p2543, %s35, 1
        %s2545 = smul.addr %s2544, 8
        %s2546 = scalar_lea.vmem %s14, %s2545
        // Predicated region
        $region93: #{text_model_forward.3} parent=75 // pred_check
          %p2547 = pneg %p425
        $region94: #{text_model_forward.3} parent=75 // pred_check_branch
          %2549 = sbr.rel (%p2547) target = $region96
        $region95: #{text_model_forward.3} parent=75 // pred_region
          _
        $region96: #{text_model_forward.3} parent=75 // pred_fallthru
          _
      $region76: #{text_model_forward.3} parent=5 // pred_fallthru
        _
      %p2550 = scmp.le.s32.totalorder 2, %s26
      // Predicated region
      $region97: #{text_model_forward.3} parent=5 // pred_check
        %p2551 = pneg %p2550
      $region98: #{text_model_forward.3} parent=5 // pred_check_branch
        %2553 = sbr.rel (%p2551) target = $region100
      $region99: #{text_model_forward.3} parent=5 // pred_region
        %s2554 = ssub.s32 %s26, 2
        // Predicated region
        $region101: #{text_model_forward.3} parent=99 // pred_check
          %p2555 = pneg %p431
        $region102: #{text_model_forward.3} parent=99 // pred_check_branch
          %2557 = sbr.rel (%p2555) target = $region104
        $region103: #{text_model_forward.3} parent=99 // pred_region
          %p2558 = scmp.lt.s32.totalorder %s37, 1
          %s2559 = scalar_select %p2558, %s37, 1
          %s2560 = smul.addr %s2559, 8
          %s2561 = scalar_lea.vmem %s14, %s2560
        $region104: #{text_model_forward.3} parent=99 // pred_fallthru
          _
      $region100: #{text_model_forward.3} parent=5 // pred_fallthru
        _
    $region6: #{text_model_forward.3} parent=1 // loop_footer
      %s30 = sadd.s32 1, %s26
    $region7: #{text_model_forward.3} parent=1 // loop_footer_branch
      %25 = sbr.rel target = $region3
    $region8: #{text_model_forward.3} parent=1 // loop_exit
      _
    %2562 = vsyncpa [#allocation3], 1
    %s2563 = scalar_lea.sflag [#allocation3], 1
    %2564 = vsyncpa %s2563, 1
    %2565 = vsyncpa [#allocation5], 1
    %s2566 = scalar_lea.sflag [#allocation5], 1
    %2567 = vsyncpa %s2566, 1

</llo_original>
